<compile_context>
chip_gen: v7x
topology: tpu7x:2x2x1
jax: 0.10.0
libtpu: 0.0.40
codegen_flags: <defaults>
</compile_context>

<pallas_src>
import numpy as np
import jax
import jax.numpy as jnp
from jax.experimental import pallas as pl
from jax.experimental.pallas import tpu as pltpu

COUT = 32   # output channels of every conv layer
LANE = 128  # TPU lane width


def _round_up(x, m):
    return ((x + m - 1) // m) * m


def _band_matrix(w, w_in, w_out, stride, k_pad, n_pad):
    """Fold the (kx, cin)->(j, cout) part of a 3x3 conv (incl. stride) into one
    banded matrix per kernel row ky, zero-padded to (k_pad, n_pad):
      M[ky][(stride*j + kx)*cin + c, j*cout + co] = w[ky, kx, c, co]."""
    kh, kw, cin, cout = w.shape
    mats = []
    for ky in range(kh):
        m = jnp.zeros((w_in * cin, w_out * cout), jnp.float32)
        for kx in range(kw):
            sel = np.zeros((w_in, w_out), np.float32)
            sel[stride * np.arange(w_out) + kx, np.arange(w_out)] = 1.0
            m = m + jnp.kron(jnp.asarray(sel), w[ky, kx])
        m = jnp.pad(m, ((0, k_pad - w_in * cin), (0, n_pad - w_out * cout)))
        mats.append(m)
    return jnp.stack(mats).astype(jnp.bfloat16)


def _tiled_bias(b, w_out, n_pad):
    bt = jnp.tile(b, w_out)
    return jnp.pad(bt, (0, n_pad - bt.shape[0]))[None, :]


@jax.jit
def predict_encoder_forward(obs, params):
    """obs: (B, 3, H, W) float32 in [0, 255]. Returns (B, 32*Ho*Wo) float32."""
    B, cin, H, W = obs.shape
    ho1, wo1 = (H - 3) // 2 + 1, (W - 3) // 2 + 1     # conv1, stride 2, VALID
    ho2, wo2 = ho1 - 2, wo1 - 2                        # conv2..4, stride 1
    ho3, wo3 = ho2 - 2, wo2 - 2
    ho4, wo4 = ho3 - 2, wo3 - 2
    kc = W * cin
    n1, n2, n3, n4 = wo1 * COUT, wo2 * COUT, wo3 * COUT, wo4 * COUT
    # lane-pad activation widths to 128-multiples (padding is exact zeros)
    n1p, n2p, n3p, n4p = (_round_up(n, LANE) for n in (n1, n2, n3, n4))

    # Batch tiling: Bt images per grid step, folded into the matmul M dim.
    Bt = min(8, B)
    G = -(-B // Bt)
    Bp = G * Bt
    if Bp != B:
        obs = jnp.pad(obs, ((0, Bp - B), (0, 0), (0, 0), (0, 0)))

    # NCHW -> NHWC -> (rows, W*C) slabs; even/odd row phases so the stride-2
    # first conv only needs unit-stride row windows inside the kernel.
    x = jnp.transpose(obs, (0, 2, 3, 1)).reshape(Bp, H, kc)
    xe = x[:, 0::2, :]
    xo = x[:, 1::2, :]
    he, hodd = xe.shape[1], xo.shape[1]

    m1 = _band_matrix(params["w1"], W, wo1, 2, kc, n1p)
    m2 = _band_matrix(params["w2"], wo1, wo2, 1, n1p, n2p)
    m3 = _band_matrix(params["w3"], wo2, wo3, 1, n2p, n3p)
    m4 = _band_matrix(params["w4"], wo3, wo4, 1, n3p, n4p)
    bt1 = _tiled_bias(params["b1"], wo1, n1p)
    bt2 = _tiled_bias(params["b2"], wo2, n2p)
    bt3 = _tiled_bias(params["b3"], wo3, n3p)
    bt4 = _tiled_bias(params["b4"], wo4, n4p)

    def kernel(xe_ref, xo_ref, m1_ref, bb1_ref, m2_ref, bb2_ref,
               m3_ref, bb3_ref, m4_ref, bb4_ref, out_ref,
               xen, xon, h1, h2, h3):
        # fused obs/255 - 0.5 normalization; f32 -> bf16 cast exactly once.
        for b in range(Bt):
            xen[b * he:(b + 1) * he, :] = (
                xe_ref[b] * (1.0 / 255.0) - 0.5).astype(jnp.bfloat16)
            xon[b * hodd:(b + 1) * hodd, :] = (
                xo_ref[b] * (1.0 / 255.0) - 0.5).astype(jnp.bfloat16)

        def mm(lhs, m_ref, ky):
            # bf16 x bf16 MXU matmul with f32 accumulation
            return jnp.dot(lhs, m_ref[ky], preferred_element_type=jnp.float32)

        # conv1 (3x3, stride 2): batch-stacked matmuls over all input rows,
        # then per-image shifted-row accumulation + bias + ReLU.
        fe0 = mm(xen[...], m1_ref, 0)
        fo1 = mm(xon[...], m1_ref, 1)
        fe2 = mm(xen[...], m1_ref, 2)
        for b in range(Bt):
            acc = (fe0[b * he:b * he + ho1]
                   + fo1[b * hodd:b * hodd + ho1]
                   + fe2[b * he + 1:b * he + 1 + ho1])
            h1[b * ho1:(b + 1) * ho1, :] = jnp.maximum(
                acc + bb1_ref[...], 0.0).astype(jnp.bfloat16)

        # conv2..4 (3x3, stride 1): same batch-stacked pattern.
        def conv_s1(src, rows_in, rows_out, m_ref, bb_ref, dst, final=False):
            f0 = mm(src[...], m_ref, 0)
            f1 = mm(src[...], m_ref, 1)
            f2 = mm(src[...], m_ref, 2)
            for b in range(Bt):
                o = b * rows_in
                acc = (f0[o:o + rows_out]
                       + f1[o + 1:o + 1 + rows_out]
                       + f2[o + 2:o + 2 + rows_out])
                y = jnp.maximum(acc + bb_ref[...], 0.0)
                if final:
                    dst[b] = y                                   # f32 output block
                else:
                    dst[b * rows_out:(b + 1) * rows_out, :] = y.astype(jnp.bfloat16)

        conv_s1(h1, ho1, ho2, m2_ref, bb2_ref, h2)
        conv_s1(h2, ho2, ho3, m3_ref, bb3_ref, h3)
        conv_s1(h3, ho3, ho4, m4_ref, bb4_ref, out_ref, final=True)

    def const_spec(shape):
        # grid-invariant weights/biases: single-buffered, DMA'd once per core
        return pl.BlockSpec(shape, lambda g, _z=(0,) * len(shape): _z,
                            pipeline_mode=pl.Buffered(1))

    # explicit scoped-VMEM budget (re-derive per TPU generation / real shapes)
    weight_bytes = 2 * 3 * (kc * n1p + n1p * n2p + n2p * n3p + n3p * n4p) \
        + 4 * (n1p + n2p + n3p + n4p)
    io_bytes = 2 * 4 * Bt * (he * kc + hodd * kc + ho4 * n4p)     # dbl-buffered I/O
    scratch_bytes = 2 * Bt * (he * kc + hodd * kc
                              + ho1 * n1p + ho2 * n2p + ho3 * n3p)
    temp_bytes = 3 * 4 * Bt * max(he * n1p, ho1 * n2p, ho2 * n3p, ho3 * n4p)
    need = weight_bytes + io_bytes + scratch_bytes + temp_bytes
    vmem_limit = int(min(max(1.5 * need + (2 << 20), 16 << 20), 64 << 20))

    flops = 2 * Bp * (kc * n1p * (2 * he + hodd)
                      + 3 * ho1 * n1p * n2p
                      + 3 * ho2 * n2p * n3p
                      + 3 * ho3 * n3p * n4p)
    bytes_accessed = 4 * (xe.size + xo.size + Bp * ho4 * n4p) \
        + 2 * (m1.size + m2.size + m3.size + m4.size) \
        + 4 * (bt1.size + bt2.size + bt3.size + bt4.size)
    cost = pl.CostEstimate(flops=int(flops), transcendentals=0,
                           bytes_accessed=int(bytes_accessed))

    out = pl.pallas_call(
        kernel,
        grid=(G,),
        out_shape=jax.ShapeDtypeStruct((Bp, ho4, n4p), jnp.float32),
        in_specs=[
            pl.BlockSpec((Bt, he, kc), lambda g: (g, 0, 0)),      # even rows
            pl.BlockSpec((Bt, hodd, kc), lambda g: (g, 0, 0)),    # odd rows
            const_spec((3, kc, n1p)), const_spec((1, n1p)),       # m1 / bias1
            const_spec((3, n1p, n2p)), const_spec((1, n2p)),      # m2 / bias2
            const_spec((3, n2p, n3p)), const_spec((1, n3p)),      # m3 / bias3
            const_spec((3, n3p, n4p)), const_spec((1, n4p)),      # m4 / bias4
        ],
        out_specs=pl.BlockSpec((Bt, ho4, n4p), lambda g: (g, 0, 0)),
        scratch_shapes=[
            pltpu.VMEM((Bt * he, kc), jnp.bfloat16),    # normalized even rows
            pltpu.VMEM((Bt * hodd, kc), jnp.bfloat16),  # normalized odd rows
            pltpu.VMEM((Bt * ho1, n1p), jnp.bfloat16),  # h1
            pltpu.VMEM((Bt * ho2, n2p), jnp.bfloat16),  # h2
            pltpu.VMEM((Bt * ho3, n3p), jnp.bfloat16),  # h3
        ],
        compiler_params=pltpu.CompilerParams(
            dimension_semantics=("parallel",),
            vmem_limit_bytes=vmem_limit),
        cost_estimate=cost,
    )(xe, xo, m1, bt1, m2, bt2, m3, bt3, m4, bt4)

    # (Bp, Ho4, Wo4*C padded) -> drop pads -> NCHW flatten to match h.view(B,-1)
    out = out[:B, :, :n4].reshape(B, ho4, wo4, COUT).transpose(0, 3, 1, 2)
    return out.reshape(B, COUT * ho4 * wo4)


def init_encoder_params(key, cin=3, cout=COUT):
    """Deterministic synthetic conv weights (HWIO layout) and biases."""
    ks = jax.random.split(key, 8)

    def conv(kw, kb, ci, co):
        w = jax.random.normal(kw, (3, 3, ci, co), jnp.float32) / float(np.sqrt(9 * ci))
        # Round weights to bf16-representable values so kernel and reference
        # see identical weight values (kernel stores banded weights in bf16).
        w = w.astype(jnp.bfloat16).astype(jnp.float32)
        b = 0.1 * jax.random.normal(kb, (co,), jnp.float32)
        return w, b

    w1, b1 = conv(ks[0], ks[1], cin, cout)
    w2, b2 = conv(ks[2], ks[3], cout, cout)
    w3, b3 = conv(ks[4], ks[5], cout, cout)
    w4, b4 = conv(ks[6], ks[7], cout, cout)
    return dict(w1=w1, b1=b1, w2=w2, b2=b2, w3=w3, b3=b3, w4=w4, b4=b4)


def predict_encoder_ref(obs, params):
    """Pure-JAX reference (bf16 MXU products, f32 accumulation, like the kernel)."""
    x = jnp.transpose(obs * (1.0 / 255.0) - 0.5, (0, 2, 3, 1))  # NHWC, f32
    for i, stride in ((1, 2), (2, 1), (3, 1), (4, 1)):
        w = params[f"w{i}"].astype(jnp.bfloat16)
        y = jax.lax.conv_general_dilated(
            x.astype(jnp.bfloat16), w, (stride, stride), "VALID",
            dimension_numbers=("NHWC", "HWIO", "NHWC"),
            preferred_element_type=jnp.float32)
        x = jnp.maximum(y + params[f"b{i}"][None, None, None, :], 0.0)
    x = jnp.transpose(x, (0, 3, 1, 2))          # NCHW
    return x.reshape(x.shape[0], -1)


if __name__ == "__main__":
    # Small shapes consistent with the module (3-channel image, 3x3 VALID convs):
    # 24x24 -> 11 -> 9 -> 7 -> 5 spatial, repr_dim = 32*5*5 = 800.
    B, CIN, H, W = 2, 3, 24, 24

    key = jax.random.PRNGKey(0)
    k_obs, k_par = jax.random.split(key)
    obs = jax.random.uniform(k_obs, (B, CIN, H, W), jnp.float32, 0.0, 255.0)
    params = init_encoder_params(k_par, cin=CIN)

    out = predict_encoder_forward(obs, params)
    jax.block_until_ready(out)

    ref = predict_encoder_ref(obs, params)
    assert out.shape == (B, COUT * 5 * 5), out.shape
    assert jnp.allclose(out, ref, atol=5e-3, rtol=5e-3), \
        float(jnp.max(jnp.abs(out - ref)))
    print("KERNEL_OK")
</pallas_src>

<mosaic_0001>
module attributes {stable_mosaic.version = 11 : i64} {
  func.func @kernel(%arg0: i32, %arg1: memref<2x12x72xf32, #tpu.memory_space<vmem>>, %arg2: memref<2x12x72xf32, #tpu.memory_space<vmem>>, %arg3: memref<3x72x384xbf16, #tpu.memory_space<vmem>>, %arg4: memref<1x384xf32, #tpu.memory_space<vmem>>, %arg5: memref<3x384x384xbf16, #tpu.memory_space<vmem>>, %arg6: memref<1x384xf32, #tpu.memory_space<vmem>>, %arg7: memref<3x384x256xbf16, #tpu.memory_space<vmem>>, %arg8: memref<1x256xf32, #tpu.memory_space<vmem>>, %arg9: memref<3x256x256xbf16, #tpu.memory_space<vmem>>, %arg10: memref<1x256xf32, #tpu.memory_space<vmem>>, %arg11: memref<2x5x256xf32, #tpu.memory_space<vmem>>, %arg12: memref<24x72xbf16, #tpu.memory_space<vmem>>, %arg13: memref<24x72xbf16, #tpu.memory_space<vmem>>, %arg14: memref<22x384xbf16, #tpu.memory_space<vmem>>, %arg15: memref<18x384xbf16, #tpu.memory_space<vmem>>, %arg16: memref<14x256xbf16, #tpu.memory_space<vmem>>) attributes {dimension_semantics = [#tpu.dimension_semantics<parallel>], iteration_bounds = array<i64: 1>, scalar_prefetch = 0 : i64, scratch_operands = 5 : i64, tpu.core_type = #tpu.core_type<tc>, window_params = [{transform_indices = @transform_0, window_bounds = array<i64: 2, 12, 72>}, {transform_indices = @transform_1, window_bounds = array<i64: 2, 12, 72>}, {pipeline_mode = #tpu.pipeline_mode<synchronous>, transform_indices = @transform_2, window_bounds = array<i64: 3, 72, 384>}, {pipeline_mode = #tpu.pipeline_mode<synchronous>, transform_indices = @transform_3, window_bounds = array<i64: 1, 384>}, {pipeline_mode = #tpu.pipeline_mode<synchronous>, transform_indices = @transform_4, window_bounds = array<i64: 3, 384, 384>}, {pipeline_mode = #tpu.pipeline_mode<synchronous>, transform_indices = @transform_5, window_bounds = array<i64: 1, 384>}, {pipeline_mode = #tpu.pipeline_mode<synchronous>, transform_indices = @transform_6, window_bounds = array<i64: 3, 384, 256>}, {pipeline_mode = #tpu.pipeline_mode<synchronous>, transform_indices = @transform_7, window_bounds = array<i64: 1, 256>}, {pipeline_mode = #tpu.pipeline_mode<synchronous>, transform_indices = @transform_8, window_bounds = array<i64: 3, 256, 256>}, {pipeline_mode = #tpu.pipeline_mode<synchronous>, transform_indices = @transform_9, window_bounds = array<i64: 1, 256>}, {transform_indices = @transform_10, window_bounds = array<i64: 2, 5, 256>}]} {
    %c0 = arith.constant 0 : index
    %c0_0 = arith.constant 0 : index
    %c0_1 = arith.constant 0 : index
    %0 = vector.load %arg1[%c0, %c0_0, %c0_1] : memref<2x12x72xf32, #tpu.memory_space<vmem>>, vector<1x12x72xf32>
    %1 = vector.shape_cast %0 : vector<1x12x72xf32> to vector<12x72xf32>
    %cst = arith.constant 0.00392156886 : f32
    %2 = vector.broadcast %cst : f32 to vector<12x72xf32>
    %3 = arith.mulf %1, %2 : vector<12x72xf32>
    %cst_2 = arith.constant 5.000000e-01 : f32
    %4 = vector.broadcast %cst_2 : f32 to vector<12x72xf32>
    %5 = arith.subf %3, %4 : vector<12x72xf32>
    %6 = arith.truncf %5 : vector<12x72xf32> to vector<12x72xbf16>
    %c0_3 = arith.constant 0 : index
    %c0_4 = arith.constant 0 : index
    %7 = vector.load %arg12[%c0_3, %c0_4] : memref<24x72xbf16, #tpu.memory_space<vmem>>, vector<12x72xbf16>
    tpu.vector_store %arg12[%c0_3, %c0_4], %6 {strides = array<i32>} : memref<24x72xbf16, #tpu.memory_space<vmem>>, vector<12x72xbf16>,
    %c0_5 = arith.constant 0 : index
    %c0_6 = arith.constant 0 : index
    %c0_7 = arith.constant 0 : index
    %8 = vector.load %arg2[%c0_5, %c0_6, %c0_7] : memref<2x12x72xf32, #tpu.memory_space<vmem>>, vector<1x12x72xf32>
    %9 = vector.shape_cast %8 : vector<1x12x72xf32> to vector<12x72xf32>
    %cst_8 = arith.constant 0.00392156886 : f32
    %10 = vector.broadcast %cst_8 : f32 to vector<12x72xf32>
    %11 = arith.mulf %9, %10 : vector<12x72xf32>
    %cst_9 = arith.constant 5.000000e-01 : f32
    %12 = vector.broadcast %cst_9 : f32 to vector<12x72xf32>
    %13 = arith.subf %11, %12 : vector<12x72xf32>
    %14 = arith.truncf %13 : vector<12x72xf32> to vector<12x72xbf16>
    %c0_10 = arith.constant 0 : index
    %c0_11 = arith.constant 0 : index
    %15 = vector.load %arg13[%c0_10, %c0_11] : memref<24x72xbf16, #tpu.memory_space<vmem>>, vector<12x72xbf16>
    tpu.vector_store %arg13[%c0_10, %c0_11], %14 {strides = array<i32>} : memref<24x72xbf16, #tpu.memory_space<vmem>>, vector<12x72xbf16>,
    %c1 = arith.constant 1 : index
    %c0_12 = arith.constant 0 : index
    %c0_13 = arith.constant 0 : index
    %16 = vector.load %arg1[%c1, %c0_12, %c0_13] : memref<2x12x72xf32, #tpu.memory_space<vmem>>, vector<1x12x72xf32>
    %17 = vector.shape_cast %16 : vector<1x12x72xf32> to vector<12x72xf32>
    %cst_14 = arith.constant 0.00392156886 : f32
    %18 = vector.broadcast %cst_14 : f32 to vector<12x72xf32>
    %19 = arith.mulf %17, %18 : vector<12x72xf32>
    %cst_15 = arith.constant 5.000000e-01 : f32
    %20 = vector.broadcast %cst_15 : f32 to vector<12x72xf32>
    %21 = arith.subf %19, %20 : vector<12x72xf32>
    %22 = arith.truncf %21 : vector<12x72xf32> to vector<12x72xbf16>
    %c12 = arith.constant 12 : index
    %c0_16 = arith.constant 0 : index
    %23 = vector.load %arg12[%c12, %c0_16] : memref<24x72xbf16, #tpu.memory_space<vmem>>, vector<12x72xbf16>
    tpu.vector_store %arg12[%c12, %c0_16], %22 {strides = array<i32>} : memref<24x72xbf16, #tpu.memory_space<vmem>>, vector<12x72xbf16>,
    %c1_17 = arith.constant 1 : index
    %c0_18 = arith.constant 0 : index
    %c0_19 = arith.constant 0 : index
    %24 = vector.load %arg2[%c1_17, %c0_18, %c0_19] : memref<2x12x72xf32, #tpu.memory_space<vmem>>, vector<1x12x72xf32>
    %25 = vector.shape_cast %24 : vector<1x12x72xf32> to vector<12x72xf32>
    %cst_20 = arith.constant 0.00392156886 : f32
    %26 = vector.broadcast %cst_20 : f32 to vector<12x72xf32>
    %27 = arith.mulf %25, %26 : vector<12x72xf32>
    %cst_21 = arith.constant 5.000000e-01 : f32
    %28 = vector.broadcast %cst_21 : f32 to vector<12x72xf32>
    %29 = arith.subf %27, %28 : vector<12x72xf32>
    %30 = arith.truncf %29 : vector<12x72xf32> to vector<12x72xbf16>
    %c12_22 = arith.constant 12 : index
    %c0_23 = arith.constant 0 : index
    %31 = vector.load %arg13[%c12_22, %c0_23] : memref<24x72xbf16, #tpu.memory_space<vmem>>, vector<12x72xbf16>
    tpu.vector_store %arg13[%c12_22, %c0_23], %30 {strides = array<i32>} : memref<24x72xbf16, #tpu.memory_space<vmem>>, vector<12x72xbf16>,
    %c0_24 = arith.constant 0 : index
    %c0_25 = arith.constant 0 : index
    %32 = vector.load %arg12[%c0_24, %c0_25] : memref<24x72xbf16, #tpu.memory_space<vmem>>, vector<24x72xbf16>
    %c0_26 = arith.constant 0 : index
    %c0_27 = arith.constant 0 : index
    %c0_28 = arith.constant 0 : index
    %33 = vector.load %arg3[%c0_26, %c0_27, %c0_28] : memref<3x72x384xbf16, #tpu.memory_space<vmem>>, vector<1x72x384xbf16>
    %34 = vector.shape_cast %33 : vector<1x72x384xbf16> to vector<72x384xbf16>
    %cst_29 = arith.constant dense<0.000000e+00> : vector<24x384xf32>
    %35 = tpu.matmul %32, %34, %cst_29 {dimension_numbers = #tpu.dot_dimension_numbers<[1], [0], [0], [1], [0, 0, 1, 1], [], []>} : vector<24x72xbf16>, vector<72x384xbf16>, vector<24x384xf32> -> vector<24x384xf32>
    %c0_30 = arith.constant 0 : index
    %c0_31 = arith.constant 0 : index
    %36 = vector.load %arg13[%c0_30, %c0_31] : memref<24x72xbf16, #tpu.memory_space<vmem>>, vector<24x72xbf16>
    %c1_32 = arith.constant 1 : index
    %c0_33 = arith.constant 0 : index
    %c0_34 = arith.constant 0 : index
    %37 = vector.load %arg3[%c1_32, %c0_33, %c0_34] : memref<3x72x384xbf16, #tpu.memory_space<vmem>>, vector<1x72x384xbf16>
    %38 = vector.shape_cast %37 : vector<1x72x384xbf16> to vector<72x384xbf16>
    %cst_35 = arith.constant dense<0.000000e+00> : vector<24x384xf32>
    %39 = tpu.matmul %36, %38, %cst_35 {dimension_numbers = #tpu.dot_dimension_numbers<[1], [0], [0], [1], [0, 0, 1, 1], [], []>} : vector<24x72xbf16>, vector<72x384xbf16>, vector<24x384xf32> -> vector<24x384xf32>
    %c0_36 = arith.constant 0 : index
    %c0_37 = arith.constant 0 : index
    %40 = vector.load %arg12[%c0_36, %c0_37] : memref<24x72xbf16, #tpu.memory_space<vmem>>, vector<24x72xbf16>
    %c2 = arith.constant 2 : index
    %c0_38 = arith.constant 0 : index
    %c0_39 = arith.constant 0 : index
    %41 = vector.load %arg3[%c2, %c0_38, %c0_39] : memref<3x72x384xbf16, #tpu.memory_space<vmem>>, vector<1x72x384xbf16>
    %42 = vector.shape_cast %41 : vector<1x72x384xbf16> to vector<72x384xbf16>
    %cst_40 = arith.constant dense<0.000000e+00> : vector<24x384xf32>
    %43 = tpu.matmul %40, %42, %cst_40 {dimension_numbers = #tpu.dot_dimension_numbers<[1], [0], [0], [1], [0, 0, 1, 1], [], []>} : vector<24x72xbf16>, vector<72x384xbf16>, vector<24x384xf32> -> vector<24x384xf32>
    %44 = vector.extract_strided_slice %35 {offsets = [0, 0], sizes = [11, 384], strides = [1, 1]} : vector<24x384xf32> to vector<11x384xf32>
    %45 = vector.extract_strided_slice %39 {offsets = [0, 0], sizes = [11, 384], strides = [1, 1]} : vector<24x384xf32> to vector<11x384xf32>
    %46 = arith.addf %44, %45 : vector<11x384xf32>
    %47 = vector.extract_strided_slice %43 {offsets = [1, 0], sizes = [11, 384], strides = [1, 1]} : vector<24x384xf32> to vector<11x384xf32>
    %48 = arith.addf %46, %47 : vector<11x384xf32>
    %c0_41 = arith.constant 0 : index
    %c0_42 = arith.constant 0 : index
    %49 = vector.load %arg4[%c0_41, %c0_42] : memref<1x384xf32, #tpu.memory_space<vmem>>, vector<1x384xf32>
    %50 = vector.broadcast %49 : vector<1x384xf32> to vector<11x384xf32>
    %51 = arith.addf %48, %50 : vector<11x384xf32>
    %cst_43 = arith.constant 0.000000e+00 : f32
    %52 = vector.broadcast %cst_43 : f32 to vector<11x384xf32>
    %53 = arith.maximumf %51, %52 : vector<11x384xf32>
    %54 = arith.truncf %53 : vector<11x384xf32> to vector<11x384xbf16>
    %c0_44 = arith.constant 0 : index
    %c0_45 = arith.constant 0 : index
    %55 = vector.load %arg14[%c0_44, %c0_45] : memref<22x384xbf16, #tpu.memory_space<vmem>>, vector<11x384xbf16>
    tpu.vector_store %arg14[%c0_44, %c0_45], %54 {strides = array<i32>} : memref<22x384xbf16, #tpu.memory_space<vmem>>, vector<11x384xbf16>,
    %56 = vector.extract_strided_slice %35 {offsets = [12, 0], sizes = [11, 384], strides = [1, 1]} : vector<24x384xf32> to vector<11x384xf32>
    %57 = vector.extract_strided_slice %39 {offsets = [12, 0], sizes = [11, 384], strides = [1, 1]} : vector<24x384xf32> to vector<11x384xf32>
    %58 = arith.addf %56, %57 : vector<11x384xf32>
    %59 = vector.extract_strided_slice %43 {offsets = [13, 0], sizes = [11, 384], strides = [1, 1]} : vector<24x384xf32> to vector<11x384xf32>
    %60 = arith.addf %58, %59 : vector<11x384xf32>
    %c0_46 = arith.constant 0 : index
    %c0_47 = arith.constant 0 : index
    %61 = vector.load %arg4[%c0_46, %c0_47] : memref<1x384xf32, #tpu.memory_space<vmem>>, vector<1x384xf32>
    %62 = vector.broadcast %61 : vector<1x384xf32> to vector<11x384xf32>
    %63 = arith.addf %60, %62 : vector<11x384xf32>
    %cst_48 = arith.constant 0.000000e+00 : f32
    %64 = vector.broadcast %cst_48 : f32 to vector<11x384xf32>
    %65 = arith.maximumf %63, %64 : vector<11x384xf32>
    %66 = arith.truncf %65 : vector<11x384xf32> to vector<11x384xbf16>
    %c11 = arith.constant 11 : index
    %c0_49 = arith.constant 0 : index
    %67 = vector.load %arg14[%c11, %c0_49] : memref<22x384xbf16, #tpu.memory_space<vmem>>, vector<11x384xbf16>
    tpu.vector_store %arg14[%c11, %c0_49], %66 {strides = array<i32>} : memref<22x384xbf16, #tpu.memory_space<vmem>>, vector<11x384xbf16>,
    %c0_50 = arith.constant 0 : index
    %c0_51 = arith.constant 0 : index
    %68 = vector.load %arg14[%c0_50, %c0_51] : memref<22x384xbf16, #tpu.memory_space<vmem>>, vector<22x384xbf16>
    %c0_52 = arith.constant 0 : index
    %c0_53 = arith.constant 0 : index
    %c0_54 = arith.constant 0 : index
    %69 = vector.load %arg5[%c0_52, %c0_53, %c0_54] : memref<3x384x384xbf16, #tpu.memory_space<vmem>>, vector<1x384x384xbf16>
    %70 = vector.shape_cast %69 : vector<1x384x384xbf16> to vector<384x384xbf16>
    %cst_55 = arith.constant dense<0.000000e+00> : vector<22x384xf32>
    %71 = tpu.matmul %68, %70, %cst_55 {dimension_numbers = #tpu.dot_dimension_numbers<[1], [0], [0], [1], [0, 0, 1, 1], [], []>} : vector<22x384xbf16>, vector<384x384xbf16>, vector<22x384xf32> -> vector<22x384xf32>
    %c0_56 = arith.constant 0 : index
    %c0_57 = arith.constant 0 : index
    %72 = vector.load %arg14[%c0_56, %c0_57] : memref<22x384xbf16, #tpu.memory_space<vmem>>, vector<22x384xbf16>
    %c1_58 = arith.constant 1 : index
    %c0_59 = arith.constant 0 : index
    %c0_60 = arith.constant 0 : index
    %73 = vector.load %arg5[%c1_58, %c0_59, %c0_60] : memref<3x384x384xbf16, #tpu.memory_space<vmem>>, vector<1x384x384xbf16>
    %74 = vector.shape_cast %73 : vector<1x384x384xbf16> to vector<384x384xbf16>
    %cst_61 = arith.constant dense<0.000000e+00> : vector<22x384xf32>
    %75 = tpu.matmul %72, %74, %cst_61 {dimension_numbers = #tpu.dot_dimension_numbers<[1], [0], [0], [1], [0, 0, 1, 1], [], []>} : vector<22x384xbf16>, vector<384x384xbf16>, vector<22x384xf32> -> vector<22x384xf32>
    %c0_62 = arith.constant 0 : index
    %c0_63 = arith.constant 0 : index
    %76 = vector.load %arg14[%c0_62, %c0_63] : memref<22x384xbf16, #tpu.memory_space<vmem>>, vector<22x384xbf16>
    %c2_64 = arith.constant 2 : index
    %c0_65 = arith.constant 0 : index
    %c0_66 = arith.constant 0 : index
    %77 = vector.load %arg5[%c2_64, %c0_65, %c0_66] : memref<3x384x384xbf16, #tpu.memory_space<vmem>>, vector<1x384x384xbf16>
    %78 = vector.shape_cast %77 : vector<1x384x384xbf16> to vector<384x384xbf16>
    %cst_67 = arith.constant dense<0.000000e+00> : vector<22x384xf32>
    %79 = tpu.matmul %76, %78, %cst_67 {dimension_numbers = #tpu.dot_dimension_numbers<[1], [0], [0], [1], [0, 0, 1, 1], [], []>} : vector<22x384xbf16>, vector<384x384xbf16>, vector<22x384xf32> -> vector<22x384xf32>
    %80 = vector.extract_strided_slice %71 {offsets = [0, 0], sizes = [9, 384], strides = [1, 1]} : vector<22x384xf32> to vector<9x384xf32>
    %81 = vector.extract_strided_slice %75 {offsets = [1, 0], sizes = [9, 384], strides = [1, 1]} : vector<22x384xf32> to vector<9x384xf32>
    %82 = arith.addf %80, %81 : vector<9x384xf32>
    %83 = vector.extract_strided_slice %79 {offsets = [2, 0], sizes = [9, 384], strides = [1, 1]} : vector<22x384xf32> to vector<9x384xf32>
    %84 = arith.addf %82, %83 : vector<9x384xf32>
    %c0_68 = arith.constant 0 : index
    %c0_69 = arith.constant 0 : index
    %85 = vector.load %arg6[%c0_68, %c0_69] : memref<1x384xf32, #tpu.memory_space<vmem>>, vector<1x384xf32>
    %86 = vector.broadcast %85 : vector<1x384xf32> to vector<9x384xf32>
    %87 = arith.addf %84, %86 : vector<9x384xf32>
    %cst_70 = arith.constant 0.000000e+00 : f32
    %88 = vector.broadcast %cst_70 : f32 to vector<9x384xf32>
    %89 = arith.maximumf %87, %88 : vector<9x384xf32>
    %90 = arith.truncf %89 : vector<9x384xf32> to vector<9x384xbf16>
    %c0_71 = arith.constant 0 : index
    %c0_72 = arith.constant 0 : index
    %91 = vector.load %arg15[%c0_71, %c0_72] : memref<18x384xbf16, #tpu.memory_space<vmem>>, vector<9x384xbf16>
    tpu.vector_store %arg15[%c0_71, %c0_72], %90 {strides = array<i32>} : memref<18x384xbf16, #tpu.memory_space<vmem>>, vector<9x384xbf16>,
    %92 = vector.extract_strided_slice %71 {offsets = [11, 0], sizes = [9, 384], strides = [1, 1]} : vector<22x384xf32> to vector<9x384xf32>
    %93 = vector.extract_strided_slice %75 {offsets = [12, 0], sizes = [9, 384], strides = [1, 1]} : vector<22x384xf32> to vector<9x384xf32>
    %94 = arith.addf %92, %93 : vector<9x384xf32>
    %95 = vector.extract_strided_slice %79 {offsets = [13, 0], sizes = [9, 384], strides = [1, 1]} : vector<22x384xf32> to vector<9x384xf32>
    %96 = arith.addf %94, %95 : vector<9x384xf32>
    %c0_73 = arith.constant 0 : index
    %c0_74 = arith.constant 0 : index
    %97 = vector.load %arg6[%c0_73, %c0_74] : memref<1x384xf32, #tpu.memory_space<vmem>>, vector<1x384xf32>
    %98 = vector.broadcast %97 : vector<1x384xf32> to vector<9x384xf32>
    %99 = arith.addf %96, %98 : vector<9x384xf32>
    %cst_75 = arith.constant 0.000000e+00 : f32
    %100 = vector.broadcast %cst_75 : f32 to vector<9x384xf32>
    %101 = arith.maximumf %99, %100 : vector<9x384xf32>
    %102 = arith.truncf %101 : vector<9x384xf32> to vector<9x384xbf16>
    %c9 = arith.constant 9 : index
    %c0_76 = arith.constant 0 : index
    %103 = vector.load %arg15[%c9, %c0_76] : memref<18x384xbf16, #tpu.memory_space<vmem>>, vector<9x384xbf16>
    tpu.vector_store %arg15[%c9, %c0_76], %102 {strides = array<i32>} : memref<18x384xbf16, #tpu.memory_space<vmem>>, vector<9x384xbf16>,
    %c0_77 = arith.constant 0 : index
    %c0_78 = arith.constant 0 : index
    %104 = vector.load %arg15[%c0_77, %c0_78] : memref<18x384xbf16, #tpu.memory_space<vmem>>, vector<18x384xbf16>
    %c0_79 = arith.constant 0 : index
    %c0_80 = arith.constant 0 : index
    %c0_81 = arith.constant 0 : index
    %105 = vector.load %arg7[%c0_79, %c0_80, %c0_81] : memref<3x384x256xbf16, #tpu.memory_space<vmem>>, vector<1x384x256xbf16>
    %106 = vector.shape_cast %105 : vector<1x384x256xbf16> to vector<384x256xbf16>
    %cst_82 = arith.constant dense<0.000000e+00> : vector<18x256xf32>
    %107 = tpu.matmul %104, %106, %cst_82 {dimension_numbers = #tpu.dot_dimension_numbers<[1], [0], [0], [1], [0, 0, 1, 1], [], []>} : vector<18x384xbf16>, vector<384x256xbf16>, vector<18x256xf32> -> vector<18x256xf32>
    %c0_83 = arith.constant 0 : index
    %c0_84 = arith.constant 0 : index
    %108 = vector.load %arg15[%c0_83, %c0_84] : memref<18x384xbf16, #tpu.memory_space<vmem>>, vector<18x384xbf16>
    %c1_85 = arith.constant 1 : index
    %c0_86 = arith.constant 0 : index
    %c0_87 = arith.constant 0 : index
    %109 = vector.load %arg7[%c1_85, %c0_86, %c0_87] : memref<3x384x256xbf16, #tpu.memory_space<vmem>>, vector<1x384x256xbf16>
    %110 = vector.shape_cast %109 : vector<1x384x256xbf16> to vector<384x256xbf16>
    %cst_88 = arith.constant dense<0.000000e+00> : vector<18x256xf32>
    %111 = tpu.matmul %108, %110, %cst_88 {dimension_numbers = #tpu.dot_dimension_numbers<[1], [0], [0], [1], [0, 0, 1, 1], [], []>} : vector<18x384xbf16>, vector<384x256xbf16>, vector<18x256xf32> -> vector<18x256xf32>
    %c0_89 = arith.constant 0 : index
    %c0_90 = arith.constant 0 : index
    %112 = vector.load %arg15[%c0_89, %c0_90] : memref<18x384xbf16, #tpu.memory_space<vmem>>, vector<18x384xbf16>
    %c2_91 = arith.constant 2 : index
    %c0_92 = arith.constant 0 : index
    %c0_93 = arith.constant 0 : index
    %113 = vector.load %arg7[%c2_91, %c0_92, %c0_93] : memref<3x384x256xbf16, #tpu.memory_space<vmem>>, vector<1x384x256xbf16>
    %114 = vector.shape_cast %113 : vector<1x384x256xbf16> to vector<384x256xbf16>
    %cst_94 = arith.constant dense<0.000000e+00> : vector<18x256xf32>
    %115 = tpu.matmul %112, %114, %cst_94 {dimension_numbers = #tpu.dot_dimension_numbers<[1], [0], [0], [1], [0, 0, 1, 1], [], []>} : vector<18x384xbf16>, vector<384x256xbf16>, vector<18x256xf32> -> vector<18x256xf32>
    %116 = vector.extract_strided_slice %107 {offsets = [0, 0], sizes = [7, 256], strides = [1, 1]} : vector<18x256xf32> to vector<7x256xf32>
    %117 = vector.extract_strided_slice %111 {offsets = [1, 0], sizes = [7, 256], strides = [1, 1]} : vector<18x256xf32> to vector<7x256xf32>
    %118 = arith.addf %116, %117 : vector<7x256xf32>
    %119 = vector.extract_strided_slice %115 {offsets = [2, 0], sizes = [7, 256], strides = [1, 1]} : vector<18x256xf32> to vector<7x256xf32>
    %120 = arith.addf %118, %119 : vector<7x256xf32>
    %c0_95 = arith.constant 0 : index
    %c0_96 = arith.constant 0 : index
    %121 = vector.load %arg8[%c0_95, %c0_96] : memref<1x256xf32, #tpu.memory_space<vmem>>, vector<1x256xf32>
    %122 = vector.broadcast %121 : vector<1x256xf32> to vector<7x256xf32>
    %123 = arith.addf %120, %122 : vector<7x256xf32>
    %cst_97 = arith.constant 0.000000e+00 : f32
    %124 = vector.broadcast %cst_97 : f32 to vector<7x256xf32>
    %125 = arith.maximumf %123, %124 : vector<7x256xf32>
    %126 = arith.truncf %125 : vector<7x256xf32> to vector<7x256xbf16>
    %c0_98 = arith.constant 0 : index
    %c0_99 = arith.constant 0 : index
    %127 = vector.load %arg16[%c0_98, %c0_99] : memref<14x256xbf16, #tpu.memory_space<vmem>>, vector<7x256xbf16>
    tpu.vector_store %arg16[%c0_98, %c0_99], %126 {strides = array<i32>} : memref<14x256xbf16, #tpu.memory_space<vmem>>, vector<7x256xbf16>,
    %128 = vector.extract_strided_slice %107 {offsets = [9, 0], sizes = [7, 256], strides = [1, 1]} : vector<18x256xf32> to vector<7x256xf32>
    %129 = vector.extract_strided_slice %111 {offsets = [10, 0], sizes = [7, 256], strides = [1, 1]} : vector<18x256xf32> to vector<7x256xf32>
    %130 = arith.addf %128, %129 : vector<7x256xf32>
    %131 = vector.extract_strided_slice %115 {offsets = [11, 0], sizes = [7, 256], strides = [1, 1]} : vector<18x256xf32> to vector<7x256xf32>
    %132 = arith.addf %130, %131 : vector<7x256xf32>
    %c0_100 = arith.constant 0 : index
    %c0_101 = arith.constant 0 : index
    %133 = vector.load %arg8[%c0_100, %c0_101] : memref<1x256xf32, #tpu.memory_space<vmem>>, vector<1x256xf32>
    %134 = vector.broadcast %133 : vector<1x256xf32> to vector<7x256xf32>
    %135 = arith.addf %132, %134 : vector<7x256xf32>
    %cst_102 = arith.constant 0.000000e+00 : f32
    %136 = vector.broadcast %cst_102 : f32 to vector<7x256xf32>
    %137 = arith.maximumf %135, %136 : vector<7x256xf32>
    %138 = arith.truncf %137 : vector<7x256xf32> to vector<7x256xbf16>
    %c7 = arith.constant 7 : index
    %c0_103 = arith.constant 0 : index
    %139 = vector.load %arg16[%c7, %c0_103] : memref<14x256xbf16, #tpu.memory_space<vmem>>, vector<7x256xbf16>
    tpu.vector_store %arg16[%c7, %c0_103], %138 {strides = array<i32>} : memref<14x256xbf16, #tpu.memory_space<vmem>>, vector<7x256xbf16>,
    %c0_104 = arith.constant 0 : index
    %c0_105 = arith.constant 0 : index
    %140 = vector.load %arg16[%c0_104, %c0_105] : memref<14x256xbf16, #tpu.memory_space<vmem>>, vector<14x256xbf16>
    %c0_106 = arith.constant 0 : index
    %c0_107 = arith.constant 0 : index
    %c0_108 = arith.constant 0 : index
    %141 = vector.load %arg9[%c0_106, %c0_107, %c0_108] : memref<3x256x256xbf16, #tpu.memory_space<vmem>>, vector<1x256x256xbf16>
    %142 = vector.shape_cast %141 : vector<1x256x256xbf16> to vector<256x256xbf16>
    %cst_109 = arith.constant dense<0.000000e+00> : vector<14x256xf32>
    %143 = tpu.matmul %140, %142, %cst_109 {dimension_numbers = #tpu.dot_dimension_numbers<[1], [0], [0], [1], [0, 0, 1, 1], [], []>} : vector<14x256xbf16>, vector<256x256xbf16>, vector<14x256xf32> -> vector<14x256xf32>
    %c0_110 = arith.constant 0 : index
    %c0_111 = arith.constant 0 : index
    %144 = vector.load %arg16[%c0_110, %c0_111] : memref<14x256xbf16, #tpu.memory_space<vmem>>, vector<14x256xbf16>
    %c1_112 = arith.constant 1 : index
    %c0_113 = arith.constant 0 : index
    %c0_114 = arith.constant 0 : index
    %145 = vector.load %arg9[%c1_112, %c0_113, %c0_114] : memref<3x256x256xbf16, #tpu.memory_space<vmem>>, vector<1x256x256xbf16>
    %146 = vector.shape_cast %145 : vector<1x256x256xbf16> to vector<256x256xbf16>
    %cst_115 = arith.constant dense<0.000000e+00> : vector<14x256xf32>
    %147 = tpu.matmul %144, %146, %cst_115 {dimension_numbers = #tpu.dot_dimension_numbers<[1], [0], [0], [1], [0, 0, 1, 1], [], []>} : vector<14x256xbf16>, vector<256x256xbf16>, vector<14x256xf32> -> vector<14x256xf32>
    %c0_116 = arith.constant 0 : index
    %c0_117 = arith.constant 0 : index
    %148 = vector.load %arg16[%c0_116, %c0_117] : memref<14x256xbf16, #tpu.memory_space<vmem>>, vector<14x256xbf16>
    %c2_118 = arith.constant 2 : index
    %c0_119 = arith.constant 0 : index
    %c0_120 = arith.constant 0 : index
    %149 = vector.load %arg9[%c2_118, %c0_119, %c0_120] : memref<3x256x256xbf16, #tpu.memory_space<vmem>>, vector<1x256x256xbf16>
    %150 = vector.shape_cast %149 : vector<1x256x256xbf16> to vector<256x256xbf16>
    %cst_121 = arith.constant dense<0.000000e+00> : vector<14x256xf32>
    %151 = tpu.matmul %148, %150, %cst_121 {dimension_numbers = #tpu.dot_dimension_numbers<[1], [0], [0], [1], [0, 0, 1, 1], [], []>} : vector<14x256xbf16>, vector<256x256xbf16>, vector<14x256xf32> -> vector<14x256xf32>
    %152 = vector.extract_strided_slice %143 {offsets = [0, 0], sizes = [5, 256], strides = [1, 1]} : vector<14x256xf32> to vector<5x256xf32>
    %153 = vector.extract_strided_slice %147 {offsets = [1, 0], sizes = [5, 256], strides = [1, 1]} : vector<14x256xf32> to vector<5x256xf32>
    %154 = arith.addf %152, %153 : vector<5x256xf32>
    %155 = vector.extract_strided_slice %151 {offsets = [2, 0], sizes = [5, 256], strides = [1, 1]} : vector<14x256xf32> to vector<5x256xf32>
    %156 = arith.addf %154, %155 : vector<5x256xf32>
    %c0_122 = arith.constant 0 : index
    %c0_123 = arith.constant 0 : index
    %157 = vector.load %arg10[%c0_122, %c0_123] : memref<1x256xf32, #tpu.memory_space<vmem>>, vector<1x256xf32>
    %158 = vector.broadcast %157 : vector<1x256xf32> to vector<5x256xf32>
    %159 = arith.addf %156, %158 : vector<5x256xf32>
    %cst_124 = arith.constant 0.000000e+00 : f32
    %160 = vector.broadcast %cst_124 : f32 to vector<5x256xf32>
    %161 = arith.maximumf %159, %160 : vector<5x256xf32>
    %c0_125 = arith.constant 0 : index
    %c0_126 = arith.constant 0 : index
    %c0_127 = arith.constant 0 : index
    %162 = vector.load %arg11[%c0_125, %c0_126, %c0_127] : memref<2x5x256xf32, #tpu.memory_space<vmem>>, vector<1x5x256xf32>
    %163 = vector.shape_cast %162 : vector<1x5x256xf32> to vector<5x256xf32>
    %164 = vector.shape_cast %161 : vector<5x256xf32> to vector<1x5x256xf32>
    tpu.vector_store %arg11[%c0_125, %c0_126, %c0_127], %164 {strides = array<i32>} : memref<2x5x256xf32, #tpu.memory_space<vmem>>, vector<1x5x256xf32>,
    %165 = vector.extract_strided_slice %143 {offsets = [7, 0], sizes = [5, 256], strides = [1, 1]} : vector<14x256xf32> to vector<5x256xf32>
    %166 = vector.extract_strided_slice %147 {offsets = [8, 0], sizes = [5, 256], strides = [1, 1]} : vector<14x256xf32> to vector<5x256xf32>
    %167 = arith.addf %165, %166 : vector<5x256xf32>
    %168 = vector.extract_strided_slice %151 {offsets = [9, 0], sizes = [5, 256], strides = [1, 1]} : vector<14x256xf32> to vector<5x256xf32>
    %169 = arith.addf %167, %168 : vector<5x256xf32>
    %c0_128 = arith.constant 0 : index
    %c0_129 = arith.constant 0 : index
    %170 = vector.load %arg10[%c0_128, %c0_129] : memref<1x256xf32, #tpu.memory_space<vmem>>, vector<1x256xf32>
    %171 = vector.broadcast %170 : vector<1x256xf32> to vector<5x256xf32>
    %172 = arith.addf %169, %171 : vector<5x256xf32>
    %cst_130 = arith.constant 0.000000e+00 : f32
    %173 = vector.broadcast %cst_130 : f32 to vector<5x256xf32>
    %174 = arith.maximumf %172, %173 : vector<5x256xf32>
    %c1_131 = arith.constant 1 : index
    %c0_132 = arith.constant 0 : index
    %c0_133 = arith.constant 0 : index
    %175 = vector.load %arg11[%c1_131, %c0_132, %c0_133] : memref<2x5x256xf32, #tpu.memory_space<vmem>>, vector<1x5x256xf32>
    %176 = vector.shape_cast %175 : vector<1x5x256xf32> to vector<5x256xf32>
    %177 = vector.shape_cast %174 : vector<5x256xf32> to vector<1x5x256xf32>
    tpu.vector_store %arg11[%c1_131, %c0_132, %c0_133], %177 {strides = array<i32>} : memref<2x5x256xf32, #tpu.memory_space<vmem>>, vector<1x5x256xf32>,
    return
  }
  func.func @transform_0(%arg0: i32) -> (i32, i32, i32) {
    %c0_i32 = arith.constant 0 : i32
    %c0_i32_0 = arith.constant 0 : i32
    %c0_i32_1 = arith.constant 0 : i32
    return %arg0, %c0_i32, %c0_i32_0 : i32, i32, i32
  }
  func.func @transform_1(%arg0: i32) -> (i32, i32, i32) {
    %c0_i32 = arith.constant 0 : i32
    %c0_i32_0 = arith.constant 0 : i32
    %c0_i32_1 = arith.constant 0 : i32
    return %arg0, %c0_i32, %c0_i32_0 : i32, i32, i32
  }
  func.func @transform_2(%arg0: i32) -> (i32, i32, i32) {
    %c0_i32 = arith.constant 0 : i32
    %c0_i32_0 = arith.constant 0 : i32
    %c0_i32_1 = arith.constant 0 : i32
    %c0_i32_2 = arith.constant 0 : i32
    return %c0_i32, %c0_i32_0, %c0_i32_1 : i32, i32, i32
  }
  func.func @transform_3(%arg0: i32) -> (i32, i32) {
    %c0_i32 = arith.constant 0 : i32
    %c0_i32_0 = arith.constant 0 : i32
    %c0_i32_1 = arith.constant 0 : i32
    return %c0_i32, %c0_i32_0 : i32, i32
  }
  func.func @transform_4(%arg0: i32) -> (i32, i32, i32) {
    %c0_i32 = arith.constant 0 : i32
    %c0_i32_0 = arith.constant 0 : i32
    %c0_i32_1 = arith.constant 0 : i32
    %c0_i32_2 = arith.constant 0 : i32
    return %c0_i32, %c0_i32_0, %c0_i32_1 : i32, i32, i32
  }
  func.func @transform_5(%arg0: i32) -> (i32, i32) {
    %c0_i32 = arith.constant 0 : i32
    %c0_i32_0 = arith.constant 0 : i32
    %c0_i32_1 = arith.constant 0 : i32
    return %c0_i32, %c0_i32_0 : i32, i32
  }
  func.func @transform_6(%arg0: i32) -> (i32, i32, i32) {
    %c0_i32 = arith.constant 0 : i32
    %c0_i32_0 = arith.constant 0 : i32
    %c0_i32_1 = arith.constant 0 : i32
    %c0_i32_2 = arith.constant 0 : i32
    return %c0_i32, %c0_i32_0, %c0_i32_1 : i32, i32, i32
  }
  func.func @transform_7(%arg0: i32) -> (i32, i32) {
    %c0_i32 = arith.constant 0 : i32
    %c0_i32_0 = arith.constant 0 : i32
    %c0_i32_1 = arith.constant 0 : i32
    return %c0_i32, %c0_i32_0 : i32, i32
  }
  func.func @transform_8(%arg0: i32) -> (i32, i32, i32) {
    %c0_i32 = arith.constant 0 : i32
    %c0_i32_0 = arith.constant 0 : i32
    %c0_i32_1 = arith.constant 0 : i32
    %c0_i32_2 = arith.constant 0 : i32
    return %c0_i32, %c0_i32_0, %c0_i32_1 : i32, i32, i32
  }
  func.func @transform_9(%arg0: i32) -> (i32, i32) {
    %c0_i32 = arith.constant 0 : i32
    %c0_i32_0 = arith.constant 0 : i32
    %c0_i32_1 = arith.constant 0 : i32
    return %c0_i32, %c0_i32_0 : i32, i32
  }
  func.func @transform_10(%arg0: i32) -> (i32, i32, i32) {
    %c0_i32 = arith.constant 0 : i32
    %c0_i32_0 = arith.constant 0 : i32
    %c0_i32_1 = arith.constant 0 : i32
    return %arg0, %c0_i32, %c0_i32_0 : i32, i32, i32
  }
}

</mosaic_0001>

<llo_original>
// kernel: tile.23
$region0: #{tile.23}
  #allocation0 [shape = 's32[1]{0}', space=sflag, size = 0x4, scoped, tag = 'scoped memory for tile.23']
  %s0 = inlined_call_operand.vmem [shape: f32[32], index: 0, kind: input, shape index: {}]
  %s1 = inlined_call_operand.vmem [shape: f32[11,32], index: 1, kind: output, shape index: {}]
  // Predicated region
  $region2: #{tile.23} parent=0 // pred_check
    _
  $region3: #{tile.23} parent=0 // pred_check_branch
    %3 = sbr.rel (0) target = $region5
  $region4: #{tile.23} parent=0 // pred_region
    _
  $region5: #{tile.23} parent=0 // pred_fallthru
    _
  %v4 = vld [vmem:[%s0] ss:$0 sm:$0xff]
  %5 = vst [vmem:[%s1] sm:$0xff] %v4
  %s6 = scalar_lea.vmem %s1, 8
  %7 = vst [vmem:[%s6] sm:$0xff] %v4

// kernel: tile.24
$region0: #{tile.24}
  %s0 = inlined_call_operand.vmem [shape: f32[11,32], index: 0, kind: input, shape index: {}]
  %s1 = inlined_call_operand.vmem [shape: f32[352], index: 1, kind: output, shape index: {}]
  $region1: #{tile.24} parent=0
    #allocation0 [shape = 'u8[4096]{0}', space=vmem, size = 0x1000, scoped, tag = 'scoped mem for output reshape']
    %v2 = vld [vmem:[%s0] ss:$4 sm:$0x7]
    %vm3 = vcmask 261120
    %4 = vst.msk [vmem:[#allocation0] sm:$0x7] %vm3, %v2
    %s5 = scalar_lea.vmem %s0, 3
    %s6 = smov 3
    %v7 = vld [vmem:[%s5] ss:$4 sm:%s6]
    %8 = vrot.lane.b32.xlu0 %v7, 96
    %v9 = vpop.permute.xlu0 %8
    %vm10 = vcmask 1048320
    %11 = vst.msk [vmem:[#allocation0] sm:$0x3] %vm10, %v9
    %s12 = scalar_lea.vmem %s0, 2
    %v13 = vld [vmem:[%s12] ss:$4 sm:$0x7]
    %14 = vrot.lane.b32.xlu0 %v13, 64
    %v15 = vpop.permute.xlu0 %14
    %vm16 = vcmask 785920
    %17 = vst.msk [vmem:[#allocation0] sm:$0x7] %vm16, %v15
    %s18 = scalar_lea.vmem %s0, 1
    %v19 = vld [vmem:[%s18] ss:$4 sm:$0x7]
    %20 = vrot.lane.b32.xlu0 %v19, 32
    %v21 = vpop.permute.xlu0 %20
    %vm22 = vcmask 523520
    %23 = vst.msk [vmem:[#allocation0] sm:$0x7] %vm22, %v21
    %s25 = sshllo.u32 0, 4
    %v27 = vld [vmem:[#allocation0] sm:%s25]
    %s28 = sshllo.u32 0, 4
    %29 = vst [vmem:[%s1] sm:%s28] %v27

// kernel: tile.28
$region0: #{tile.28}
  #allocation0 [shape = 's32[1]{0}', space=sflag, size = 0x4, scoped, tag = 'scoped memory for tile.28']
  %s0 = inlined_call_operand.vmem [shape: f32[32], index: 0, kind: input, shape index: {}]
  %s1 = inlined_call_operand.vmem [shape: f32[9,32], index: 1, kind: output, shape index: {}]
  // Predicated region
  $region2: #{tile.28} parent=0 // pred_check
    _
  $region3: #{tile.28} parent=0 // pred_check_branch
    %3 = sbr.rel (0) target = $region5
  $region4: #{tile.28} parent=0 // pred_region
    _
  $region5: #{tile.28} parent=0 // pred_fallthru
    _
  %v4 = vld [vmem:[%s0] ss:$0 sm:$0xff]
  %5 = vst [vmem:[%s1] sm:$0xff] %v4
  %s6 = scalar_lea.vmem %s1, 8
  %7 = vst [vmem:[%s6] sm:$0xff] %v4

// kernel: tile.29
$region0: #{tile.29}
  %s0 = inlined_call_operand.vmem [shape: f32[9,32], index: 0, kind: input, shape index: {}]
  %s1 = inlined_call_operand.vmem [shape: f32[288], index: 1, kind: output, shape index: {}]
  $region1: #{tile.29} parent=0
    #allocation0 [shape = 'u8[4096]{0}', space=vmem, size = 0x1000, scoped, tag = 'scoped mem for output reshape']
    %v2 = vld [vmem:[%s0] ss:$4 sm:$0x7]
    %vm3 = vcmask 261120
    %4 = vst.msk [vmem:[#allocation0] sm:$0x7] %vm3, %v2
    %s5 = scalar_lea.vmem %s0, 3
    %s6 = smov 3
    %v7 = vld [vmem:[%s5] ss:$4 sm:%s6]
    %8 = vrot.lane.b32.xlu0 %v7, 96
    %v9 = vpop.permute.xlu0 %8
    %vm10 = vcmask 1048320
    %11 = vst.msk [vmem:[#allocation0] sm:$0x3] %vm10, %v9
    %s12 = scalar_lea.vmem %s0, 2
    %s13 = smov 3
    %v14 = vld [vmem:[%s12] ss:$4 sm:%s13]
    %15 = vrot.lane.b32.xlu0 %v14, 64
    %v16 = vpop.permute.xlu0 %15
    %vm17 = vcmask 785920
    %18 = vst.msk [vmem:[#allocation0] sm:$0x3] %vm17, %v16
    %s19 = scalar_lea.vmem %s0, 1
    %s20 = smov 3
    %v21 = vld [vmem:[%s19] ss:$4 sm:%s20]
    %22 = vrot.lane.b32.xlu0 %v21, 32
    %v23 = vpop.permute.xlu0 %22
    %vm24 = vcmask 523520
    %25 = vst.msk [vmem:[#allocation0] sm:$0x3] %vm24, %v23
    %s27 = sshllo.u32 0, 4
    %v29 = vld [vmem:[#allocation0] sm:%s27]
    %s30 = sshllo.u32 0, 4
    %31 = vst [vmem:[%s1] sm:%s30] %v29

// kernel: tile.33
$region0: #{tile.33}
  #allocation0 [shape = 's32[1]{0}', space=sflag, size = 0x4, scoped, tag = 'scoped memory for tile.33']
  %s0 = inlined_call_operand.vmem [shape: f32[32], index: 0, kind: input, shape index: {}]
  %s1 = inlined_call_operand.vmem [shape: f32[7,32], index: 1, kind: output, shape index: {}]
  // Predicated region
  $region2: #{tile.33} parent=0 // pred_check
    _
  $region3: #{tile.33} parent=0 // pred_check_branch
    %3 = sbr.rel (0) target = $region5
  $region4: #{tile.33} parent=0 // pred_region
    _
  $region5: #{tile.33} parent=0 // pred_fallthru
    _
  %v4 = vld [vmem:[%s0] ss:$0 sm:$0xff]
  %5 = vst [vmem:[%s1] sm:$0xff] %v4

// kernel: tile.34
$region0: #{tile.34}
  %s0 = inlined_call_operand.vmem [shape: f32[7,32], index: 0, kind: input, shape index: {}]
  %s1 = inlined_call_operand.vmem [shape: f32[224], index: 1, kind: output, shape index: {}]
  $region1: #{tile.34} parent=0
    #allocation0 [shape = 'u8[4096]{0}', space=vmem, size = 0x1000, scoped, tag = 'scoped mem for output reshape']
    %s2 = smov 3
    %v3 = vld [vmem:[%s0] ss:$4 sm:%s2]
    %vm4 = vcmask 261120
    %5 = vst.msk [vmem:[#allocation0] sm:$0x3] %vm4, %v3
    %s6 = scalar_lea.vmem %s0, 3
    %v7 = vld [vmem:[%s6] sm:$0x1]
    %8 = vrot.lane.b32.xlu0 %v7, 96
    %v9 = vpop.permute.xlu0 %8
    %vm10 = vcmask 1048320
    %11 = vst.msk [vmem:[#allocation0] sm:$0x1] %vm10, %v9
    %s12 = scalar_lea.vmem %s0, 2
    %s13 = smov 3
    %v14 = vld [vmem:[%s12] ss:$4 sm:%s13]
    %15 = vrot.lane.b32.xlu0 %v14, 64
    %v16 = vpop.permute.xlu0 %15
    %vm17 = vcmask 785920
    %18 = vst.msk [vmem:[#allocation0] sm:$0x3] %vm17, %v16
    %s19 = scalar_lea.vmem %s0, 1
    %s20 = smov 3
    %v21 = vld [vmem:[%s19] ss:$4 sm:%s20]
    %22 = vrot.lane.b32.xlu0 %v21, 32
    %v23 = vpop.permute.xlu0 %22
    %vm24 = vcmask 523520
    %25 = vst.msk [vmem:[#allocation0] sm:$0x3] %vm24, %v23
    %s27 = sshllo.u32 0, 2
    %v29 = vld [vmem:[#allocation0] sm:%s27]
    %s30 = sshllo.u32 0, 2
    %31 = vst [vmem:[%s1] sm:%s30] %v29

// kernel: tile.38
$region0: #{tile.38}
  #allocation0 [shape = 's32[1]{0}', space=sflag, size = 0x4, scoped, tag = 'scoped memory for tile.38']
  %s0 = inlined_call_operand.vmem [shape: f32[32], index: 0, kind: input, shape index: {}]
  %s1 = inlined_call_operand.vmem [shape: f32[5,32], index: 1, kind: output, shape index: {}]
  // Predicated region
  $region2: #{tile.38} parent=0 // pred_check
    _
  $region3: #{tile.38} parent=0 // pred_check_branch
    %3 = sbr.rel (0) target = $region5
  $region4: #{tile.38} parent=0 // pred_region
    _
  $region5: #{tile.38} parent=0 // pred_fallthru
    _
  %v4 = vld [vmem:[%s0] ss:$0 sm:$0xff]
  %5 = vst [vmem:[%s1] sm:$0xff] %v4

// kernel: tile.39
$region0: #{tile.39}
  %s0 = inlined_call_operand.vmem [shape: f32[5,32], index: 0, kind: input, shape index: {}]
  %s1 = inlined_call_operand.vmem [shape: f32[160], index: 1, kind: output, shape index: {}]
  $region1: #{tile.39} parent=0
    #allocation0 [shape = 'u8[4096]{0}', space=vmem, size = 0x1000, scoped, tag = 'scoped mem for output reshape']
    %s2 = smov 3
    %v3 = vld [vmem:[%s0] ss:$4 sm:%s2]
    %vm4 = vcmask 261120
    %5 = vst.msk [vmem:[#allocation0] sm:$0x3] %vm4, %v3
    %s6 = scalar_lea.vmem %s0, 3
    %v7 = vld [vmem:[%s6] sm:$0x1]
    %8 = vrot.lane.b32.xlu0 %v7, 96
    %v9 = vpop.permute.xlu0 %8
    %vm10 = vcmask 1048320
    %11 = vst.msk [vmem:[#allocation0] sm:$0x1] %vm10, %v9
    %s12 = scalar_lea.vmem %s0, 2
    %v13 = vld [vmem:[%s12] sm:$0x1]
    %14 = vrot.lane.b32.xlu0 %v13, 64
    %v15 = vpop.permute.xlu0 %14
    %vm16 = vcmask 785920
    %17 = vst.msk [vmem:[#allocation0] sm:$0x1] %vm16, %v15
    %s18 = scalar_lea.vmem %s0, 1
    %v19 = vld [vmem:[%s18] sm:$0x1]
    %20 = vrot.lane.b32.xlu0 %v19, 32
    %v21 = vpop.permute.xlu0 %20
    %vm22 = vcmask 523520
    %23 = vst.msk [vmem:[#allocation0] sm:$0x1] %vm22, %v21
    %s25 = sshllo.u32 0, 2
    %v27 = vld [vmem:[#allocation0] sm:%s25]
    %s28 = sshllo.u32 0, 2
    %29 = vst [vmem:[%s1] sm:%s28] %v27

// kernel: predict_encoder_forward.1
$region0: #{predict_encoder_forward.1}
  #allocation0 [shape = 'u32[]', space=smem, size = 0x4, offset = 0x4, fixed_abs, tag = 'smem constant byte address 0x4 - core index']
  #allocation1 [shape = 'u32[144,128]{1,0:T(1,128)}', space=vmem, size = 0x12000, scoped, tag = 'internal scratch']
  #allocation2 [shape = 'bf16[24,72]{1,0:T(8,128)(2,1)}', space=vmem, size = 0x1800, scoped, tag = 'scratch operand']
  #allocation3 [shape = 'bf16[24,72]{1,0:T(8,128)(2,1)}', space=vmem, size = 0x1800, scoped, tag = 'scratch operand']
  #allocation4 [shape = 'bf16[22,384]{1,0:T(8,128)(2,1)}', space=vmem, size = 0x4800, scoped, tag = 'scratch operand']
  #allocation5 [shape = 'bf16[18,384]{1,0:T(8,128)(2,1)}', space=vmem, size = 0x4800, scoped, tag = 'scratch operand']
  #allocation6 [shape = 'bf16[14,256]{1,0:T(8,128)(2,1)}', space=vmem, size = 0x2000, scoped, tag = 'scratch operand']
  %s0 = inlined_call_operand.vmem [shape: f32[2,12,72], index: 0, kind: input, shape index: {}]
  %s1 = inlined_call_operand.vmem [shape: f32[2,12,72], index: 1, kind: input, shape index: {}]
  %s2 = inlined_call_operand.vmem [shape: bf16[3,72,384], index: 2, kind: input, shape index: {}]
  %s3 = inlined_call_operand.vmem [shape: f32[1,384], index: 3, kind: input, shape index: {}]
  %s4 = inlined_call_operand.vmem [shape: bf16[3,384,384], index: 4, kind: input, shape index: {}]
  %s5 = inlined_call_operand.vmem [shape: f32[1,384], index: 5, kind: input, shape index: {}]
  %s6 = inlined_call_operand.vmem [shape: bf16[3,384,256], index: 6, kind: input, shape index: {}]
  %s7 = inlined_call_operand.vmem [shape: f32[1,256], index: 7, kind: input, shape index: {}]
  %s8 = inlined_call_operand.vmem [shape: bf16[3,256,256], index: 8, kind: input, shape index: {}]
  %s9 = inlined_call_operand.vmem [shape: f32[1,256], index: 9, kind: input, shape index: {}]
  %s10 = inlined_call_operand.vmem [shape: f32[2,5,256], index: 10, kind: output, shape index: {}]
  %s11 = sld [smem:[#allocation0]]
  $region50: #{predict_encoder_forward.1} parent=0
    _
  %s13 = ssub.s32 1, %s11
  %s14 = scalar_select 0, %s13, %s11
  // Predicated region
  $region2: #{predict_encoder_forward.1} parent=0 // pred_check
    _
  $region3: #{predict_encoder_forward.1} parent=0 // pred_check_branch
    %16 = sbr.rel (0) target = $region5
  $region4: #{predict_encoder_forward.1} parent=0 // pred_region
    _
  $region5: #{predict_encoder_forward.1} parent=0 // pred_fallthru
    _
  // Predicated region
  $region6: #{predict_encoder_forward.1} parent=0 // pred_check
    _
  $region7: #{predict_encoder_forward.1} parent=0 // pred_check_branch
    %18 = sbr.rel (0) target = $region9
  $region8: #{predict_encoder_forward.1} parent=0 // pred_region
    _
  $region9: #{predict_encoder_forward.1} parent=0 // pred_fallthru
    _
  // Predicated region
  $region10: #{predict_encoder_forward.1} parent=0 // pred_check
    _
  $region11: #{predict_encoder_forward.1} parent=0 // pred_check_branch
    %20 = sbr.rel (0) target = $region13
  $region12: #{predict_encoder_forward.1} parent=0 // pred_region
    _
  $region13: #{predict_encoder_forward.1} parent=0 // pred_fallthru
    _
  // Predicated region
  $region14: #{predict_encoder_forward.1} parent=0 // pred_check
    _
  $region15: #{predict_encoder_forward.1} parent=0 // pred_check_branch
    %22 = sbr.rel (0) target = $region17
  $region16: #{predict_encoder_forward.1} parent=0 // pred_region
    _
  $region17: #{predict_encoder_forward.1} parent=0 // pred_fallthru
    _
  // Predicated region
  $region18: #{predict_encoder_forward.1} parent=0 // pred_check
    _
  $region19: #{predict_encoder_forward.1} parent=0 // pred_check_branch
    %24 = sbr.rel (0) target = $region21
  $region20: #{predict_encoder_forward.1} parent=0 // pred_region
    _
  $region21: #{predict_encoder_forward.1} parent=0 // pred_fallthru
    _
  // Predicated region
  $region22: #{predict_encoder_forward.1} parent=0 // pred_check
    _
  $region23: #{predict_encoder_forward.1} parent=0 // pred_check_branch
    %26 = sbr.rel (0) target = $region25
  $region24: #{predict_encoder_forward.1} parent=0 // pred_region
    _
  $region25: #{predict_encoder_forward.1} parent=0 // pred_fallthru
    _
  // Predicated region
  $region26: #{predict_encoder_forward.1} parent=0 // pred_check
    _
  $region27: #{predict_encoder_forward.1} parent=0 // pred_check_branch
    %28 = sbr.rel (0) target = $region29
  $region28: #{predict_encoder_forward.1} parent=0 // pred_region
    _
  $region29: #{predict_encoder_forward.1} parent=0 // pred_fallthru
    _
  // Predicated region
  $region30: #{predict_encoder_forward.1} parent=0 // pred_check
    _
  $region31: #{predict_encoder_forward.1} parent=0 // pred_check_branch
    %30 = sbr.rel (0) target = $region33
  $region32: #{predict_encoder_forward.1} parent=0 // pred_region
    _
  $region33: #{predict_encoder_forward.1} parent=0 // pred_fallthru
    _
  // Predicated region
  $region34: #{predict_encoder_forward.1} parent=0 // pred_check
    _
  $region35: #{predict_encoder_forward.1} parent=0 // pred_check_branch
    %32 = sbr.rel (0) target = $region37
  $region36: #{predict_encoder_forward.1} parent=0 // pred_region
    _
  $region37: #{predict_encoder_forward.1} parent=0 // pred_fallthru
    _
  // Predicated region
  $region38: #{predict_encoder_forward.1} parent=0 // pred_check
    _
  $region39: #{predict_encoder_forward.1} parent=0 // pred_check_branch
    %34 = sbr.rel (0) target = $region41
  $region40: #{predict_encoder_forward.1} parent=0 // pred_region
    _
  $region41: #{predict_encoder_forward.1} parent=0 // pred_fallthru
    _
  %v36 = vld [vmem:[%s0] sm:$0xff]
  %v37 = vld [vmem:[%s0 + $0x8] sm:$0xf]
  %v38 = vmul.f32 %v36, 0.003921569
  %v39 = vmul.f32 %v37, 0.003921569
  %v40 = vsub.f32 %v38, 0.5
  %v41 = vsub.f32 %v39, 0.5
  %v42 = vpack.c.bf16 %v41, %v40
  %v44 = vunpack.c.l.b16 %v42
  %v45 = vunpack.c.h.b16 %v42
  %v46 = vpack.c.b16 %v44, %v44
  %v47 = vpack.c.b16 %v45, %v45
  %vm50 = vcmask 584704
  %51 = vst.msk [vmem:[#allocation2] sm:$0xf] %vm50, %v46
  %vm52 = vcmask 582656
  %53 = vst.msk [vmem:[#allocation2 + $0x4] sm:$0x3] %vm52, %v47
  %v54 = vld [vmem:[%s1] sm:$0xff]
  %v55 = vld [vmem:[%s1 + $0x8] sm:$0xf]
  %v56 = vmul.f32 %v54, 0.003921569
  %v57 = vmul.f32 %v55, 0.003921569
  %v58 = vsub.f32 %v56, 0.5
  %v59 = vsub.f32 %v57, 0.5
  %v60 = vpack.c.bf16 %v59, %v58
  %v62 = vunpack.c.l.b16 %v60
  %v63 = vunpack.c.h.b16 %v60
  %v64 = vpack.c.b16 %v62, %v62
  %v65 = vpack.c.b16 %v63, %v63
  %68 = vst.msk [vmem:[#allocation3] sm:$0xf] %vm50, %v64
  %69 = vst.msk [vmem:[#allocation3 + $0x4] sm:$0x3] %vm52, %v65
  %s70 = scalar_lea.vmem %s0, 16
  %v71 = vld [vmem:[%s70] sm:$0xff]
  %v72 = vld [vmem:[%s70 + $0x8] sm:$0xf]
  %v73 = vmul.f32 %v71, 0.003921569
  %v74 = vmul.f32 %v72, 0.003921569
  %v75 = vsub.f32 %v73, 0.5
  %v76 = vsub.f32 %v74, 0.5
  %v77 = vpack.c.bf16 %v76, %v75
  %v79 = vunpack.c.l.b16 %v77
  %v80 = vunpack.c.h.b16 %v77
  %v81 = vpack.c.b16 %v79, %v79
  %v82 = vpack.c.b16 %v80, %v80
  %vm83 = vcmask 1041408
  %vm84 = vcmask 1045508
  %vm85 = vmor %vm83, %vm84
  %v86 = vrot.slane %v81, 6
  %v87 = vrot.slane %v86, 4
  %v88 = vrot.slane %v82, 6
  %v89 = vsel %vm85, %v87, %v88
  %vm92 = vcmask 584706
  %93 = vst.msk [vmem:[#allocation2 + $0x4] sm:$0xc] %vm92, %v86
  %94 = vst.msk [vmem:[#allocation2 + $0x8] sm:$0xf] %vm50, %v89
  %s95 = scalar_lea.vmem %s1, 16
  %v96 = vld [vmem:[%s95] sm:$0xff]
  %v97 = vld [vmem:[%s95 + $0x8] sm:$0xf]
  %v98 = vmul.f32 %v96, 0.003921569
  %v99 = vmul.f32 %v97, 0.003921569
  %v100 = vsub.f32 %v98, 0.5
  %v101 = vsub.f32 %v99, 0.5
  %v102 = vpack.c.bf16 %v101, %v100
  %v104 = vunpack.c.l.b16 %v102
  %v105 = vunpack.c.h.b16 %v102
  %v106 = vpack.c.b16 %v104, %v104
  %v107 = vpack.c.b16 %v105, %v105
  %v108 = vrot.slane %v106, 6
  %v109 = vrot.slane %v108, 4
  %v110 = vrot.slane %v107, 6
  %v111 = vsel %vm85, %v109, %v110
  %114 = vst.msk [vmem:[#allocation3 + $0x4] sm:$0xc] %vm92, %v108
  %115 = vst.msk [vmem:[#allocation3 + $0x8] sm:$0xf] %vm50, %v111
  %v116 = vld [vmem:[#allocation2] sm:$0xf]
  %v117 = vld [vmem:[#allocation2 + $0x4] sm:$0xf]
  %v118 = vld [vmem:[#allocation2 + $0x8] sm:$0xf]
  %v119 = vld [vmem:[%s2] sm:$0xff]
  %v120 = vld [vmem:[%s2 + $0x8] sm:$0xf]
  %v121 = vld [vmem:[%s2 + $0xc] sm:$0xff]
  %v122 = vld [vmem:[%s2 + $0x14] sm:$0xf]
  %v123 = vld [vmem:[%s2 + $0x18] sm:$0xff]
  %v124 = vld [vmem:[%s2 + $0x20] sm:$0xf]
  %v125 = vld [vmem:[%s2 + $0x24] sm:$0xff]
  %v126 = vld [vmem:[%s2 + $0x2c] sm:$0xf]
  %v127 = vld [vmem:[%s2 + $0x30] sm:$0xff]
  %v128 = vld [vmem:[%s2 + $0x38] sm:$0xf]
  %v129 = vld [vmem:[%s2 + $0x3c] sm:$0xff]
  %v130 = vld [vmem:[%s2 + $0x44] sm:$0xf]
  %v131 = vld [vmem:[%s2 + $0x48] sm:$0xff]
  %v132 = vld [vmem:[%s2 + $0x50] sm:$0xf]
  %v133 = vld [vmem:[%s2 + $0x54] sm:$0xff]
  %v134 = vld [vmem:[%s2 + $0x5c] sm:$0xf]
  %v135 = vld [vmem:[%s2 + $0x60] sm:$0xff]
  %v136 = vld [vmem:[%s2 + $0x68] sm:$0xf]
  %v140 = vunpack.c.l.b16 %v116
  %v141 = vunpack.c.l.b16 %v117
  %v142 = vunpack.c.l.b16 %v118
  %v143 = vpack.c.b16 %v141, %v140
  %v144 = vpack.c.b16 %v142, %v142
  %v163 = vunpack.c.l.b16 %v119
  %v164 = vunpack.c.h.b16 %v119
  %v165 = vunpack.c.l.b16 %v120
  %v166 = vunpack.c.l.b16 %v121
  %v167 = vunpack.c.h.b16 %v121
  %v168 = vunpack.c.l.b16 %v122
  %v169 = vunpack.c.l.b16 %v123
  %v170 = vunpack.c.h.b16 %v123
  %v171 = vunpack.c.l.b16 %v124
  %v172 = vunpack.c.l.b16 %v125
  %v173 = vunpack.c.h.b16 %v125
  %v174 = vunpack.c.l.b16 %v126
  %v175 = vunpack.c.l.b16 %v127
  %v176 = vunpack.c.h.b16 %v127
  %v177 = vunpack.c.l.b16 %v128
  %v178 = vunpack.c.l.b16 %v129
  %v179 = vunpack.c.h.b16 %v129
  %v180 = vunpack.c.l.b16 %v130
  %v181 = vunpack.c.l.b16 %v131
  %v182 = vunpack.c.h.b16 %v131
  %v183 = vunpack.c.l.b16 %v132
  %v184 = vunpack.c.l.b16 %v133
  %v185 = vunpack.c.h.b16 %v133
  %v186 = vunpack.c.l.b16 %v134
  %v187 = vunpack.c.l.b16 %v135
  %v188 = vunpack.c.h.b16 %v135
  %v189 = vunpack.c.l.b16 %v136
  %v190 = vpack.c.b16 %v166, %v163
  %v191 = vpack.c.b16 %v167, %v164
  %v192 = vpack.c.b16 %v168, %v165
  %v193 = vpack.c.b16 %v172, %v169
  %v194 = vpack.c.b16 %v173, %v170
  %v195 = vpack.c.b16 %v174, %v171
  %v196 = vpack.c.b16 %v178, %v175
  %v197 = vpack.c.b16 %v179, %v176
  %v198 = vpack.c.b16 %v180, %v177
  %v199 = vpack.c.b16 %v184, %v181
  %v200 = vpack.c.b16 %v185, %v182
  %v201 = vpack.c.b16 %v186, %v183
  %v202 = vpack.c.b16 %v187, %v187
  %v203 = vpack.c.b16 %v188, %v188
  %v204 = vpack.c.b16 %v189, %v189
  %vm217 = vcmask 588800
  %v219 = vsel %vm217, %v143, 0
  %v222 = vsel %vm217, %v144, 0
  %vm224 = vcmask 1043456
  %v226 = vsel %vm224, %v202, 0
  %v229 = vsel %vm224, %v203, 0
  %v232 = vsel %vm224, %v204, 0
  %234 = vmatprep.subr.bf16.mxu0 %v191
  %235 = vmatpush1.bf16.msra.mxu0 %v190
  %236 = vmatprep.subr.bf16.mxu0 %v194
  %237 = vmatpush1.bf16.msra.mxu0 %v193
  %238 = vmatprep.subr.bf16.mxu0 %v197
  %239 = vmatpush1.bf16.msra.mxu0 %v196
  %240 = vmatprep.subr.bf16.mxu0 %v200
  %241 = vmatpush1.bf16.msra.mxu0 %v199
  %242 = vmatprep.subr.bf16.mxu0 %v229
  %243 = vmatpush1.bf16.msra.mxu0 %v226
  %244 = vmatprep.subr.bf16.mxu0 0
  %245 = vmatpush1.bf16.msra.mxu0 0
  %246 = vmatprep.subr.bf16.mxu0 0
  %247 = vmatpush1.bf16.msra.mxu0 0
  %248 = vmatprep.subr.bf16.mxu0 0
  %249 = vmatpush1.bf16.msra.mxu0 0
  %250 = vmatprep.subr.bf16.mxu0 0
  %251 = vmatpush1.bf16.msra.mxu0 0
  %252 = vmatprep.subr.bf16.mxu0 0
  %253 = vmatpush1.bf16.msra.mxu0 0
  %254 = vmatprep.subr.bf16.mxu0 0
  %255 = vmatpush1.bf16.msra.mxu0 0
  %256 = vmatprep.subr.bf16.mxu0 0
  %257 = vmatpush1.bf16.msra.mxu0 0
  %258 = vmatprep.subr.bf16.mxu0 0
  %259 = vmatpush1.bf16.msra.mxu0 0
  %260 = vmatprep.subr.bf16.mxu0 0
  %261 = vmatpush1.bf16.msra.mxu0 0
  %262 = vmatprep.subr.bf16.mxu0 0
  %263 = vmatpush1.bf16.msra.mxu0 0
  %264 = vmatprep.subr.bf16.mxu0 0
  %265 = vmatpush1.bf16.msra.mxu0 0
  %266 = vmatprep.mubr.bf16.mxu0 0
  %267 = vmatmul.mubr.bf16.gmra.mrb[0].mxu0 %v219
  %v268 = vpop.f32.mrb[0].mxu0
  %v269 = vadd.f32 0.0, %v268
  %v270 = vpop.f32.mrb[0].mxu0
  %v271 = vadd.f32 0.0, %v270
  %v272 = vpop.f32.mrb[0].mxu0
  %v273 = vadd.f32 0.0, %v272
  %v274 = vpop.f32.mrb[0].mxu0
  %v275 = vadd.f32 0.0, %v274
  %276 = vmatprep.mubr.bf16.mxu0 0
  %277 = vmatmul.mubr.bf16.gmra.mrb[0].mxu0 %v222
  %v278 = vpop.f32.mrb[0].mxu0
  %v279 = vadd.f32 0.0, %v278
  %v280 = vpop.f32.mrb[0].mxu0
  %v281 = vadd.f32 0.0, %v280
  %v282 = vpop.f32.mrb[0].mxu0
  %v283 = vpop.f32.mrb[0].mxu0
  %284 = vdwg.mxu0
  %285 = vmatprep.subr.bf16.mxu0 0
  %286 = vmatpush1.bf16.msra.mxu0 %v192
  %287 = vmatprep.subr.bf16.mxu0 0
  %288 = vmatpush1.bf16.msra.mxu0 %v195
  %289 = vmatprep.subr.bf16.mxu0 0
  %290 = vmatpush1.bf16.msra.mxu0 %v198
  %291 = vmatprep.subr.bf16.mxu0 0
  %292 = vmatpush1.bf16.msra.mxu0 %v201
  %293 = vmatprep.subr.bf16.mxu0 0
  %294 = vmatpush1.bf16.msra.mxu0 %v232
  %295 = vmatprep.subr.bf16.mxu0 0
  %296 = vmatpush1.bf16.msra.mxu0 0
  %297 = vmatprep.subr.bf16.mxu0 0
  %298 = vmatpush1.bf16.msra.mxu0 0
  %299 = vmatprep.subr.bf16.mxu0 0
  %300 = vmatpush1.bf16.msra.mxu0 0
  %301 = vmatprep.subr.bf16.mxu0 0
  %302 = vmatpush1.bf16.msra.mxu0 0
  %303 = vmatprep.subr.bf16.mxu0 0
  %304 = vmatpush1.bf16.msra.mxu0 0
  %305 = vmatprep.subr.bf16.mxu0 0
  %306 = vmatpush1.bf16.msra.mxu0 0
  %307 = vmatprep.subr.bf16.mxu0 0
  %308 = vmatpush1.bf16.msra.mxu0 0
  %309 = vmatprep.subr.bf16.mxu0 0
  %310 = vmatpush1.bf16.msra.mxu0 0
  %311 = vmatprep.subr.bf16.mxu0 0
  %312 = vmatpush1.bf16.msra.mxu0 0
  %313 = vmatprep.subr.bf16.mxu0 0
  %314 = vmatpush1.bf16.msra.mxu0 0
  %315 = vmatprep.subr.bf16.mxu0 0
  %316 = vmatpush1.bf16.msra.mxu0 0
  %317 = vmatprep.mubr.bf16.mxu0 0
  %318 = vmatmul.mubr.bf16.gmra.mrb[0].mxu0 %v219
  %v319 = vpop.f32.mrb[0].mxu0
  %v320 = vadd.f32 0.0, %v319
  %v321 = vpop.f32.mrb[0].mxu0
  %v322 = vpop.f32.mrb[0].mxu0
  %v323 = vadd.f32 0.0, %v322
  %v324 = vpop.f32.mrb[0].mxu0
  %325 = vmatprep.mubr.bf16.mxu0 0
  %326 = vmatmul.mubr.bf16.gmra.mrb[0].mxu0 %v222
  %v327 = vpop.f32.mrb[0].mxu0
  %v328 = vadd.f32 0.0, %v327
  %v329 = vpop.f32.mrb[0].mxu0
  %v330 = vpop.f32.mrb[0].mxu0
  %v331 = vpop.f32.mrb[0].mxu0
  %332 = vdwg.mxu0
  %v333 = vld [vmem:[#allocation3] sm:$0xf]
  %v334 = vld [vmem:[#allocation3 + $0x4] sm:$0xf]
  %v335 = vld [vmem:[#allocation3 + $0x8] sm:$0xf]
  %s336 = scalar_lea.vmem %s2, 108
  %v337 = vld [vmem:[%s336] sm:$0xff]
  %v338 = vld [vmem:[%s336 + $0x8] sm:$0xf]
  %v339 = vld [vmem:[%s336 + $0xc] sm:$0xff]
  %v340 = vld [vmem:[%s336 + $0x14] sm:$0xf]
  %v341 = vld [vmem:[%s336 + $0x18] sm:$0xff]
  %v342 = vld [vmem:[%s336 + $0x20] sm:$0xf]
  %v343 = vld [vmem:[%s336 + $0x24] sm:$0xff]
  %v344 = vld [vmem:[%s336 + $0x2c] sm:$0xf]
  %v345 = vld [vmem:[%s336 + $0x30] sm:$0xff]
  %v346 = vld [vmem:[%s336 + $0x38] sm:$0xf]
  %v347 = vld [vmem:[%s336 + $0x3c] sm:$0xff]
  %v348 = vld [vmem:[%s336 + $0x44] sm:$0xf]
  %v349 = vld [vmem:[%s336 + $0x48] sm:$0xff]
  %v350 = vld [vmem:[%s336 + $0x50] sm:$0xf]
  %v351 = vld [vmem:[%s336 + $0x54] sm:$0xff]
  %v352 = vld [vmem:[%s336 + $0x5c] sm:$0xf]
  %v353 = vld [vmem:[%s336 + $0x60] sm:$0xff]
  %v354 = vld [vmem:[%s336 + $0x68] sm:$0xf]
  %v358 = vunpack.c.l.b16 %v333
  %v359 = vunpack.c.l.b16 %v334
  %v360 = vunpack.c.l.b16 %v335
  %v361 = vpack.c.b16 %v359, %v358
  %v362 = vpack.c.b16 %v360, %v360
  %v381 = vunpack.c.l.b16 %v337
  %v382 = vunpack.c.h.b16 %v337
  %v383 = vunpack.c.l.b16 %v338
  %v384 = vunpack.c.l.b16 %v339
  %v385 = vunpack.c.h.b16 %v339
  %v386 = vunpack.c.l.b16 %v340
  %v387 = vunpack.c.l.b16 %v341
  %v388 = vunpack.c.h.b16 %v341
  %v389 = vunpack.c.l.b16 %v342
  %v390 = vunpack.c.l.b16 %v343
  %v391 = vunpack.c.h.b16 %v343
  %v392 = vunpack.c.l.b16 %v344
  %v393 = vunpack.c.l.b16 %v345
  %v394 = vunpack.c.h.b16 %v345
  %v395 = vunpack.c.l.b16 %v346
  %v396 = vunpack.c.l.b16 %v347
  %v397 = vunpack.c.h.b16 %v347
  %v398 = vunpack.c.l.b16 %v348
  %v399 = vunpack.c.l.b16 %v349
  %v400 = vunpack.c.h.b16 %v349
  %v401 = vunpack.c.l.b16 %v350
  %v402 = vunpack.c.l.b16 %v351
  %v403 = vunpack.c.h.b16 %v351
  %v404 = vunpack.c.l.b16 %v352
  %v405 = vunpack.c.l.b16 %v353
  %v406 = vunpack.c.h.b16 %v353
  %v407 = vunpack.c.l.b16 %v354
  %v408 = vpack.c.b16 %v384, %v381
  %v409 = vpack.c.b16 %v385, %v382
  %v410 = vpack.c.b16 %v386, %v383
  %v411 = vpack.c.b16 %v390, %v387
  %v412 = vpack.c.b16 %v391, %v388
  %v413 = vpack.c.b16 %v392, %v389
  %v414 = vpack.c.b16 %v396, %v393
  %v415 = vpack.c.b16 %v397, %v394
  %v416 = vpack.c.b16 %v398, %v395
  %v417 = vpack.c.b16 %v402, %v399
  %v418 = vpack.c.b16 %v403, %v400
  %v419 = vpack.c.b16 %v404, %v401
  %v420 = vpack.c.b16 %v405, %v405
  %v421 = vpack.c.b16 %v406, %v406
  %v422 = vpack.c.b16 %v407, %v407
  %v436 = vsel %vm217, %v361, 0
  %v439 = vsel %vm217, %v362, 0
  %v442 = vsel %vm224, %v420, 0
  %v445 = vsel %vm224, %v421, 0
  %v448 = vsel %vm224, %v422, 0
  %450 = vmatprep.subr.bf16.mxu0 %v409
  %451 = vmatpush1.bf16.msra.mxu0 %v408
  %452 = vmatprep.subr.bf16.mxu0 %v412
  %453 = vmatpush1.bf16.msra.mxu0 %v411
  %454 = vmatprep.subr.bf16.mxu0 %v415
  %455 = vmatpush1.bf16.msra.mxu0 %v414
  %456 = vmatprep.subr.bf16.mxu0 %v418
  %457 = vmatpush1.bf16.msra.mxu0 %v417
  %458 = vmatprep.subr.bf16.mxu0 %v445
  %459 = vmatpush1.bf16.msra.mxu0 %v442
  %460 = vmatprep.subr.bf16.mxu0 0
  %461 = vmatpush1.bf16.msra.mxu0 0
  %462 = vmatprep.subr.bf16.mxu0 0
  %463 = vmatpush1.bf16.msra.mxu0 0
  %464 = vmatprep.subr.bf16.mxu0 0
  %465 = vmatpush1.bf16.msra.mxu0 0
  %466 = vmatprep.subr.bf16.mxu0 0
  %467 = vmatpush1.bf16.msra.mxu0 0
  %468 = vmatprep.subr.bf16.mxu0 0
  %469 = vmatpush1.bf16.msra.mxu0 0
  %470 = vmatprep.subr.bf16.mxu0 0
  %471 = vmatpush1.bf16.msra.mxu0 0
  %472 = vmatprep.subr.bf16.mxu0 0
  %473 = vmatpush1.bf16.msra.mxu0 0
  %474 = vmatprep.subr.bf16.mxu0 0
  %475 = vmatpush1.bf16.msra.mxu0 0
  %476 = vmatprep.subr.bf16.mxu0 0
  %477 = vmatpush1.bf16.msra.mxu0 0
  %478 = vmatprep.subr.bf16.mxu0 0
  %479 = vmatpush1.bf16.msra.mxu0 0
  %480 = vmatprep.subr.bf16.mxu0 0
  %481 = vmatpush1.bf16.msra.mxu0 0
  %482 = vmatprep.mubr.bf16.mxu0 0
  %483 = vmatmul.mubr.bf16.gmra.mrb[0].mxu0 %v436
  %v484 = vpop.f32.mrb[0].mxu0
  %v485 = vadd.f32 0.0, %v484
  %v486 = vpop.f32.mrb[0].mxu0
  %v487 = vadd.f32 0.0, %v486
  %v488 = vpop.f32.mrb[0].mxu0
  %v489 = vadd.f32 0.0, %v488
  %v490 = vpop.f32.mrb[0].mxu0
  %v491 = vadd.f32 0.0, %v490
  %492 = vmatprep.mubr.bf16.mxu0 0
  %493 = vmatmul.mubr.bf16.gmra.mrb[0].mxu0 %v439
  %v494 = vpop.f32.mrb[0].mxu0
  %v495 = vadd.f32 0.0, %v494
  %v496 = vpop.f32.mrb[0].mxu0
  %v497 = vadd.f32 0.0, %v496
  %v498 = vpop.f32.mrb[0].mxu0
  %v499 = vpop.f32.mrb[0].mxu0
  %500 = vdwg.mxu0
  %501 = vmatprep.subr.bf16.mxu0 0
  %502 = vmatpush1.bf16.msra.mxu0 %v410
  %503 = vmatprep.subr.bf16.mxu0 0
  %504 = vmatpush1.bf16.msra.mxu0 %v413
  %505 = vmatprep.subr.bf16.mxu0 0
  %506 = vmatpush1.bf16.msra.mxu0 %v416
  %507 = vmatprep.subr.bf16.mxu0 0
  %508 = vmatpush1.bf16.msra.mxu0 %v419
  %509 = vmatprep.subr.bf16.mxu0 0
  %510 = vmatpush1.bf16.msra.mxu0 %v448
  %511 = vmatprep.subr.bf16.mxu0 0
  %512 = vmatpush1.bf16.msra.mxu0 0
  %513 = vmatprep.subr.bf16.mxu0 0
  %514 = vmatpush1.bf16.msra.mxu0 0
  %515 = vmatprep.subr.bf16.mxu0 0
  %516 = vmatpush1.bf16.msra.mxu0 0
  %517 = vmatprep.subr.bf16.mxu0 0
  %518 = vmatpush1.bf16.msra.mxu0 0
  %519 = vmatprep.subr.bf16.mxu0 0
  %520 = vmatpush1.bf16.msra.mxu0 0
  %521 = vmatprep.subr.bf16.mxu0 0
  %522 = vmatpush1.bf16.msra.mxu0 0
  %523 = vmatprep.subr.bf16.mxu0 0
  %524 = vmatpush1.bf16.msra.mxu0 0
  %525 = vmatprep.subr.bf16.mxu0 0
  %526 = vmatpush1.bf16.msra.mxu0 0
  %527 = vmatprep.subr.bf16.mxu0 0
  %528 = vmatpush1.bf16.msra.mxu0 0
  %529 = vmatprep.subr.bf16.mxu0 0
  %530 = vmatpush1.bf16.msra.mxu0 0
  %531 = vmatprep.subr.bf16.mxu0 0
  %532 = vmatpush1.bf16.msra.mxu0 0
  %533 = vmatprep.mubr.bf16.mxu0 0
  %534 = vmatmul.mubr.bf16.gmra.mrb[0].mxu0 %v436
  %v535 = vpop.f32.mrb[0].mxu0
  %v536 = vadd.f32 0.0, %v535
  %v537 = vpop.f32.mrb[0].mxu0
  %v538 = vpop.f32.mrb[0].mxu0
  %v539 = vadd.f32 0.0, %v538
  %v540 = vpop.f32.mrb[0].mxu0
  %541 = vmatprep.mubr.bf16.mxu0 0
  %542 = vmatmul.mubr.bf16.gmra.mrb[0].mxu0 %v439
  %v543 = vpop.f32.mrb[0].mxu0
  %v544 = vadd.f32 0.0, %v543
  %v545 = vpop.f32.mrb[0].mxu0
  %v546 = vpop.f32.mrb[0].mxu0
  %v547 = vpop.f32.mrb[0].mxu0
  %548 = vdwg.mxu0
  %s549 = scalar_lea.vmem %s2, 216
  %v550 = vld [vmem:[%s549] sm:$0xff]
  %v551 = vld [vmem:[%s549 + $0x8] sm:$0xf]
  %v552 = vld [vmem:[%s549 + $0xc] sm:$0xff]
  %v553 = vld [vmem:[%s549 + $0x14] sm:$0xf]
  %v554 = vld [vmem:[%s549 + $0x18] sm:$0xff]
  %v555 = vld [vmem:[%s549 + $0x20] sm:$0xf]
  %v556 = vld [vmem:[%s549 + $0x24] sm:$0xff]
  %v557 = vld [vmem:[%s549 + $0x2c] sm:$0xf]
  %v558 = vld [vmem:[%s549 + $0x30] sm:$0xff]
  %v559 = vld [vmem:[%s549 + $0x38] sm:$0xf]
  %v560 = vld [vmem:[%s549 + $0x3c] sm:$0xff]
  %v561 = vld [vmem:[%s549 + $0x44] sm:$0xf]
  %v562 = vld [vmem:[%s549 + $0x48] sm:$0xff]
  %v563 = vld [vmem:[%s549 + $0x50] sm:$0xf]
  %v564 = vld [vmem:[%s549 + $0x54] sm:$0xff]
  %v565 = vld [vmem:[%s549 + $0x5c] sm:$0xf]
  %v566 = vld [vmem:[%s549 + $0x60] sm:$0xff]
  %v567 = vld [vmem:[%s549 + $0x68] sm:$0xf]
  %v586 = vunpack.c.l.b16 %v550
  %v587 = vunpack.c.h.b16 %v550
  %v588 = vunpack.c.l.b16 %v551
  %v589 = vunpack.c.l.b16 %v552
  %v590 = vunpack.c.h.b16 %v552
  %v591 = vunpack.c.l.b16 %v553
  %v592 = vunpack.c.l.b16 %v554
  %v593 = vunpack.c.h.b16 %v554
  %v594 = vunpack.c.l.b16 %v555
  %v595 = vunpack.c.l.b16 %v556
  %v596 = vunpack.c.h.b16 %v556
  %v597 = vunpack.c.l.b16 %v557
  %v598 = vunpack.c.l.b16 %v558
  %v599 = vunpack.c.h.b16 %v558
  %v600 = vunpack.c.l.b16 %v559
  %v601 = vunpack.c.l.b16 %v560
  %v602 = vunpack.c.h.b16 %v560
  %v603 = vunpack.c.l.b16 %v561
  %v604 = vunpack.c.l.b16 %v562
  %v605 = vunpack.c.h.b16 %v562
  %v606 = vunpack.c.l.b16 %v563
  %v607 = vunpack.c.l.b16 %v564
  %v608 = vunpack.c.h.b16 %v564
  %v609 = vunpack.c.l.b16 %v565
  %v610 = vunpack.c.l.b16 %v566
  %v611 = vunpack.c.h.b16 %v566
  %v612 = vunpack.c.l.b16 %v567
  %v613 = vpack.c.b16 %v589, %v586
  %v614 = vpack.c.b16 %v590, %v587
  %v615 = vpack.c.b16 %v591, %v588
  %v616 = vpack.c.b16 %v595, %v592
  %v617 = vpack.c.b16 %v596, %v593
  %v618 = vpack.c.b16 %v597, %v594
  %v619 = vpack.c.b16 %v601, %v598
  %v620 = vpack.c.b16 %v602, %v599
  %v621 = vpack.c.b16 %v603, %v600
  %v622 = vpack.c.b16 %v607, %v604
  %v623 = vpack.c.b16 %v608, %v605
  %v624 = vpack.c.b16 %v609, %v606
  %v625 = vpack.c.b16 %v610, %v610
  %v626 = vpack.c.b16 %v611, %v611
  %v627 = vpack.c.b16 %v612, %v612
  %v641 = vsel %vm224, %v625, 0
  %v644 = vsel %vm224, %v626, 0
  %v647 = vsel %vm224, %v627, 0
  %649 = vmatprep.subr.bf16.mxu0 %v614
  %650 = vmatpush1.bf16.msra.mxu0 %v613
  %651 = vmatprep.subr.bf16.mxu0 %v617
  %652 = vmatpush1.bf16.msra.mxu0 %v616
  %653 = vmatprep.subr.bf16.mxu0 %v620
  %654 = vmatpush1.bf16.msra.mxu0 %v619
  %655 = vmatprep.subr.bf16.mxu0 %v623
  %656 = vmatpush1.bf16.msra.mxu0 %v622
  %657 = vmatprep.subr.bf16.mxu0 %v644
  %658 = vmatpush1.bf16.msra.mxu0 %v641
  %659 = vmatprep.subr.bf16.mxu0 0
  %660 = vmatpush1.bf16.msra.mxu0 0
  %661 = vmatprep.subr.bf16.mxu0 0
  %662 = vmatpush1.bf16.msra.mxu0 0
  %663 = vmatprep.subr.bf16.mxu0 0
  %664 = vmatpush1.bf16.msra.mxu0 0
  %665 = vmatprep.subr.bf16.mxu0 0
  %666 = vmatpush1.bf16.msra.mxu0 0
  %667 = vmatprep.subr.bf16.mxu0 0
  %668 = vmatpush1.bf16.msra.mxu0 0
  %669 = vmatprep.subr.bf16.mxu0 0
  %670 = vmatpush1.bf16.msra.mxu0 0
  %671 = vmatprep.subr.bf16.mxu0 0
  %672 = vmatpush1.bf16.msra.mxu0 0
  %673 = vmatprep.subr.bf16.mxu0 0
  %674 = vmatpush1.bf16.msra.mxu0 0
  %675 = vmatprep.subr.bf16.mxu0 0
  %676 = vmatpush1.bf16.msra.mxu0 0
  %677 = vmatprep.subr.bf16.mxu0 0
  %678 = vmatpush1.bf16.msra.mxu0 0
  %679 = vmatprep.subr.bf16.mxu0 0
  %680 = vmatpush1.bf16.msra.mxu0 0
  %681 = vmatprep.mubr.bf16.mxu0 0
  %682 = vmatmul.mubr.bf16.gmra.mrb[0].mxu0 %v219
  %v683 = vpop.f32.mrb[0].mxu0
  %v684 = vadd.f32 0.0, %v683
  %v685 = vpop.f32.mrb[0].mxu0
  %v686 = vadd.f32 0.0, %v685
  %v687 = vpop.f32.mrb[0].mxu0
  %v688 = vadd.f32 0.0, %v687
  %v689 = vpop.f32.mrb[0].mxu0
  %v690 = vadd.f32 0.0, %v689
  %691 = vmatprep.mubr.bf16.mxu0 0
  %692 = vmatmul.mubr.bf16.gmra.mrb[0].mxu0 %v222
  %v693 = vpop.f32.mrb[0].mxu0
  %v694 = vadd.f32 0.0, %v693
  %v695 = vpop.f32.mrb[0].mxu0
  %v696 = vadd.f32 0.0, %v695
  %v697 = vpop.f32.mrb[0].mxu0
  %v698 = vpop.f32.mrb[0].mxu0
  %699 = vdwg.mxu0
  %700 = vmatprep.subr.bf16.mxu0 0
  %701 = vmatpush1.bf16.msra.mxu0 %v615
  %702 = vmatprep.subr.bf16.mxu0 0
  %703 = vmatpush1.bf16.msra.mxu0 %v618
  %704 = vmatprep.subr.bf16.mxu0 0
  %705 = vmatpush1.bf16.msra.mxu0 %v621
  %706 = vmatprep.subr.bf16.mxu0 0
  %707 = vmatpush1.bf16.msra.mxu0 %v624
  %708 = vmatprep.subr.bf16.mxu0 0
  %709 = vmatpush1.bf16.msra.mxu0 %v647
  %710 = vmatprep.subr.bf16.mxu0 0
  %711 = vmatpush1.bf16.msra.mxu0 0
  %712 = vmatprep.subr.bf16.mxu0 0
  %713 = vmatpush1.bf16.msra.mxu0 0
  %714 = vmatprep.subr.bf16.mxu0 0
  %715 = vmatpush1.bf16.msra.mxu0 0
  %716 = vmatprep.subr.bf16.mxu0 0
  %717 = vmatpush1.bf16.msra.mxu0 0
  %718 = vmatprep.subr.bf16.mxu0 0
  %719 = vmatpush1.bf16.msra.mxu0 0
  %720 = vmatprep.subr.bf16.mxu0 0
  %721 = vmatpush1.bf16.msra.mxu0 0
  %722 = vmatprep.subr.bf16.mxu0 0
  %723 = vmatpush1.bf16.msra.mxu0 0
  %724 = vmatprep.subr.bf16.mxu0 0
  %725 = vmatpush1.bf16.msra.mxu0 0
  %726 = vmatprep.subr.bf16.mxu0 0
  %727 = vmatpush1.bf16.msra.mxu0 0
  %728 = vmatprep.subr.bf16.mxu0 0
  %729 = vmatpush1.bf16.msra.mxu0 0
  %730 = vmatprep.subr.bf16.mxu0 0
  %731 = vmatpush1.bf16.msra.mxu0 0
  %732 = vmatprep.mubr.bf16.mxu0 0
  %733 = vmatmul.mubr.bf16.gmra.mrb[0].mxu0 %v219
  %v734 = vpop.f32.mrb[0].mxu0
  %v735 = vadd.f32 0.0, %v734
  %v736 = vpop.f32.mrb[0].mxu0
  %v737 = vpop.f32.mrb[0].mxu0
  %v738 = vadd.f32 0.0, %v737
  %v739 = vpop.f32.mrb[0].mxu0
  %740 = vmatprep.mubr.bf16.mxu0 0
  %741 = vmatmul.mubr.bf16.gmra.mrb[0].mxu0 %v222
  %v742 = vpop.f32.mrb[0].mxu0
  %v743 = vadd.f32 0.0, %v742
  %v744 = vpop.f32.mrb[0].mxu0
  %v745 = vpop.f32.mrb[0].mxu0
  %v746 = vpop.f32.mrb[0].mxu0
  %747 = vdwg.mxu0
  %v748 = vadd.f32 %v269, %v485
  %v749 = vadd.f32 %v271, %v487
  %v750 = vadd.f32 %v320, %v536
  %v751 = vadd.f32 %v273, %v489
  %v752 = vadd.f32 %v275, %v491
  %v753 = vadd.f32 %v323, %v539
  %vm760 = vcmask 1046528
  %v761 = vrot.slane %v684, 1
  %v762 = vrot.slane %v688, 1
  %v763 = vsel %vm760, %v761, %v762
  %v764 = vrot.slane %v686, 1
  %v765 = vrot.slane %v690, 1
  %v766 = vsel %vm760, %v764, %v765
  %v767 = vrot.slane %v735, 1
  %v768 = vrot.slane %v738, 1
  %v769 = vsel %vm760, %v767, %v768
  %v776 = vadd.f32 %v748, %v763
  %v777 = vadd.f32 %v749, %v766
  %v778 = vadd.f32 %v750, %v769
  %v779 = vadd.f32 %v751, %v762
  %v780 = vadd.f32 %v752, %v765
  %v781 = vadd.f32 %v753, %v768
  %v782 = vld [vmem:[%s3] sm:$0x7]
  %v784 = vlaneseq
  %v785 = vshrl.u32 %v784, 7
  %v786 = vsub.s32 0, %v785
  %v787 = vrot.slane %v782, %v786
  %v788 = vlaneseq
  %v789 = vshrl.u32 %v788, 7
  %v790 = vsub.s32 1, %v789
  %v791 = vrot.slane %v782, %v790
  %v792 = vlaneseq
  %v793 = vshrl.u32 %v792, 7
  %v794 = vsub.s32 2, %v793
  %v795 = vrot.slane %v782, %v794
  %v799 = vadd.f32 %v776, %v787
  %v800 = vadd.f32 %v777, %v791
  %v801 = vadd.f32 %v778, %v795
  %v802 = vadd.f32 %v779, %v787
  %v803 = vadd.f32 %v780, %v791
  %v804 = vadd.f32 %v781, %v795
  %v805 = vmax.f32 %v799, 0.0
  %v806 = vmax.f32 %v800, 0.0
  %v807 = vmax.f32 %v801, 0.0
  %v808 = vmax.f32 %v802, 0.0
  %v809 = vmax.f32 %v803, 0.0
  %v810 = vmax.f32 %v804, 0.0
  %v811 = vpack.c.bf16 %v808, %v805
  %v812 = vpack.c.bf16 %v809, %v806
  %v813 = vpack.c.bf16 %v810, %v807
  %v817 = vunpack.c.l.b16 %v811
  %v818 = vunpack.c.l.b16 %v812
  %v819 = vunpack.c.l.b16 %v813
  %v820 = vunpack.c.h.b16 %v811
  %v821 = vunpack.c.h.b16 %v812
  %v822 = vunpack.c.h.b16 %v813
  %v823 = vpack.c.b16 %v818, %v817
  %v824 = vpack.c.b16 %v819, %v819
  %v825 = vpack.c.b16 %v821, %v820
  %v826 = vpack.c.b16 %v822, %v822
  %831 = vst [vmem:[#allocation4] sm:$0xff] %v823
  %832 = vst [vmem:[#allocation4 + $0x8] sm:$0xf] %v824
  %vm833 = vsmask.f32 1280
  %vm834 = vmand %vm83, %vm833
  %vm835 = vsmask.f32 5376
  %vm836 = vmand %vm84, %vm835
  %vm837 = vmor %vm836, %vm834
  %v838 = vld [vmem:[#allocation4 + $0xc] sm:$0x33]
  %v839 = vsel %vm837, %v825, %v838
  %840 = vst [vmem:[#allocation4 + $0xc] sm:$0x33] %v839
  %v841 = vld [vmem:[#allocation4 + $0x14] sm:$0x3]
  %v842 = vsel %vm834, %v826, %v841
  %843 = vst [vmem:[#allocation4 + $0x14] sm:$0x3] %v842
  %v844 = vadd.f32 %v279, %v495
  %v845 = vadd.f32 %v281, %v497
  %v846 = vadd.f32 %v328, %v544
  %v850 = vrot.slane %v694, 1
  %v851 = vsel %vm760, %v762, %v850
  %v852 = vrot.slane %v696, 1
  %v853 = vsel %vm760, %v765, %v852
  %v854 = vrot.slane %v743, 1
  %v855 = vsel %vm760, %v768, %v854
  %v862 = vadd.f32 %v751, %v851
  %v863 = vadd.f32 %v752, %v853
  %v864 = vadd.f32 %v753, %v855
  %v865 = vadd.f32 %v844, %v850
  %v866 = vadd.f32 %v845, %v852
  %v867 = vadd.f32 %v846, %v854
  %v868 = vld [vmem:[%s3] sm:$0x7]
  %v870 = vlaneseq
  %v871 = vshrl.u32 %v870, 7
  %v872 = vsub.s32 0, %v871
  %v873 = vrot.slane %v868, %v872
  %v874 = vlaneseq
  %v875 = vshrl.u32 %v874, 7
  %v876 = vsub.s32 1, %v875
  %v877 = vrot.slane %v868, %v876
  %v878 = vlaneseq
  %v879 = vshrl.u32 %v878, 7
  %v880 = vsub.s32 2, %v879
  %v881 = vrot.slane %v868, %v880
  %v885 = vadd.f32 %v862, %v873
  %v886 = vadd.f32 %v863, %v877
  %v887 = vadd.f32 %v864, %v881
  %v888 = vadd.f32 %v865, %v873
  %v889 = vadd.f32 %v866, %v877
  %v890 = vadd.f32 %v867, %v881
  %v891 = vmax.f32 %v885, 0.0
  %v892 = vmax.f32 %v886, 0.0
  %v893 = vmax.f32 %v887, 0.0
  %v894 = vmax.f32 %v888, 0.0
  %v895 = vmax.f32 %v889, 0.0
  %v896 = vmax.f32 %v890, 0.0
  %v897 = vpack.c.bf16 %v894, %v891
  %v898 = vpack.c.bf16 %v895, %v892
  %v899 = vpack.c.bf16 %v896, %v893
  %v903 = vunpack.c.l.b16 %v897
  %v904 = vunpack.c.l.b16 %v898
  %v905 = vunpack.c.l.b16 %v899
  %v906 = vunpack.c.h.b16 %v897
  %v907 = vunpack.c.h.b16 %v898
  %v908 = vunpack.c.h.b16 %v899
  %v909 = vpack.c.b16 %v904, %v903
  %v910 = vpack.c.b16 %v905, %v905
  %v911 = vpack.c.b16 %v907, %v906
  %v912 = vpack.c.b16 %v908, %v908
  %vm913 = vsmask.f32 3328
  %vm914 = vsmask.f32 7440
  %vm915 = vmor %vm913, %vm914
  %v917 = vshrl.u32 %v909, 16
  %v919 = vrot.slane %v917, 4
  %v920 = vshll.u32 %v909, 16
  %v922 = vrot.slane %v920, 5
  %v923 = vor.u32 %v919, %v922
  %v924 = vrot.slane %v923, 4
  %v926 = vshll.u32 %v911, 16
  %v928 = vrot.slane %v926, 5
  %v929 = vsel %vm915, %v924, %v928
  %v931 = vshrl.u32 %v910, 16
  %v933 = vrot.slane %v931, 4
  %v934 = vshll.u32 %v910, 16
  %v936 = vrot.slane %v934, 5
  %v937 = vor.u32 %v933, %v936
  %v938 = vrot.slane %v937, 4
  %v940 = vshll.u32 %v912, 16
  %v942 = vrot.slane %v940, 5
  %v943 = vsel %vm915, %v938, %v942
  %v944 = vshrl.u32 %v911, 16
  %v946 = vrot.slane %v944, 4
  %v947 = vor.u32 %v946, %v928
  %v948 = vrot.slane %v947, 4
  %v949 = vshrl.u32 %v912, 16
  %v951 = vrot.slane %v949, 4
  %v952 = vor.u32 %v951, %v942
  %v953 = vrot.slane %v952, 4
  %vm958 = vcmask 1043457
  %vm959 = vsmask.f32 7942
  %vm960 = vmand %vm958, %vm959
  %vm961 = vcmask 1047557
  %vm962 = vsmask.f32 7958
  %vm963 = vmand %vm961, %vm962
  %vm964 = vmor %vm963, %vm960
  %v965 = vld [vmem:[#allocation4 + $0xc] sm:$0xee]
  %v966 = vsel %vm964, %v929, %v965
  %967 = vst [vmem:[#allocation4 + $0xc] sm:$0xee] %v966
  %v968 = vld [vmem:[#allocation4 + $0x14] sm:$0xe]
  %v969 = vsel %vm960, %v943, %v968
  %970 = vst [vmem:[#allocation4 + $0x14] sm:$0xe] %v969
  %971 = vst [vmem:[#allocation4 + $0x18] sm:$0x77] %v948
  %972 = vst [vmem:[#allocation4 + $0x20] sm:$0x7] %v953
  %v973 = vld [vmem:[#allocation4] sm:$0xff]
  %v974 = vld [vmem:[#allocation4 + $0x8] sm:$0xf]
  %v975 = vld [vmem:[#allocation4 + $0xc] sm:$0xff]
  %v976 = vld [vmem:[#allocation4 + $0x14] sm:$0xf]
  %v977 = vld [vmem:[#allocation4 + $0x18] sm:$0x77]
  %v978 = vld [vmem:[#allocation4 + $0x20] sm:$0x7]
  %v979 = vld [vmem:[%s4] sm:$0xff]
  %v980 = vld [vmem:[%s4 + $0x8] sm:$0xf]
  %v981 = vld [vmem:[%s4 + $0xc] sm:$0xff]
  %v982 = vld [vmem:[%s4 + $0x14] sm:$0xf]
  %v983 = vld [vmem:[%s4 + $0x18] sm:$0xff]
  %v984 = vld [vmem:[%s4 + $0x20] sm:$0xf]
  %v985 = vld [vmem:[%s4 + $0x24] sm:$0xff]
  %v986 = vld [vmem:[%s4 + $0x2c] sm:$0xf]
  %v987 = vld [vmem:[%s4 + $0x30] sm:$0xff]
  %v988 = vld [vmem:[%s4 + $0x38] sm:$0xf]
  %v989 = vld [vmem:[%s4 + $0x3c] sm:$0xff]
  %v990 = vld [vmem:[%s4 + $0x44] sm:$0xf]
  %v991 = vld [vmem:[%s4 + $0x48] sm:$0xff]
  %v992 = vld [vmem:[%s4 + $0x50] sm:$0xf]
  %v993 = vld [vmem:[%s4 + $0x54] sm:$0xff]
  %v994 = vld [vmem:[%s4 + $0x5c] sm:$0xf]
  %v995 = vld [vmem:[%s4 + $0x60] sm:$0xff]
  %v996 = vld [vmem:[%s4 + $0x68] sm:$0xf]
  %v997 = vld [vmem:[%s4 + $0x6c] sm:$0xff]
  %v998 = vld [vmem:[%s4 + $0x74] sm:$0xf]
  %v999 = vld [vmem:[%s4 + $0x78] sm:$0xff]
  %v1000 = vld [vmem:[%s4 + $0x80] sm:$0xf]
  %v1001 = vld [vmem:[%s4 + $0x84] sm:$0xff]
  %v1002 = vld [vmem:[%s4 + $0x8c] sm:$0xf]
  %v1003 = vld [vmem:[%s4 + $0x90] sm:$0xff]
  %v1004 = vld [vmem:[%s4 + $0x98] sm:$0xf]
  %v1005 = vld [vmem:[%s4 + $0x9c] sm:$0xff]
  %v1006 = vld [vmem:[%s4 + $0xa4] sm:$0xf]
  %v1007 = vld [vmem:[%s4 + $0xa8] sm:$0xff]
  %v1008 = vld [vmem:[%s4 + $0xb0] sm:$0xf]
  %v1009 = vld [vmem:[%s4 + $0xb4] sm:$0xff]
  %v1010 = vld [vmem:[%s4 + $0xbc] sm:$0xf]
  %v1011 = vld [vmem:[%s4 + $0xc0] sm:$0xff]
  %v1012 = vld [vmem:[%s4 + $0xc8] sm:$0xf]
  %v1013 = vld [vmem:[%s4 + $0xcc] sm:$0xff]
  %v1014 = vld [vmem:[%s4 + $0xd4] sm:$0xf]
  %v1015 = vld [vmem:[%s4 + $0xd8] sm:$0xff]
  %v1016 = vld [vmem:[%s4 + $0xe0] sm:$0xf]
  %v1017 = vld [vmem:[%s4 + $0xe4] sm:$0xff]
  %v1018 = vld [vmem:[%s4 + $0xec] sm:$0xf]
  %v1019 = vld [vmem:[%s4 + $0xf0] sm:$0xff]
  %v1020 = vld [vmem:[%s4 + $0xf8] sm:$0xf]
  %v1021 = vld [vmem:[%s4 + $0xfc] sm:$0xff]
  %v1022 = vld [vmem:[%s4 + $0x104] sm:$0xf]
  %v1023 = vld [vmem:[%s4 + $0x108] sm:$0xff]
  %v1024 = vld [vmem:[%s4 + $0x110] sm:$0xf]
  %v1025 = vld [vmem:[%s4 + $0x114] sm:$0xff]
  %v1026 = vld [vmem:[%s4 + $0x11c] sm:$0xf]
  %v1027 = vld [vmem:[%s4 + $0x120] sm:$0xff]
  %v1028 = vld [vmem:[%s4 + $0x128] sm:$0xf]
  %v1029 = vld [vmem:[%s4 + $0x12c] sm:$0xff]
  %v1030 = vld [vmem:[%s4 + $0x134] sm:$0xf]
  %v1031 = vld [vmem:[%s4 + $0x138] sm:$0xff]
  %v1032 = vld [vmem:[%s4 + $0x140] sm:$0xf]
  %v1033 = vld [vmem:[%s4 + $0x144] sm:$0xff]
  %v1034 = vld [vmem:[%s4 + $0x14c] sm:$0xf]
  %v1035 = vld [vmem:[%s4 + $0x150] sm:$0xff]
  %v1036 = vld [vmem:[%s4 + $0x158] sm:$0xf]
  %v1037 = vld [vmem:[%s4 + $0x15c] sm:$0xff]
  %v1038 = vld [vmem:[%s4 + $0x164] sm:$0xf]
  %v1039 = vld [vmem:[%s4 + $0x168] sm:$0xff]
  %v1040 = vld [vmem:[%s4 + $0x170] sm:$0xf]
  %v1041 = vld [vmem:[%s4 + $0x174] sm:$0xff]
  %v1042 = vld [vmem:[%s4 + $0x17c] sm:$0xf]
  %v1043 = vld [vmem:[%s4 + $0x180] sm:$0xff]
  %v1044 = vld [vmem:[%s4 + $0x188] sm:$0xf]
  %v1045 = vld [vmem:[%s4 + $0x18c] sm:$0xff]
  %v1046 = vld [vmem:[%s4 + $0x194] sm:$0xf]
  %v1047 = vld [vmem:[%s4 + $0x198] sm:$0xff]
  %v1048 = vld [vmem:[%s4 + $0x1a0] sm:$0xf]
  %v1049 = vld [vmem:[%s4 + $0x1a4] sm:$0xff]
  %v1050 = vld [vmem:[%s4 + $0x1ac] sm:$0xf]
  %v1051 = vld [vmem:[%s4 + $0x1b0] sm:$0xff]
  %v1052 = vld [vmem:[%s4 + $0x1b8] sm:$0xf]
  %v1053 = vld [vmem:[%s4 + $0x1bc] sm:$0xff]
  %v1054 = vld [vmem:[%s4 + $0x1c4] sm:$0xf]
  %v1055 = vld [vmem:[%s4 + $0x1c8] sm:$0xff]
  %v1056 = vld [vmem:[%s4 + $0x1d0] sm:$0xf]
  %v1057 = vld [vmem:[%s4 + $0x1d4] sm:$0xff]
  %v1058 = vld [vmem:[%s4 + $0x1dc] sm:$0xf]
  %v1059 = vld [vmem:[%s4 + $0x1e0] sm:$0xff]
  %v1060 = vld [vmem:[%s4 + $0x1e8] sm:$0xf]
  %v1061 = vld [vmem:[%s4 + $0x1ec] sm:$0xff]
  %v1062 = vld [vmem:[%s4 + $0x1f4] sm:$0xf]
  %v1063 = vld [vmem:[%s4 + $0x1f8] sm:$0xff]
  %v1064 = vld [vmem:[%s4 + $0x200] sm:$0xf]
  %v1065 = vld [vmem:[%s4 + $0x204] sm:$0xff]
  %v1066 = vld [vmem:[%s4 + $0x20c] sm:$0xf]
  %v1067 = vld [vmem:[%s4 + $0x210] sm:$0xff]
  %v1068 = vld [vmem:[%s4 + $0x218] sm:$0xf]
  %v1069 = vld [vmem:[%s4 + $0x21c] sm:$0xff]
  %v1070 = vld [vmem:[%s4 + $0x224] sm:$0xf]
  %v1071 = vld [vmem:[%s4 + $0x228] sm:$0xff]
  %v1072 = vld [vmem:[%s4 + $0x230] sm:$0xf]
  %v1073 = vld [vmem:[%s4 + $0x234] sm:$0xff]
  %v1074 = vld [vmem:[%s4 + $0x23c] sm:$0xf]
  %v1081 = vunpack.c.l.b16 %v973
  %v1082 = vunpack.c.h.b16 %v973
  %v1083 = vunpack.c.l.b16 %v974
  %v1084 = vunpack.c.l.b16 %v975
  %v1085 = vunpack.c.h.b16 %v975
  %v1086 = vunpack.c.l.b16 %v976
  %v1087 = vunpack.c.l.b16 %v977
  %v1088 = vunpack.c.h.b16 %v977
  %v1089 = vunpack.c.l.b16 %v978
  %v1090 = vpack.c.b16 %v1084, %v1081
  %v1091 = vpack.c.b16 %v1085, %v1082
  %v1092 = vpack.c.b16 %v1086, %v1083
  %v1093 = vpack.c.b16 %v1087, %v1087
  %v1094 = vpack.c.b16 %v1088, %v1088
  %v1095 = vpack.c.b16 %v1089, %v1089
  %v1198 = vunpack.c.l.b16 %v979
  %v1199 = vunpack.c.h.b16 %v979
  %v1200 = vunpack.c.l.b16 %v980
  %v1201 = vunpack.c.l.b16 %v981
  %v1202 = vunpack.c.h.b16 %v981
  %v1203 = vunpack.c.l.b16 %v982
  %v1204 = vunpack.c.l.b16 %v983
  %v1205 = vunpack.c.h.b16 %v983
  %v1206 = vunpack.c.l.b16 %v984
  %v1207 = vunpack.c.l.b16 %v985
  %v1208 = vunpack.c.h.b16 %v985
  %v1209 = vunpack.c.l.b16 %v986
  %v1210 = vunpack.c.l.b16 %v987
  %v1211 = vunpack.c.h.b16 %v987
  %v1212 = vunpack.c.l.b16 %v988
  %v1213 = vunpack.c.l.b16 %v989
  %v1214 = vunpack.c.h.b16 %v989
  %v1215 = vunpack.c.l.b16 %v990
  %v1216 = vunpack.c.l.b16 %v991
  %v1217 = vunpack.c.h.b16 %v991
  %v1218 = vunpack.c.l.b16 %v992
  %v1219 = vunpack.c.l.b16 %v993
  %v1220 = vunpack.c.h.b16 %v993
  %v1221 = vunpack.c.l.b16 %v994
  %v1222 = vunpack.c.l.b16 %v995
  %v1223 = vunpack.c.h.b16 %v995
  %v1224 = vunpack.c.l.b16 %v996
  %v1225 = vunpack.c.l.b16 %v997
  %v1226 = vunpack.c.h.b16 %v997
  %v1227 = vunpack.c.l.b16 %v998
  %v1228 = vunpack.c.l.b16 %v999
  %v1229 = vunpack.c.h.b16 %v999
  %v1230 = vunpack.c.l.b16 %v1000
  %v1231 = vunpack.c.l.b16 %v1001
  %v1232 = vunpack.c.h.b16 %v1001
  %v1233 = vunpack.c.l.b16 %v1002
  %v1234 = vunpack.c.l.b16 %v1003
  %v1235 = vunpack.c.h.b16 %v1003
  %v1236 = vunpack.c.l.b16 %v1004
  %v1237 = vunpack.c.l.b16 %v1005
  %v1238 = vunpack.c.h.b16 %v1005
  %v1239 = vunpack.c.l.b16 %v1006
  %v1240 = vunpack.c.l.b16 %v1007
  %v1241 = vunpack.c.h.b16 %v1007
  %v1242 = vunpack.c.l.b16 %v1008
  %v1243 = vunpack.c.l.b16 %v1009
  %v1244 = vunpack.c.h.b16 %v1009
  %v1245 = vunpack.c.l.b16 %v1010
  %v1246 = vunpack.c.l.b16 %v1011
  %v1247 = vunpack.c.h.b16 %v1011
  %v1248 = vunpack.c.l.b16 %v1012
  %v1249 = vunpack.c.l.b16 %v1013
  %v1250 = vunpack.c.h.b16 %v1013
  %v1251 = vunpack.c.l.b16 %v1014
  %v1252 = vunpack.c.l.b16 %v1015
  %v1253 = vunpack.c.h.b16 %v1015
  %v1254 = vunpack.c.l.b16 %v1016
  %v1255 = vunpack.c.l.b16 %v1017
  %v1256 = vunpack.c.h.b16 %v1017
  %v1257 = vunpack.c.l.b16 %v1018
  %v1258 = vunpack.c.l.b16 %v1019
  %v1259 = vunpack.c.h.b16 %v1019
  %v1260 = vunpack.c.l.b16 %v1020
  %v1261 = vunpack.c.l.b16 %v1021
  %v1262 = vunpack.c.h.b16 %v1021
  %v1263 = vunpack.c.l.b16 %v1022
  %v1264 = vunpack.c.l.b16 %v1023
  %v1265 = vunpack.c.h.b16 %v1023
  %v1266 = vunpack.c.l.b16 %v1024
  %v1267 = vunpack.c.l.b16 %v1025
  %v1268 = vunpack.c.h.b16 %v1025
  %v1269 = vunpack.c.l.b16 %v1026
  %v1270 = vunpack.c.l.b16 %v1027
  %v1271 = vunpack.c.h.b16 %v1027
  %v1272 = vunpack.c.l.b16 %v1028
  %v1273 = vunpack.c.l.b16 %v1029
  %v1274 = vunpack.c.h.b16 %v1029
  %v1275 = vunpack.c.l.b16 %v1030
  %v1276 = vunpack.c.l.b16 %v1031
  %v1277 = vunpack.c.h.b16 %v1031
  %v1278 = vunpack.c.l.b16 %v1032
  %v1279 = vunpack.c.l.b16 %v1033
  %v1280 = vunpack.c.h.b16 %v1033
  %v1281 = vunpack.c.l.b16 %v1034
  %v1282 = vunpack.c.l.b16 %v1035
  %v1283 = vunpack.c.h.b16 %v1035
  %v1284 = vunpack.c.l.b16 %v1036
  %v1285 = vunpack.c.l.b16 %v1037
  %v1286 = vunpack.c.h.b16 %v1037
  %v1287 = vunpack.c.l.b16 %v1038
  %v1288 = vunpack.c.l.b16 %v1039
  %v1289 = vunpack.c.h.b16 %v1039
  %v1290 = vunpack.c.l.b16 %v1040
  %v1291 = vunpack.c.l.b16 %v1041
  %v1292 = vunpack.c.h.b16 %v1041
  %v1293 = vunpack.c.l.b16 %v1042
  %v1294 = vunpack.c.l.b16 %v1043
  %v1295 = vunpack.c.h.b16 %v1043
  %v1296 = vunpack.c.l.b16 %v1044
  %v1297 = vunpack.c.l.b16 %v1045
  %v1298 = vunpack.c.h.b16 %v1045
  %v1299 = vunpack.c.l.b16 %v1046
  %v1300 = vunpack.c.l.b16 %v1047
  %v1301 = vunpack.c.h.b16 %v1047
  %v1302 = vunpack.c.l.b16 %v1048
  %v1303 = vunpack.c.l.b16 %v1049
  %v1304 = vunpack.c.h.b16 %v1049
  %v1305 = vunpack.c.l.b16 %v1050
  %v1306 = vunpack.c.l.b16 %v1051
  %v1307 = vunpack.c.h.b16 %v1051
  %v1308 = vunpack.c.l.b16 %v1052
  %v1309 = vunpack.c.l.b16 %v1053
  %v1310 = vunpack.c.h.b16 %v1053
  %v1311 = vunpack.c.l.b16 %v1054
  %v1312 = vunpack.c.l.b16 %v1055
  %v1313 = vunpack.c.h.b16 %v1055
  %v1314 = vunpack.c.l.b16 %v1056
  %v1315 = vunpack.c.l.b16 %v1057
  %v1316 = vunpack.c.h.b16 %v1057
  %v1317 = vunpack.c.l.b16 %v1058
  %v1318 = vunpack.c.l.b16 %v1059
  %v1319 = vunpack.c.h.b16 %v1059
  %v1320 = vunpack.c.l.b16 %v1060
  %v1321 = vunpack.c.l.b16 %v1061
  %v1322 = vunpack.c.h.b16 %v1061
  %v1323 = vunpack.c.l.b16 %v1062
  %v1324 = vunpack.c.l.b16 %v1063
  %v1325 = vunpack.c.h.b16 %v1063
  %v1326 = vunpack.c.l.b16 %v1064
  %v1327 = vunpack.c.l.b16 %v1065
  %v1328 = vunpack.c.h.b16 %v1065
  %v1329 = vunpack.c.l.b16 %v1066
  %v1330 = vunpack.c.l.b16 %v1067
  %v1331 = vunpack.c.h.b16 %v1067
  %v1332 = vunpack.c.l.b16 %v1068
  %v1333 = vunpack.c.l.b16 %v1069
  %v1334 = vunpack.c.h.b16 %v1069
  %v1335 = vunpack.c.l.b16 %v1070
  %v1336 = vunpack.c.l.b16 %v1071
  %v1337 = vunpack.c.h.b16 %v1071
  %v1338 = vunpack.c.l.b16 %v1072
  %v1339 = vunpack.c.l.b16 %v1073
  %v1340 = vunpack.c.h.b16 %v1073
  %v1341 = vunpack.c.l.b16 %v1074
  %v1342 = vpack.c.b16 %v1201, %v1198
  %v1343 = vpack.c.b16 %v1202, %v1199
  %v1344 = vpack.c.b16 %v1203, %v1200
  %v1345 = vpack.c.b16 %v1207, %v1204
  %v1346 = vpack.c.b16 %v1208, %v1205
  %v1347 = vpack.c.b16 %v1209, %v1206
  %v1348 = vpack.c.b16 %v1213, %v1210
  %v1349 = vpack.c.b16 %v1214, %v1211
  %v1350 = vpack.c.b16 %v1215, %v1212
  %v1351 = vpack.c.b16 %v1219, %v1216
  %v1352 = vpack.c.b16 %v1220, %v1217
  %v1353 = vpack.c.b16 %v1221, %v1218
  %v1354 = vpack.c.b16 %v1225, %v1222
  %v1355 = vpack.c.b16 %v1226, %v1223
  %v1356 = vpack.c.b16 %v1227, %v1224
  %v1357 = vpack.c.b16 %v1231, %v1228
  %v1358 = vpack.c.b16 %v1232, %v1229
  %v1359 = vpack.c.b16 %v1233, %v1230
  %v1360 = vpack.c.b16 %v1237, %v1234
  %v1361 = vpack.c.b16 %v1238, %v1235
  %v1362 = vpack.c.b16 %v1239, %v1236
  %v1363 = vpack.c.b16 %v1243, %v1240
  %v1364 = vpack.c.b16 %v1244, %v1241
  %v1365 = vpack.c.b16 %v1245, %v1242
  %v1366 = vpack.c.b16 %v1249, %v1246
  %v1367 = vpack.c.b16 %v1250, %v1247
  %v1368 = vpack.c.b16 %v1251, %v1248
  %v1369 = vpack.c.b16 %v1255, %v1252
  %v1370 = vpack.c.b16 %v1256, %v1253
  %v1371 = vpack.c.b16 %v1257, %v1254
  %v1372 = vpack.c.b16 %v1261, %v1258
  %v1373 = vpack.c.b16 %v1262, %v1259
  %v1374 = vpack.c.b16 %v1263, %v1260
  %v1375 = vpack.c.b16 %v1267, %v1264
  %v1376 = vpack.c.b16 %v1268, %v1265
  %v1377 = vpack.c.b16 %v1269, %v1266
  %v1378 = vpack.c.b16 %v1273, %v1270
  %v1379 = vpack.c.b16 %v1274, %v1271
  %v1380 = vpack.c.b16 %v1275, %v1272
  %v1381 = vpack.c.b16 %v1279, %v1276
  %v1382 = vpack.c.b16 %v1280, %v1277
  %v1383 = vpack.c.b16 %v1281, %v1278
  %v1384 = vpack.c.b16 %v1285, %v1282
  %v1385 = vpack.c.b16 %v1286, %v1283
  %v1386 = vpack.c.b16 %v1287, %v1284
  %v1387 = vpack.c.b16 %v1291, %v1288
  %v1388 = vpack.c.b16 %v1292, %v1289
  %v1389 = vpack.c.b16 %v1293, %v1290
  %v1390 = vpack.c.b16 %v1297, %v1294
  %v1391 = vpack.c.b16 %v1298, %v1295
  %v1392 = vpack.c.b16 %v1299, %v1296
  %v1393 = vpack.c.b16 %v1303, %v1300
  %v1394 = vpack.c.b16 %v1304, %v1301
  %v1395 = vpack.c.b16 %v1305, %v1302
  %v1396 = vpack.c.b16 %v1309, %v1306
  %v1397 = vpack.c.b16 %v1310, %v1307
  %v1398 = vpack.c.b16 %v1311, %v1308
  %v1399 = vpack.c.b16 %v1315, %v1312
  %v1400 = vpack.c.b16 %v1316, %v1313
  %v1401 = vpack.c.b16 %v1317, %v1314
  %v1402 = vpack.c.b16 %v1321, %v1318
  %v1403 = vpack.c.b16 %v1322, %v1319
  %v1404 = vpack.c.b16 %v1323, %v1320
  %v1405 = vpack.c.b16 %v1327, %v1324
  %v1406 = vpack.c.b16 %v1328, %v1325
  %v1407 = vpack.c.b16 %v1329, %v1326
  %v1408 = vpack.c.b16 %v1333, %v1330
  %v1409 = vpack.c.b16 %v1334, %v1331
  %v1410 = vpack.c.b16 %v1335, %v1332
  %v1411 = vpack.c.b16 %v1339, %v1336
  %v1412 = vpack.c.b16 %v1340, %v1337
  %v1413 = vpack.c.b16 %v1341, %v1338
  %1486 = vmatprep.subr.bf16.mxu0 %v1343
  %1487 = vmatpush1.bf16.msra.mxu0 %v1342
  %1488 = vmatprep.subr.bf16.mxu0 %v1346
  %1489 = vmatpush1.bf16.msra.mxu0 %v1345
  %1490 = vmatprep.subr.bf16.mxu0 %v1349
  %1491 = vmatpush1.bf16.msra.mxu0 %v1348
  %1492 = vmatprep.subr.bf16.mxu0 %v1352
  %1493 = vmatpush1.bf16.msra.mxu0 %v1351
  %1494 = vmatprep.subr.bf16.mxu0 %v1355
  %1495 = vmatpush1.bf16.msra.mxu0 %v1354
  %1496 = vmatprep.subr.bf16.mxu0 %v1358
  %1497 = vmatpush1.bf16.msra.mxu0 %v1357
  %1498 = vmatprep.subr.bf16.mxu0 %v1361
  %1499 = vmatpush1.bf16.msra.mxu0 %v1360
  %1500 = vmatprep.subr.bf16.mxu0 %v1364
  %1501 = vmatpush1.bf16.msra.mxu0 %v1363
  %1502 = vmatprep.subr.bf16.mxu0 %v1367
  %1503 = vmatpush1.bf16.msra.mxu0 %v1366
  %1504 = vmatprep.subr.bf16.mxu0 %v1370
  %1505 = vmatpush1.bf16.msra.mxu0 %v1369
  %1506 = vmatprep.subr.bf16.mxu0 %v1373
  %1507 = vmatpush1.bf16.msra.mxu0 %v1372
  %1508 = vmatprep.subr.bf16.mxu0 %v1376
  %1509 = vmatpush1.bf16.msra.mxu0 %v1375
  %1510 = vmatprep.subr.bf16.mxu0 %v1379
  %1511 = vmatpush1.bf16.msra.mxu0 %v1378
  %1512 = vmatprep.subr.bf16.mxu0 %v1382
  %1513 = vmatpush1.bf16.msra.mxu0 %v1381
  %1514 = vmatprep.subr.bf16.mxu0 %v1385
  %1515 = vmatpush1.bf16.msra.mxu0 %v1384
  %1516 = vmatprep.subr.bf16.mxu0 %v1388
  %1517 = vmatpush1.bf16.msra.mxu0 %v1387
  %1518 = vmatprep.mubr.bf16.mxu0 %v1091
  %1519 = vmatmul.mubr.bf16.gmra.mrb[0].mxu0 %v1090
  %v1520 = vpop.f32.mrb[0].mxu0
  %v1521 = vadd.f32 0.0, %v1520
  %v1522 = vpop.f32.mrb[0].mxu0
  %v1523 = vadd.f32 0.0, %v1522
  %v1524 = vpop.f32.mrb[0].mxu0
  %v1525 = vadd.f32 0.0, %v1524
  %v1526 = vpop.f32.mrb[0].mxu0
  %v1527 = vadd.f32 0.0, %v1526
  %1528 = vmatprep.mubr.bf16.mxu0 %v1094
  %1529 = vmatmul.mubr.bf16.gmra.mrb[0].mxu0 %v1093
  %v1530 = vpop.f32.mrb[0].mxu0
  %v1531 = vadd.f32 0.0, %v1530
  %v1532 = vpop.f32.mrb[0].mxu0
  %v1533 = vadd.f32 0.0, %v1532
  %v1534 = vpop.f32.mrb[0].mxu0
  %v1535 = vpop.f32.mrb[0].mxu0
  %1536 = vdwg.mxu0
  %1537 = vmatprep.subr.bf16.mxu0 %v1391
  %1538 = vmatpush1.bf16.msra.mxu0 %v1390
  %1539 = vmatprep.subr.bf16.mxu0 %v1394
  %1540 = vmatpush1.bf16.msra.mxu0 %v1393
  %1541 = vmatprep.subr.bf16.mxu0 %v1397
  %1542 = vmatpush1.bf16.msra.mxu0 %v1396
  %1543 = vmatprep.subr.bf16.mxu0 %v1400
  %1544 = vmatpush1.bf16.msra.mxu0 %v1399
  %1545 = vmatprep.subr.bf16.mxu0 %v1403
  %1546 = vmatpush1.bf16.msra.mxu0 %v1402
  %1547 = vmatprep.subr.bf16.mxu0 %v1406
  %1548 = vmatpush1.bf16.msra.mxu0 %v1405
  %1549 = vmatprep.subr.bf16.mxu0 %v1409
  %1550 = vmatpush1.bf16.msra.mxu0 %v1408
  %1551 = vmatprep.subr.bf16.mxu0 %v1412
  %1552 = vmatpush1.bf16.msra.mxu0 %v1411
  %1553 = vmatprep.subr.bf16.mxu0 0
  %1554 = vmatpush1.bf16.msra.mxu0 0
  %1555 = vmatprep.subr.bf16.mxu0 0
  %1556 = vmatpush1.bf16.msra.mxu0 0
  %1557 = vmatprep.subr.bf16.mxu0 0
  %1558 = vmatpush1.bf16.msra.mxu0 0
  %1559 = vmatprep.subr.bf16.mxu0 0
  %1560 = vmatpush1.bf16.msra.mxu0 0
  %1561 = vmatprep.subr.bf16.mxu0 0
  %1562 = vmatpush1.bf16.msra.mxu0 0
  %1563 = vmatprep.subr.bf16.mxu0 0
  %1564 = vmatpush1.bf16.msra.mxu0 0
  %1565 = vmatprep.subr.bf16.mxu0 0
  %1566 = vmatpush1.bf16.msra.mxu0 0
  %1567 = vmatprep.subr.bf16.mxu0 0
  %1568 = vmatpush1.bf16.msra.mxu0 0
  %1569 = vmatprep.mubr.bf16.mxu0 0
  %1570 = vmatmul.mubr.bf16.gmra.mrb[0].mxu0 %v1092
  %v1571 = vpop.f32.mrb[0].mxu0
  %v1572 = vadd.f32 %v1521, %v1571
  %v1573 = vpop.f32.mrb[0].mxu0
  %v1574 = vadd.f32 %v1523, %v1573
  %v1575 = vpop.f32.mrb[0].mxu0
  %v1576 = vadd.f32 %v1525, %v1575
  %v1577 = vpop.f32.mrb[0].mxu0
  %v1578 = vadd.f32 %v1527, %v1577
  %1579 = vmatprep.mubr.bf16.mxu0 0
  %1580 = vmatmul.mubr.bf16.gmra.mrb[0].mxu0 %v1095
  %v1581 = vpop.f32.mrb[0].mxu0
  %v1582 = vadd.f32 %v1531, %v1581
  %v1583 = vpop.f32.mrb[0].mxu0
  %v1584 = vadd.f32 %v1533, %v1583
  %v1585 = vpop.f32.mrb[0].mxu0
  %v1586 = vpop.f32.mrb[0].mxu0
  %1587 = vdwg.mxu0
  %1588 = vmatprep.subr.bf16.mxu0 0
  %1589 = vmatpush1.bf16.msra.mxu0 %v1344
  %1590 = vmatprep.subr.bf16.mxu0 0
  %1591 = vmatpush1.bf16.msra.mxu0 %v1347
  %1592 = vmatprep.subr.bf16.mxu0 0
  %1593 = vmatpush1.bf16.msra.mxu0 %v1350
  %1594 = vmatprep.subr.bf16.mxu0 0
  %1595 = vmatpush1.bf16.msra.mxu0 %v1353
  %1596 = vmatprep.subr.bf16.mxu0 0
  %1597 = vmatpush1.bf16.msra.mxu0 %v1356
  %1598 = vmatprep.subr.bf16.mxu0 0
  %1599 = vmatpush1.bf16.msra.mxu0 %v1359
  %1600 = vmatprep.subr.bf16.mxu0 0
  %1601 = vmatpush1.bf16.msra.mxu0 %v1362
  %1602 = vmatprep.subr.bf16.mxu0 0
  %1603 = vmatpush1.bf16.msra.mxu0 %v1365
  %1604 = vmatprep.subr.bf16.mxu0 0
  %1605 = vmatpush1.bf16.msra.mxu0 %v1368
  %1606 = vmatprep.subr.bf16.mxu0 0
  %1607 = vmatpush1.bf16.msra.mxu0 %v1371
  %1608 = vmatprep.subr.bf16.mxu0 0
  %1609 = vmatpush1.bf16.msra.mxu0 %v1374
  %1610 = vmatprep.subr.bf16.mxu0 0
  %1611 = vmatpush1.bf16.msra.mxu0 %v1377
  %1612 = vmatprep.subr.bf16.mxu0 0
  %1613 = vmatpush1.bf16.msra.mxu0 %v1380
  %1614 = vmatprep.subr.bf16.mxu0 0
  %1615 = vmatpush1.bf16.msra.mxu0 %v1383
  %1616 = vmatprep.subr.bf16.mxu0 0
  %1617 = vmatpush1.bf16.msra.mxu0 %v1386
  %1618 = vmatprep.subr.bf16.mxu0 0
  %1619 = vmatpush1.bf16.msra.mxu0 %v1389
  %1620 = vmatprep.mubr.bf16.mxu0 %v1091
  %1621 = vmatmul.mubr.bf16.gmra.mrb[0].mxu0 %v1090
  %v1622 = vpop.f32.mrb[0].mxu0
  %v1623 = vadd.f32 0.0, %v1622
  %v1624 = vpop.f32.mrb[0].mxu0
  %v1625 = vpop.f32.mrb[0].mxu0
  %v1626 = vadd.f32 0.0, %v1625
  %v1627 = vpop.f32.mrb[0].mxu0
  %1628 = vmatprep.mubr.bf16.mxu0 %v1094
  %1629 = vmatmul.mubr.bf16.gmra.mrb[0].mxu0 %v1093
  %v1630 = vpop.f32.mrb[0].mxu0
  %v1631 = vadd.f32 0.0, %v1630
  %v1632 = vpop.f32.mrb[0].mxu0
  %v1633 = vpop.f32.mrb[0].mxu0
  %v1634 = vpop.f32.mrb[0].mxu0
  %1635 = vdwg.mxu0
  %1636 = vmatprep.subr.bf16.mxu0 0
  %1637 = vmatpush1.bf16.msra.mxu0 %v1392
  %1638 = vmatprep.subr.bf16.mxu0 0
  %1639 = vmatpush1.bf16.msra.mxu0 %v1395
  %1640 = vmatprep.subr.bf16.mxu0 0
  %1641 = vmatpush1.bf16.msra.mxu0 %v1398
  %1642 = vmatprep.subr.bf16.mxu0 0
  %1643 = vmatpush1.bf16.msra.mxu0 %v1401
  %1644 = vmatprep.subr.bf16.mxu0 0
  %1645 = vmatpush1.bf16.msra.mxu0 %v1404
  %1646 = vmatprep.subr.bf16.mxu0 0
  %1647 = vmatpush1.bf16.msra.mxu0 %v1407
  %1648 = vmatprep.subr.bf16.mxu0 0
  %1649 = vmatpush1.bf16.msra.mxu0 %v1410
  %1650 = vmatprep.subr.bf16.mxu0 0
  %1651 = vmatpush1.bf16.msra.mxu0 %v1413
  %1652 = vmatprep.subr.bf16.mxu0 0
  %1653 = vmatpush1.bf16.msra.mxu0 0
  %1654 = vmatprep.subr.bf16.mxu0 0
  %1655 = vmatpush1.bf16.msra.mxu0 0
  %1656 = vmatprep.subr.bf16.mxu0 0
  %1657 = vmatpush1.bf16.msra.mxu0 0
  %1658 = vmatprep.subr.bf16.mxu0 0
  %1659 = vmatpush1.bf16.msra.mxu0 0
  %1660 = vmatprep.subr.bf16.mxu0 0
  %1661 = vmatpush1.bf16.msra.mxu0 0
  %1662 = vmatprep.subr.bf16.mxu0 0
  %1663 = vmatpush1.bf16.msra.mxu0 0
  %1664 = vmatprep.subr.bf16.mxu0 0
  %1665 = vmatpush1.bf16.msra.mxu0 0
  %1666 = vmatprep.subr.bf16.mxu0 0
  %1667 = vmatpush1.bf16.msra.mxu0 0
  %1668 = vmatprep.mubr.bf16.mxu0 0
  %1669 = vmatmul.mubr.bf16.gmra.mrb[0].mxu0 %v1092
  %v1670 = vpop.f32.mrb[0].mxu0
  %v1671 = vadd.f32 %v1623, %v1670
  %v1672 = vpop.f32.mrb[0].mxu0
  %v1673 = vpop.f32.mrb[0].mxu0
  %v1674 = vadd.f32 %v1626, %v1673
  %v1675 = vpop.f32.mrb[0].mxu0
  %1676 = vmatprep.mubr.bf16.mxu0 0
  %1677 = vmatmul.mubr.bf16.gmra.mrb[0].mxu0 %v1095
  %v1678 = vpop.f32.mrb[0].mxu0
  %v1679 = vadd.f32 %v1631, %v1678
  %v1680 = vpop.f32.mrb[0].mxu0
  %v1681 = vpop.f32.mrb[0].mxu0
  %v1682 = vpop.f32.mrb[0].mxu0
  %1683 = vdwg.mxu0
  %s1684 = scalar_lea.vmem %s4, 576
  %v1685 = vld [vmem:[%s1684] sm:$0xff]
  %v1686 = vld [vmem:[%s1684 + $0x8] sm:$0xf]
  %v1687 = vld [vmem:[%s1684 + $0xc] sm:$0xff]
  %v1688 = vld [vmem:[%s1684 + $0x14] sm:$0xf]
  %v1689 = vld [vmem:[%s1684 + $0x18] sm:$0xff]
  %v1690 = vld [vmem:[%s1684 + $0x20] sm:$0xf]
  %v1691 = vld [vmem:[%s1684 + $0x24] sm:$0xff]
  %v1692 = vld [vmem:[%s1684 + $0x2c] sm:$0xf]
  %v1693 = vld [vmem:[%s1684 + $0x30] sm:$0xff]
  %v1694 = vld [vmem:[%s1684 + $0x38] sm:$0xf]
  %v1695 = vld [vmem:[%s1684 + $0x3c] sm:$0xff]
  %v1696 = vld [vmem:[%s1684 + $0x44] sm:$0xf]
  %v1697 = vld [vmem:[%s1684 + $0x48] sm:$0xff]
  %v1698 = vld [vmem:[%s1684 + $0x50] sm:$0xf]
  %v1699 = vld [vmem:[%s1684 + $0x54] sm:$0xff]
  %v1700 = vld [vmem:[%s1684 + $0x5c] sm:$0xf]
  %v1701 = vld [vmem:[%s1684 + $0x60] sm:$0xff]
  %v1702 = vld [vmem:[%s1684 + $0x68] sm:$0xf]
  %v1703 = vld [vmem:[%s1684 + $0x6c] sm:$0xff]
  %v1704 = vld [vmem:[%s1684 + $0x74] sm:$0xf]
  %v1705 = vld [vmem:[%s1684 + $0x78] sm:$0xff]
  %v1706 = vld [vmem:[%s1684 + $0x80] sm:$0xf]
  %v1707 = vld [vmem:[%s1684 + $0x84] sm:$0xff]
  %v1708 = vld [vmem:[%s1684 + $0x8c] sm:$0xf]
  %v1709 = vld [vmem:[%s1684 + $0x90] sm:$0xff]
  %v1710 = vld [vmem:[%s1684 + $0x98] sm:$0xf]
  %v1711 = vld [vmem:[%s1684 + $0x9c] sm:$0xff]
  %v1712 = vld [vmem:[%s1684 + $0xa4] sm:$0xf]
  %v1713 = vld [vmem:[%s1684 + $0xa8] sm:$0xff]
  %v1714 = vld [vmem:[%s1684 + $0xb0] sm:$0xf]
  %v1715 = vld [vmem:[%s1684 + $0xb4] sm:$0xff]
  %v1716 = vld [vmem:[%s1684 + $0xbc] sm:$0xf]
  %v1717 = vld [vmem:[%s1684 + $0xc0] sm:$0xff]
  %v1718 = vld [vmem:[%s1684 + $0xc8] sm:$0xf]
  %v1719 = vld [vmem:[%s1684 + $0xcc] sm:$0xff]
  %v1720 = vld [vmem:[%s1684 + $0xd4] sm:$0xf]
  %v1721 = vld [vmem:[%s1684 + $0xd8] sm:$0xff]
  %v1722 = vld [vmem:[%s1684 + $0xe0] sm:$0xf]
  %v1723 = vld [vmem:[%s1684 + $0xe4] sm:$0xff]
  %v1724 = vld [vmem:[%s1684 + $0xec] sm:$0xf]
  %v1725 = vld [vmem:[%s1684 + $0xf0] sm:$0xff]
  %v1726 = vld [vmem:[%s1684 + $0xf8] sm:$0xf]
  %v1727 = vld [vmem:[%s1684 + $0xfc] sm:$0xff]
  %v1728 = vld [vmem:[%s1684 + $0x104] sm:$0xf]
  %v1729 = vld [vmem:[%s1684 + $0x108] sm:$0xff]
  %v1730 = vld [vmem:[%s1684 + $0x110] sm:$0xf]
  %v1731 = vld [vmem:[%s1684 + $0x114] sm:$0xff]
  %v1732 = vld [vmem:[%s1684 + $0x11c] sm:$0xf]
  %v1733 = vld [vmem:[%s1684 + $0x120] sm:$0xff]
  %v1734 = vld [vmem:[%s1684 + $0x128] sm:$0xf]
  %v1735 = vld [vmem:[%s1684 + $0x12c] sm:$0xff]
  %v1736 = vld [vmem:[%s1684 + $0x134] sm:$0xf]
  %v1737 = vld [vmem:[%s1684 + $0x138] sm:$0xff]
  %v1738 = vld [vmem:[%s1684 + $0x140] sm:$0xf]
  %v1739 = vld [vmem:[%s1684 + $0x144] sm:$0xff]
  %v1740 = vld [vmem:[%s1684 + $0x14c] sm:$0xf]
  %v1741 = vld [vmem:[%s1684 + $0x150] sm:$0xff]
  %v1742 = vld [vmem:[%s1684 + $0x158] sm:$0xf]
  %v1743 = vld [vmem:[%s1684 + $0x15c] sm:$0xff]
  %v1744 = vld [vmem:[%s1684 + $0x164] sm:$0xf]
  %v1745 = vld [vmem:[%s1684 + $0x168] sm:$0xff]
  %v1746 = vld [vmem:[%s1684 + $0x170] sm:$0xf]
  %v1747 = vld [vmem:[%s1684 + $0x174] sm:$0xff]
  %v1748 = vld [vmem:[%s1684 + $0x17c] sm:$0xf]
  %v1749 = vld [vmem:[%s1684 + $0x180] sm:$0xff]
  %v1750 = vld [vmem:[%s1684 + $0x188] sm:$0xf]
  %v1751 = vld [vmem:[%s1684 + $0x18c] sm:$0xff]
  %v1752 = vld [vmem:[%s1684 + $0x194] sm:$0xf]
  %v1753 = vld [vmem:[%s1684 + $0x198] sm:$0xff]
  %v1754 = vld [vmem:[%s1684 + $0x1a0] sm:$0xf]
  %v1755 = vld [vmem:[%s1684 + $0x1a4] sm:$0xff]
  %v1756 = vld [vmem:[%s1684 + $0x1ac] sm:$0xf]
  %v1757 = vld [vmem:[%s1684 + $0x1b0] sm:$0xff]
  %v1758 = vld [vmem:[%s1684 + $0x1b8] sm:$0xf]
  %v1759 = vld [vmem:[%s1684 + $0x1bc] sm:$0xff]
  %v1760 = vld [vmem:[%s1684 + $0x1c4] sm:$0xf]
  %v1761 = vld [vmem:[%s1684 + $0x1c8] sm:$0xff]
  %v1762 = vld [vmem:[%s1684 + $0x1d0] sm:$0xf]
  %v1763 = vld [vmem:[%s1684 + $0x1d4] sm:$0xff]
  %v1764 = vld [vmem:[%s1684 + $0x1dc] sm:$0xf]
  %v1765 = vld [vmem:[%s1684 + $0x1e0] sm:$0xff]
  %v1766 = vld [vmem:[%s1684 + $0x1e8] sm:$0xf]
  %v1767 = vld [vmem:[%s1684 + $0x1ec] sm:$0xff]
  %v1768 = vld [vmem:[%s1684 + $0x1f4] sm:$0xf]
  %v1769 = vld [vmem:[%s1684 + $0x1f8] sm:$0xff]
  %v1770 = vld [vmem:[%s1684 + $0x200] sm:$0xf]
  %v1771 = vld [vmem:[%s1684 + $0x204] sm:$0xff]
  %v1772 = vld [vmem:[%s1684 + $0x20c] sm:$0xf]
  %v1773 = vld [vmem:[%s1684 + $0x210] sm:$0xff]
  %v1774 = vld [vmem:[%s1684 + $0x218] sm:$0xf]
  %v1775 = vld [vmem:[%s1684 + $0x21c] sm:$0xff]
  %v1776 = vld [vmem:[%s1684 + $0x224] sm:$0xf]
  %v1777 = vld [vmem:[%s1684 + $0x228] sm:$0xff]
  %v1778 = vld [vmem:[%s1684 + $0x230] sm:$0xf]
  %v1779 = vld [vmem:[%s1684 + $0x234] sm:$0xff]
  %v1780 = vld [vmem:[%s1684 + $0x23c] sm:$0xf]
  %v1877 = vunpack.c.l.b16 %v1685
  %v1878 = vunpack.c.h.b16 %v1685
  %v1879 = vunpack.c.l.b16 %v1686
  %v1880 = vunpack.c.l.b16 %v1687
  %v1881 = vunpack.c.h.b16 %v1687
  %v1882 = vunpack.c.l.b16 %v1688
  %v1883 = vunpack.c.l.b16 %v1689
  %v1884 = vunpack.c.h.b16 %v1689
  %v1885 = vunpack.c.l.b16 %v1690
  %v1886 = vunpack.c.l.b16 %v1691
  %v1887 = vunpack.c.h.b16 %v1691
  %v1888 = vunpack.c.l.b16 %v1692
  %v1889 = vunpack.c.l.b16 %v1693
  %v1890 = vunpack.c.h.b16 %v1693
  %v1891 = vunpack.c.l.b16 %v1694
  %v1892 = vunpack.c.l.b16 %v1695
  %v1893 = vunpack.c.h.b16 %v1695
  %v1894 = vunpack.c.l.b16 %v1696
  %v1895 = vunpack.c.l.b16 %v1697
  %v1896 = vunpack.c.h.b16 %v1697
  %v1897 = vunpack.c.l.b16 %v1698
  %v1898 = vunpack.c.l.b16 %v1699
  %v1899 = vunpack.c.h.b16 %v1699
  %v1900 = vunpack.c.l.b16 %v1700
  %v1901 = vunpack.c.l.b16 %v1701
  %v1902 = vunpack.c.h.b16 %v1701
  %v1903 = vunpack.c.l.b16 %v1702
  %v1904 = vunpack.c.l.b16 %v1703
  %v1905 = vunpack.c.h.b16 %v1703
  %v1906 = vunpack.c.l.b16 %v1704
  %v1907 = vunpack.c.l.b16 %v1705
  %v1908 = vunpack.c.h.b16 %v1705
  %v1909 = vunpack.c.l.b16 %v1706
  %v1910 = vunpack.c.l.b16 %v1707
  %v1911 = vunpack.c.h.b16 %v1707
  %v1912 = vunpack.c.l.b16 %v1708
  %v1913 = vunpack.c.l.b16 %v1709
  %v1914 = vunpack.c.h.b16 %v1709
  %v1915 = vunpack.c.l.b16 %v1710
  %v1916 = vunpack.c.l.b16 %v1711
  %v1917 = vunpack.c.h.b16 %v1711
  %v1918 = vunpack.c.l.b16 %v1712
  %v1919 = vunpack.c.l.b16 %v1713
  %v1920 = vunpack.c.h.b16 %v1713
  %v1921 = vunpack.c.l.b16 %v1714
  %v1922 = vunpack.c.l.b16 %v1715
  %v1923 = vunpack.c.h.b16 %v1715
  %v1924 = vunpack.c.l.b16 %v1716
  %v1925 = vunpack.c.l.b16 %v1717
  %v1926 = vunpack.c.h.b16 %v1717
  %v1927 = vunpack.c.l.b16 %v1718
  %v1928 = vunpack.c.l.b16 %v1719
  %v1929 = vunpack.c.h.b16 %v1719
  %v1930 = vunpack.c.l.b16 %v1720
  %v1931 = vunpack.c.l.b16 %v1721
  %v1932 = vunpack.c.h.b16 %v1721
  %v1933 = vunpack.c.l.b16 %v1722
  %v1934 = vunpack.c.l.b16 %v1723
  %v1935 = vunpack.c.h.b16 %v1723
  %v1936 = vunpack.c.l.b16 %v1724
  %v1937 = vunpack.c.l.b16 %v1725
  %v1938 = vunpack.c.h.b16 %v1725
  %v1939 = vunpack.c.l.b16 %v1726
  %v1940 = vunpack.c.l.b16 %v1727
  %v1941 = vunpack.c.h.b16 %v1727
  %v1942 = vunpack.c.l.b16 %v1728
  %v1943 = vunpack.c.l.b16 %v1729
  %v1944 = vunpack.c.h.b16 %v1729
  %v1945 = vunpack.c.l.b16 %v1730
  %v1946 = vunpack.c.l.b16 %v1731
  %v1947 = vunpack.c.h.b16 %v1731
  %v1948 = vunpack.c.l.b16 %v1732
  %v1949 = vunpack.c.l.b16 %v1733
  %v1950 = vunpack.c.h.b16 %v1733
  %v1951 = vunpack.c.l.b16 %v1734
  %v1952 = vunpack.c.l.b16 %v1735
  %v1953 = vunpack.c.h.b16 %v1735
  %v1954 = vunpack.c.l.b16 %v1736
  %v1955 = vunpack.c.l.b16 %v1737
  %v1956 = vunpack.c.h.b16 %v1737
  %v1957 = vunpack.c.l.b16 %v1738
  %v1958 = vunpack.c.l.b16 %v1739
  %v1959 = vunpack.c.h.b16 %v1739
  %v1960 = vunpack.c.l.b16 %v1740
  %v1961 = vunpack.c.l.b16 %v1741
  %v1962 = vunpack.c.h.b16 %v1741
  %v1963 = vunpack.c.l.b16 %v1742
  %v1964 = vunpack.c.l.b16 %v1743
  %v1965 = vunpack.c.h.b16 %v1743
  %v1966 = vunpack.c.l.b16 %v1744
  %v1967 = vunpack.c.l.b16 %v1745
  %v1968 = vunpack.c.h.b16 %v1745
  %v1969 = vunpack.c.l.b16 %v1746
  %v1970 = vunpack.c.l.b16 %v1747
  %v1971 = vunpack.c.h.b16 %v1747
  %v1972 = vunpack.c.l.b16 %v1748
  %v1973 = vunpack.c.l.b16 %v1749
  %v1974 = vunpack.c.h.b16 %v1749
  %v1975 = vunpack.c.l.b16 %v1750
  %v1976 = vunpack.c.l.b16 %v1751
  %v1977 = vunpack.c.h.b16 %v1751
  %v1978 = vunpack.c.l.b16 %v1752
  %v1979 = vunpack.c.l.b16 %v1753
  %v1980 = vunpack.c.h.b16 %v1753
  %v1981 = vunpack.c.l.b16 %v1754
  %v1982 = vunpack.c.l.b16 %v1755
  %v1983 = vunpack.c.h.b16 %v1755
  %v1984 = vunpack.c.l.b16 %v1756
  %v1985 = vunpack.c.l.b16 %v1757
  %v1986 = vunpack.c.h.b16 %v1757
  %v1987 = vunpack.c.l.b16 %v1758
  %v1988 = vunpack.c.l.b16 %v1759
  %v1989 = vunpack.c.h.b16 %v1759
  %v1990 = vunpack.c.l.b16 %v1760
  %v1991 = vunpack.c.l.b16 %v1761
  %v1992 = vunpack.c.h.b16 %v1761
  %v1993 = vunpack.c.l.b16 %v1762
  %v1994 = vunpack.c.l.b16 %v1763
  %v1995 = vunpack.c.h.b16 %v1763
  %v1996 = vunpack.c.l.b16 %v1764
  %v1997 = vunpack.c.l.b16 %v1765
  %v1998 = vunpack.c.h.b16 %v1765
  %v1999 = vunpack.c.l.b16 %v1766
  %v2000 = vunpack.c.l.b16 %v1767
  %v2001 = vunpack.c.h.b16 %v1767
  %v2002 = vunpack.c.l.b16 %v1768
  %v2003 = vunpack.c.l.b16 %v1769
  %v2004 = vunpack.c.h.b16 %v1769
  %v2005 = vunpack.c.l.b16 %v1770
  %v2006 = vunpack.c.l.b16 %v1771
  %v2007 = vunpack.c.h.b16 %v1771
  %v2008 = vunpack.c.l.b16 %v1772
  %v2009 = vunpack.c.l.b16 %v1773
  %v2010 = vunpack.c.h.b16 %v1773
  %v2011 = vunpack.c.l.b16 %v1774
  %v2012 = vunpack.c.l.b16 %v1775
  %v2013 = vunpack.c.h.b16 %v1775
  %v2014 = vunpack.c.l.b16 %v1776
  %v2015 = vunpack.c.l.b16 %v1777
  %v2016 = vunpack.c.h.b16 %v1777
  %v2017 = vunpack.c.l.b16 %v1778
  %v2018 = vunpack.c.l.b16 %v1779
  %v2019 = vunpack.c.h.b16 %v1779
  %v2020 = vunpack.c.l.b16 %v1780
  %v2021 = vpack.c.b16 %v1880, %v1877
  %v2022 = vpack.c.b16 %v1881, %v1878
  %v2023 = vpack.c.b16 %v1882, %v1879
  %v2024 = vpack.c.b16 %v1886, %v1883
  %v2025 = vpack.c.b16 %v1887, %v1884
  %v2026 = vpack.c.b16 %v1888, %v1885
  %v2027 = vpack.c.b16 %v1892, %v1889
  %v2028 = vpack.c.b16 %v1893, %v1890
  %v2029 = vpack.c.b16 %v1894, %v1891
  %v2030 = vpack.c.b16 %v1898, %v1895
  %v2031 = vpack.c.b16 %v1899, %v1896
  %v2032 = vpack.c.b16 %v1900, %v1897
  %v2033 = vpack.c.b16 %v1904, %v1901
  %v2034 = vpack.c.b16 %v1905, %v1902
  %v2035 = vpack.c.b16 %v1906, %v1903
  %v2036 = vpack.c.b16 %v1910, %v1907
  %v2037 = vpack.c.b16 %v1911, %v1908
  %v2038 = vpack.c.b16 %v1912, %v1909
  %v2039 = vpack.c.b16 %v1916, %v1913
  %v2040 = vpack.c.b16 %v1917, %v1914
  %v2041 = vpack.c.b16 %v1918, %v1915
  %v2042 = vpack.c.b16 %v1922, %v1919
  %v2043 = vpack.c.b16 %v1923, %v1920
  %v2044 = vpack.c.b16 %v1924, %v1921
  %v2045 = vpack.c.b16 %v1928, %v1925
  %v2046 = vpack.c.b16 %v1929, %v1926
  %v2047 = vpack.c.b16 %v1930, %v1927
  %v2048 = vpack.c.b16 %v1934, %v1931
  %v2049 = vpack.c.b16 %v1935, %v1932
  %v2050 = vpack.c.b16 %v1936, %v1933
  %v2051 = vpack.c.b16 %v1940, %v1937
  %v2052 = vpack.c.b16 %v1941, %v1938
  %v2053 = vpack.c.b16 %v1942, %v1939
  %v2054 = vpack.c.b16 %v1946, %v1943
  %v2055 = vpack.c.b16 %v1947, %v1944
  %v2056 = vpack.c.b16 %v1948, %v1945
  %v2057 = vpack.c.b16 %v1952, %v1949
  %v2058 = vpack.c.b16 %v1953, %v1950
  %v2059 = vpack.c.b16 %v1954, %v1951
  %v2060 = vpack.c.b16 %v1958, %v1955
  %v2061 = vpack.c.b16 %v1959, %v1956
  %v2062 = vpack.c.b16 %v1960, %v1957
  %v2063 = vpack.c.b16 %v1964, %v1961
  %v2064 = vpack.c.b16 %v1965, %v1962
  %v2065 = vpack.c.b16 %v1966, %v1963
  %v2066 = vpack.c.b16 %v1970, %v1967
  %v2067 = vpack.c.b16 %v1971, %v1968
  %v2068 = vpack.c.b16 %v1972, %v1969
  %v2069 = vpack.c.b16 %v1976, %v1973
  %v2070 = vpack.c.b16 %v1977, %v1974
  %v2071 = vpack.c.b16 %v1978, %v1975
  %v2072 = vpack.c.b16 %v1982, %v1979
  %v2073 = vpack.c.b16 %v1983, %v1980
  %v2074 = vpack.c.b16 %v1984, %v1981
  %v2075 = vpack.c.b16 %v1988, %v1985
  %v2076 = vpack.c.b16 %v1989, %v1986
  %v2077 = vpack.c.b16 %v1990, %v1987
  %v2078 = vpack.c.b16 %v1994, %v1991
  %v2079 = vpack.c.b16 %v1995, %v1992
  %v2080 = vpack.c.b16 %v1996, %v1993
  %v2081 = vpack.c.b16 %v2000, %v1997
  %v2082 = vpack.c.b16 %v2001, %v1998
  %v2083 = vpack.c.b16 %v2002, %v1999
  %v2084 = vpack.c.b16 %v2006, %v2003
  %v2085 = vpack.c.b16 %v2007, %v2004
  %v2086 = vpack.c.b16 %v2008, %v2005
  %v2087 = vpack.c.b16 %v2012, %v2009
  %v2088 = vpack.c.b16 %v2013, %v2010
  %v2089 = vpack.c.b16 %v2014, %v2011
  %v2090 = vpack.c.b16 %v2018, %v2015
  %v2091 = vpack.c.b16 %v2019, %v2016
  %v2092 = vpack.c.b16 %v2020, %v2017
  %2165 = vmatprep.subr.bf16.mxu0 %v2022
  %2166 = vmatpush1.bf16.msra.mxu0 %v2021
  %2167 = vmatprep.subr.bf16.mxu0 %v2025
  %2168 = vmatpush1.bf16.msra.mxu0 %v2024
  %2169 = vmatprep.subr.bf16.mxu0 %v2028
  %2170 = vmatpush1.bf16.msra.mxu0 %v2027
  %2171 = vmatprep.subr.bf16.mxu0 %v2031
  %2172 = vmatpush1.bf16.msra.mxu0 %v2030
  %2173 = vmatprep.subr.bf16.mxu0 %v2034
  %2174 = vmatpush1.bf16.msra.mxu0 %v2033
  %2175 = vmatprep.subr.bf16.mxu0 %v2037
  %2176 = vmatpush1.bf16.msra.mxu0 %v2036
  %2177 = vmatprep.subr.bf16.mxu0 %v2040
  %2178 = vmatpush1.bf16.msra.mxu0 %v2039
  %2179 = vmatprep.subr.bf16.mxu0 %v2043
  %2180 = vmatpush1.bf16.msra.mxu0 %v2042
  %2181 = vmatprep.subr.bf16.mxu0 %v2046
  %2182 = vmatpush1.bf16.msra.mxu0 %v2045
  %2183 = vmatprep.subr.bf16.mxu0 %v2049
  %2184 = vmatpush1.bf16.msra.mxu0 %v2048
  %2185 = vmatprep.subr.bf16.mxu0 %v2052
  %2186 = vmatpush1.bf16.msra.mxu0 %v2051
  %2187 = vmatprep.subr.bf16.mxu0 %v2055
  %2188 = vmatpush1.bf16.msra.mxu0 %v2054
  %2189 = vmatprep.subr.bf16.mxu0 %v2058
  %2190 = vmatpush1.bf16.msra.mxu0 %v2057
  %2191 = vmatprep.subr.bf16.mxu0 %v2061
  %2192 = vmatpush1.bf16.msra.mxu0 %v2060
  %2193 = vmatprep.subr.bf16.mxu0 %v2064
  %2194 = vmatpush1.bf16.msra.mxu0 %v2063
  %2195 = vmatprep.subr.bf16.mxu0 %v2067
  %2196 = vmatpush1.bf16.msra.mxu0 %v2066
  %2197 = vmatprep.mubr.bf16.mxu0 %v1091
  %2198 = vmatmul.mubr.bf16.gmra.mrb[0].mxu0 %v1090
  %v2199 = vpop.f32.mrb[0].mxu0
  %v2200 = vadd.f32 0.0, %v2199
  %v2201 = vpop.f32.mrb[0].mxu0
  %v2202 = vadd.f32 0.0, %v2201
  %v2203 = vpop.f32.mrb[0].mxu0
  %v2204 = vadd.f32 0.0, %v2203
  %v2205 = vpop.f32.mrb[0].mxu0
  %v2206 = vadd.f32 0.0, %v2205
  %2207 = vmatprep.mubr.bf16.mxu0 %v1094
  %2208 = vmatmul.mubr.bf16.gmra.mrb[0].mxu0 %v1093
  %v2209 = vpop.f32.mrb[0].mxu0
  %v2210 = vadd.f32 0.0, %v2209
  %v2211 = vpop.f32.mrb[0].mxu0
  %v2212 = vadd.f32 0.0, %v2211
  %v2213 = vpop.f32.mrb[0].mxu0
  %v2214 = vpop.f32.mrb[0].mxu0
  %2215 = vdwg.mxu0
  %2216 = vmatprep.subr.bf16.mxu0 %v2070
  %2217 = vmatpush1.bf16.msra.mxu0 %v2069
  %2218 = vmatprep.subr.bf16.mxu0 %v2073
  %2219 = vmatpush1.bf16.msra.mxu0 %v2072
  %2220 = vmatprep.subr.bf16.mxu0 %v2076
  %2221 = vmatpush1.bf16.msra.mxu0 %v2075
  %2222 = vmatprep.subr.bf16.mxu0 %v2079
  %2223 = vmatpush1.bf16.msra.mxu0 %v2078
  %2224 = vmatprep.subr.bf16.mxu0 %v2082
  %2225 = vmatpush1.bf16.msra.mxu0 %v2081
  %2226 = vmatprep.subr.bf16.mxu0 %v2085
  %2227 = vmatpush1.bf16.msra.mxu0 %v2084
  %2228 = vmatprep.subr.bf16.mxu0 %v2088
  %2229 = vmatpush1.bf16.msra.mxu0 %v2087
  %2230 = vmatprep.subr.bf16.mxu0 %v2091
  %2231 = vmatpush1.bf16.msra.mxu0 %v2090
  %2232 = vmatprep.subr.bf16.mxu0 0
  %2233 = vmatpush1.bf16.msra.mxu0 0
  %2234 = vmatprep.subr.bf16.mxu0 0
  %2235 = vmatpush1.bf16.msra.mxu0 0
  %2236 = vmatprep.subr.bf16.mxu0 0
  %2237 = vmatpush1.bf16.msra.mxu0 0
  %2238 = vmatprep.subr.bf16.mxu0 0
  %2239 = vmatpush1.bf16.msra.mxu0 0
  %2240 = vmatprep.subr.bf16.mxu0 0
  %2241 = vmatpush1.bf16.msra.mxu0 0
  %2242 = vmatprep.subr.bf16.mxu0 0
  %2243 = vmatpush1.bf16.msra.mxu0 0
  %2244 = vmatprep.subr.bf16.mxu0 0
  %2245 = vmatpush1.bf16.msra.mxu0 0
  %2246 = vmatprep.subr.bf16.mxu0 0
  %2247 = vmatpush1.bf16.msra.mxu0 0
  %2248 = vmatprep.mubr.bf16.mxu0 0
  %2249 = vmatmul.mubr.bf16.gmra.mrb[0].mxu0 %v1092
  %v2250 = vpop.f32.mrb[0].mxu0
  %v2251 = vadd.f32 %v2200, %v2250
  %v2252 = vpop.f32.mrb[0].mxu0
  %v2253 = vadd.f32 %v2202, %v2252
  %v2254 = vpop.f32.mrb[0].mxu0
  %v2255 = vadd.f32 %v2204, %v2254
  %v2256 = vpop.f32.mrb[0].mxu0
  %v2257 = vadd.f32 %v2206, %v2256
  %2258 = vmatprep.mubr.bf16.mxu0 0
  %2259 = vmatmul.mubr.bf16.gmra.mrb[0].mxu0 %v1095
  %v2260 = vpop.f32.mrb[0].mxu0
  %v2261 = vadd.f32 %v2210, %v2260
  %v2262 = vpop.f32.mrb[0].mxu0
  %v2263 = vadd.f32 %v2212, %v2262
  %v2264 = vpop.f32.mrb[0].mxu0
  %v2265 = vpop.f32.mrb[0].mxu0
  %2266 = vdwg.mxu0
  %2267 = vmatprep.subr.bf16.mxu0 0
  %2268 = vmatpush1.bf16.msra.mxu0 %v2023
  %2269 = vmatprep.subr.bf16.mxu0 0
  %2270 = vmatpush1.bf16.msra.mxu0 %v2026
  %2271 = vmatprep.subr.bf16.mxu0 0
  %2272 = vmatpush1.bf16.msra.mxu0 %v2029
  %2273 = vmatprep.subr.bf16.mxu0 0
  %2274 = vmatpush1.bf16.msra.mxu0 %v2032
  %2275 = vmatprep.subr.bf16.mxu0 0
  %2276 = vmatpush1.bf16.msra.mxu0 %v2035
  %2277 = vmatprep.subr.bf16.mxu0 0
  %2278 = vmatpush1.bf16.msra.mxu0 %v2038
  %2279 = vmatprep.subr.bf16.mxu0 0
  %2280 = vmatpush1.bf16.msra.mxu0 %v2041
  %2281 = vmatprep.subr.bf16.mxu0 0
  %2282 = vmatpush1.bf16.msra.mxu0 %v2044
  %2283 = vmatprep.subr.bf16.mxu0 0
  %2284 = vmatpush1.bf16.msra.mxu0 %v2047
  %2285 = vmatprep.subr.bf16.mxu0 0
  %2286 = vmatpush1.bf16.msra.mxu0 %v2050
  %2287 = vmatprep.subr.bf16.mxu0 0
  %2288 = vmatpush1.bf16.msra.mxu0 %v2053
  %2289 = vmatprep.subr.bf16.mxu0 0
  %2290 = vmatpush1.bf16.msra.mxu0 %v2056
  %2291 = vmatprep.subr.bf16.mxu0 0
  %2292 = vmatpush1.bf16.msra.mxu0 %v2059
  %2293 = vmatprep.subr.bf16.mxu0 0
  %2294 = vmatpush1.bf16.msra.mxu0 %v2062
  %2295 = vmatprep.subr.bf16.mxu0 0
  %2296 = vmatpush1.bf16.msra.mxu0 %v2065
  %2297 = vmatprep.subr.bf16.mxu0 0
  %2298 = vmatpush1.bf16.msra.mxu0 %v2068
  %2299 = vmatprep.mubr.bf16.mxu0 %v1091
  %2300 = vmatmul.mubr.bf16.gmra.mrb[0].mxu0 %v1090
  %v2301 = vpop.f32.mrb[0].mxu0
  %v2302 = vadd.f32 0.0, %v2301
  %v2303 = vpop.f32.mrb[0].mxu0
  %v2304 = vpop.f32.mrb[0].mxu0
  %v2305 = vadd.f32 0.0, %v2304
  %v2306 = vpop.f32.mrb[0].mxu0
  %2307 = vmatprep.mubr.bf16.mxu0 %v1094
  %2308 = vmatmul.mubr.bf16.gmra.mrb[0].mxu0 %v1093
  %v2309 = vpop.f32.mrb[0].mxu0
  %v2310 = vadd.f32 0.0, %v2309
  %v2311 = vpop.f32.mrb[0].mxu0
  %v2312 = vpop.f32.mrb[0].mxu0
  %v2313 = vpop.f32.mrb[0].mxu0
  %2314 = vdwg.mxu0
  %2315 = vmatprep.subr.bf16.mxu0 0
  %2316 = vmatpush1.bf16.msra.mxu0 %v2071
  %2317 = vmatprep.subr.bf16.mxu0 0
  %2318 = vmatpush1.bf16.msra.mxu0 %v2074
  %2319 = vmatprep.subr.bf16.mxu0 0
  %2320 = vmatpush1.bf16.msra.mxu0 %v2077
  %2321 = vmatprep.subr.bf16.mxu0 0
  %2322 = vmatpush1.bf16.msra.mxu0 %v2080
  %2323 = vmatprep.subr.bf16.mxu0 0
  %2324 = vmatpush1.bf16.msra.mxu0 %v2083
  %2325 = vmatprep.subr.bf16.mxu0 0
  %2326 = vmatpush1.bf16.msra.mxu0 %v2086
  %2327 = vmatprep.subr.bf16.mxu0 0
  %2328 = vmatpush1.bf16.msra.mxu0 %v2089
  %2329 = vmatprep.subr.bf16.mxu0 0
  %2330 = vmatpush1.bf16.msra.mxu0 %v2092
  %2331 = vmatprep.subr.bf16.mxu0 0
  %2332 = vmatpush1.bf16.msra.mxu0 0
  %2333 = vmatprep.subr.bf16.mxu0 0
  %2334 = vmatpush1.bf16.msra.mxu0 0
  %2335 = vmatprep.subr.bf16.mxu0 0
  %2336 = vmatpush1.bf16.msra.mxu0 0
  %2337 = vmatprep.subr.bf16.mxu0 0
  %2338 = vmatpush1.bf16.msra.mxu0 0
  %2339 = vmatprep.subr.bf16.mxu0 0
  %2340 = vmatpush1.bf16.msra.mxu0 0
  %2341 = vmatprep.subr.bf16.mxu0 0
  %2342 = vmatpush1.bf16.msra.mxu0 0
  %2343 = vmatprep.subr.bf16.mxu0 0
  %2344 = vmatpush1.bf16.msra.mxu0 0
  %2345 = vmatprep.subr.bf16.mxu0 0
  %2346 = vmatpush1.bf16.msra.mxu0 0
  %2347 = vmatprep.mubr.bf16.mxu0 0
  %2348 = vmatmul.mubr.bf16.gmra.mrb[0].mxu0 %v1092
  %v2349 = vpop.f32.mrb[0].mxu0
  %v2350 = vadd.f32 %v2302, %v2349
  %v2351 = vpop.f32.mrb[0].mxu0
  %v2352 = vpop.f32.mrb[0].mxu0
  %v2353 = vadd.f32 %v2305, %v2352
  %v2354 = vpop.f32.mrb[0].mxu0
  %2355 = vmatprep.mubr.bf16.mxu0 0
  %2356 = vmatmul.mubr.bf16.gmra.mrb[0].mxu0 %v1095
  %v2357 = vpop.f32.mrb[0].mxu0
  %v2358 = vadd.f32 %v2310, %v2357
  %v2359 = vpop.f32.mrb[0].mxu0
  %v2360 = vpop.f32.mrb[0].mxu0
  %v2361 = vpop.f32.mrb[0].mxu0
  %2362 = vdwg.mxu0
  %s2363 = scalar_lea.vmem %s4, 1152
  %v2364 = vld [vmem:[%s2363] sm:$0xff]
  %v2365 = vld [vmem:[%s2363 + $0x8] sm:$0xf]
  %v2366 = vld [vmem:[%s2363 + $0xc] sm:$0xff]
  %v2367 = vld [vmem:[%s2363 + $0x14] sm:$0xf]
  %v2368 = vld [vmem:[%s2363 + $0x18] sm:$0xff]
  %v2369 = vld [vmem:[%s2363 + $0x20] sm:$0xf]
  %v2370 = vld [vmem:[%s2363 + $0x24] sm:$0xff]
  %v2371 = vld [vmem:[%s2363 + $0x2c] sm:$0xf]
  %v2372 = vld [vmem:[%s2363 + $0x30] sm:$0xff]
  %v2373 = vld [vmem:[%s2363 + $0x38] sm:$0xf]
  %v2374 = vld [vmem:[%s2363 + $0x3c] sm:$0xff]
  %v2375 = vld [vmem:[%s2363 + $0x44] sm:$0xf]
  %v2376 = vld [vmem:[%s2363 + $0x48] sm:$0xff]
  %v2377 = vld [vmem:[%s2363 + $0x50] sm:$0xf]
  %v2378 = vld [vmem:[%s2363 + $0x54] sm:$0xff]
  %v2379 = vld [vmem:[%s2363 + $0x5c] sm:$0xf]
  %v2380 = vld [vmem:[%s2363 + $0x60] sm:$0xff]
  %v2381 = vld [vmem:[%s2363 + $0x68] sm:$0xf]
  %v2382 = vld [vmem:[%s2363 + $0x6c] sm:$0xff]
  %v2383 = vld [vmem:[%s2363 + $0x74] sm:$0xf]
  %v2384 = vld [vmem:[%s2363 + $0x78] sm:$0xff]
  %v2385 = vld [vmem:[%s2363 + $0x80] sm:$0xf]
  %v2386 = vld [vmem:[%s2363 + $0x84] sm:$0xff]
  %v2387 = vld [vmem:[%s2363 + $0x8c] sm:$0xf]
  %v2388 = vld [vmem:[%s2363 + $0x90] sm:$0xff]
  %v2389 = vld [vmem:[%s2363 + $0x98] sm:$0xf]
  %v2390 = vld [vmem:[%s2363 + $0x9c] sm:$0xff]
  %v2391 = vld [vmem:[%s2363 + $0xa4] sm:$0xf]
  %v2392 = vld [vmem:[%s2363 + $0xa8] sm:$0xff]
  %v2393 = vld [vmem:[%s2363 + $0xb0] sm:$0xf]
  %v2394 = vld [vmem:[%s2363 + $0xb4] sm:$0xff]
  %v2395 = vld [vmem:[%s2363 + $0xbc] sm:$0xf]
  %v2396 = vld [vmem:[%s2363 + $0xc0] sm:$0xff]
  %v2397 = vld [vmem:[%s2363 + $0xc8] sm:$0xf]
  %v2398 = vld [vmem:[%s2363 + $0xcc] sm:$0xff]
  %v2399 = vld [vmem:[%s2363 + $0xd4] sm:$0xf]
  %v2400 = vld [vmem:[%s2363 + $0xd8] sm:$0xff]
  %v2401 = vld [vmem:[%s2363 + $0xe0] sm:$0xf]
  %v2402 = vld [vmem:[%s2363 + $0xe4] sm:$0xff]
  %v2403 = vld [vmem:[%s2363 + $0xec] sm:$0xf]
  %v2404 = vld [vmem:[%s2363 + $0xf0] sm:$0xff]
  %v2405 = vld [vmem:[%s2363 + $0xf8] sm:$0xf]
  %v2406 = vld [vmem:[%s2363 + $0xfc] sm:$0xff]
  %v2407 = vld [vmem:[%s2363 + $0x104] sm:$0xf]
  %v2408 = vld [vmem:[%s2363 + $0x108] sm:$0xff]
  %v2409 = vld [vmem:[%s2363 + $0x110] sm:$0xf]
  %v2410 = vld [vmem:[%s2363 + $0x114] sm:$0xff]
  %v2411 = vld [vmem:[%s2363 + $0x11c] sm:$0xf]
  %v2412 = vld [vmem:[%s2363 + $0x120] sm:$0xff]
  %v2413 = vld [vmem:[%s2363 + $0x128] sm:$0xf]
  %v2414 = vld [vmem:[%s2363 + $0x12c] sm:$0xff]
  %v2415 = vld [vmem:[%s2363 + $0x134] sm:$0xf]
  %v2416 = vld [vmem:[%s2363 + $0x138] sm:$0xff]
  %v2417 = vld [vmem:[%s2363 + $0x140] sm:$0xf]
  %v2418 = vld [vmem:[%s2363 + $0x144] sm:$0xff]
  %v2419 = vld [vmem:[%s2363 + $0x14c] sm:$0xf]
  %v2420 = vld [vmem:[%s2363 + $0x150] sm:$0xff]
  %v2421 = vld [vmem:[%s2363 + $0x158] sm:$0xf]
  %v2422 = vld [vmem:[%s2363 + $0x15c] sm:$0xff]
  %v2423 = vld [vmem:[%s2363 + $0x164] sm:$0xf]
  %v2424 = vld [vmem:[%s2363 + $0x168] sm:$0xff]
  %v2425 = vld [vmem:[%s2363 + $0x170] sm:$0xf]
  %v2426 = vld [vmem:[%s2363 + $0x174] sm:$0xff]
  %v2427 = vld [vmem:[%s2363 + $0x17c] sm:$0xf]
  %v2428 = vld [vmem:[%s2363 + $0x180] sm:$0xff]
  %v2429 = vld [vmem:[%s2363 + $0x188] sm:$0xf]
  %v2430 = vld [vmem:[%s2363 + $0x18c] sm:$0xff]
  %v2431 = vld [vmem:[%s2363 + $0x194] sm:$0xf]
  %v2432 = vld [vmem:[%s2363 + $0x198] sm:$0xff]
  %v2433 = vld [vmem:[%s2363 + $0x1a0] sm:$0xf]
  %v2434 = vld [vmem:[%s2363 + $0x1a4] sm:$0xff]
  %v2435 = vld [vmem:[%s2363 + $0x1ac] sm:$0xf]
  %v2436 = vld [vmem:[%s2363 + $0x1b0] sm:$0xff]
  %v2437 = vld [vmem:[%s2363 + $0x1b8] sm:$0xf]
  %v2438 = vld [vmem:[%s2363 + $0x1bc] sm:$0xff]
  %v2439 = vld [vmem:[%s2363 + $0x1c4] sm:$0xf]
  %v2440 = vld [vmem:[%s2363 + $0x1c8] sm:$0xff]
  %v2441 = vld [vmem:[%s2363 + $0x1d0] sm:$0xf]
  %v2442 = vld [vmem:[%s2363 + $0x1d4] sm:$0xff]
  %v2443 = vld [vmem:[%s2363 + $0x1dc] sm:$0xf]
  %v2444 = vld [vmem:[%s2363 + $0x1e0] sm:$0xff]
  %v2445 = vld [vmem:[%s2363 + $0x1e8] sm:$0xf]
  %v2446 = vld [vmem:[%s2363 + $0x1ec] sm:$0xff]
  %v2447 = vld [vmem:[%s2363 + $0x1f4] sm:$0xf]
  %v2448 = vld [vmem:[%s2363 + $0x1f8] sm:$0xff]
  %v2449 = vld [vmem:[%s2363 + $0x200] sm:$0xf]
  %v2450 = vld [vmem:[%s2363 + $0x204] sm:$0xff]
  %v2451 = vld [vmem:[%s2363 + $0x20c] sm:$0xf]
  %v2452 = vld [vmem:[%s2363 + $0x210] sm:$0xff]
  %v2453 = vld [vmem:[%s2363 + $0x218] sm:$0xf]
  %v2454 = vld [vmem:[%s2363 + $0x21c] sm:$0xff]
  %v2455 = vld [vmem:[%s2363 + $0x224] sm:$0xf]
  %v2456 = vld [vmem:[%s2363 + $0x228] sm:$0xff]
  %v2457 = vld [vmem:[%s2363 + $0x230] sm:$0xf]
  %v2458 = vld [vmem:[%s2363 + $0x234] sm:$0xff]
  %v2459 = vld [vmem:[%s2363 + $0x23c] sm:$0xf]
  %v2556 = vunpack.c.l.b16 %v2364
  %v2557 = vunpack.c.h.b16 %v2364
  %v2558 = vunpack.c.l.b16 %v2365
  %v2559 = vunpack.c.l.b16 %v2366
  %v2560 = vunpack.c.h.b16 %v2366
  %v2561 = vunpack.c.l.b16 %v2367
  %v2562 = vunpack.c.l.b16 %v2368
  %v2563 = vunpack.c.h.b16 %v2368
  %v2564 = vunpack.c.l.b16 %v2369
  %v2565 = vunpack.c.l.b16 %v2370
  %v2566 = vunpack.c.h.b16 %v2370
  %v2567 = vunpack.c.l.b16 %v2371
  %v2568 = vunpack.c.l.b16 %v2372
  %v2569 = vunpack.c.h.b16 %v2372
  %v2570 = vunpack.c.l.b16 %v2373
  %v2571 = vunpack.c.l.b16 %v2374
  %v2572 = vunpack.c.h.b16 %v2374
  %v2573 = vunpack.c.l.b16 %v2375
  %v2574 = vunpack.c.l.b16 %v2376
  %v2575 = vunpack.c.h.b16 %v2376
  %v2576 = vunpack.c.l.b16 %v2377
  %v2577 = vunpack.c.l.b16 %v2378
  %v2578 = vunpack.c.h.b16 %v2378
  %v2579 = vunpack.c.l.b16 %v2379
  %v2580 = vunpack.c.l.b16 %v2380
  %v2581 = vunpack.c.h.b16 %v2380
  %v2582 = vunpack.c.l.b16 %v2381
  %v2583 = vunpack.c.l.b16 %v2382
  %v2584 = vunpack.c.h.b16 %v2382
  %v2585 = vunpack.c.l.b16 %v2383
  %v2586 = vunpack.c.l.b16 %v2384
  %v2587 = vunpack.c.h.b16 %v2384
  %v2588 = vunpack.c.l.b16 %v2385
  %v2589 = vunpack.c.l.b16 %v2386
  %v2590 = vunpack.c.h.b16 %v2386
  %v2591 = vunpack.c.l.b16 %v2387
  %v2592 = vunpack.c.l.b16 %v2388
  %v2593 = vunpack.c.h.b16 %v2388
  %v2594 = vunpack.c.l.b16 %v2389
  %v2595 = vunpack.c.l.b16 %v2390
  %v2596 = vunpack.c.h.b16 %v2390
  %v2597 = vunpack.c.l.b16 %v2391
  %v2598 = vunpack.c.l.b16 %v2392
  %v2599 = vunpack.c.h.b16 %v2392
  %v2600 = vunpack.c.l.b16 %v2393
  %v2601 = vunpack.c.l.b16 %v2394
  %v2602 = vunpack.c.h.b16 %v2394
  %v2603 = vunpack.c.l.b16 %v2395
  %v2604 = vunpack.c.l.b16 %v2396
  %v2605 = vunpack.c.h.b16 %v2396
  %v2606 = vunpack.c.l.b16 %v2397
  %v2607 = vunpack.c.l.b16 %v2398
  %v2608 = vunpack.c.h.b16 %v2398
  %v2609 = vunpack.c.l.b16 %v2399
  %v2610 = vunpack.c.l.b16 %v2400
  %v2611 = vunpack.c.h.b16 %v2400
  %v2612 = vunpack.c.l.b16 %v2401
  %v2613 = vunpack.c.l.b16 %v2402
  %v2614 = vunpack.c.h.b16 %v2402
  %v2615 = vunpack.c.l.b16 %v2403
  %v2616 = vunpack.c.l.b16 %v2404
  %v2617 = vunpack.c.h.b16 %v2404
  %v2618 = vunpack.c.l.b16 %v2405
  %v2619 = vunpack.c.l.b16 %v2406
  %v2620 = vunpack.c.h.b16 %v2406
  %v2621 = vunpack.c.l.b16 %v2407
  %v2622 = vunpack.c.l.b16 %v2408
  %v2623 = vunpack.c.h.b16 %v2408
  %v2624 = vunpack.c.l.b16 %v2409
  %v2625 = vunpack.c.l.b16 %v2410
  %v2626 = vunpack.c.h.b16 %v2410
  %v2627 = vunpack.c.l.b16 %v2411
  %v2628 = vunpack.c.l.b16 %v2412
  %v2629 = vunpack.c.h.b16 %v2412
  %v2630 = vunpack.c.l.b16 %v2413
  %v2631 = vunpack.c.l.b16 %v2414
  %v2632 = vunpack.c.h.b16 %v2414
  %v2633 = vunpack.c.l.b16 %v2415
  %v2634 = vunpack.c.l.b16 %v2416
  %v2635 = vunpack.c.h.b16 %v2416
  %v2636 = vunpack.c.l.b16 %v2417
  %v2637 = vunpack.c.l.b16 %v2418
  %v2638 = vunpack.c.h.b16 %v2418
  %v2639 = vunpack.c.l.b16 %v2419
  %v2640 = vunpack.c.l.b16 %v2420
  %v2641 = vunpack.c.h.b16 %v2420
  %v2642 = vunpack.c.l.b16 %v2421
  %v2643 = vunpack.c.l.b16 %v2422
  %v2644 = vunpack.c.h.b16 %v2422
  %v2645 = vunpack.c.l.b16 %v2423
  %v2646 = vunpack.c.l.b16 %v2424
  %v2647 = vunpack.c.h.b16 %v2424
  %v2648 = vunpack.c.l.b16 %v2425
  %v2649 = vunpack.c.l.b16 %v2426
  %v2650 = vunpack.c.h.b16 %v2426
  %v2651 = vunpack.c.l.b16 %v2427
  %v2652 = vunpack.c.l.b16 %v2428
  %v2653 = vunpack.c.h.b16 %v2428
  %v2654 = vunpack.c.l.b16 %v2429
  %v2655 = vunpack.c.l.b16 %v2430
  %v2656 = vunpack.c.h.b16 %v2430
  %v2657 = vunpack.c.l.b16 %v2431
  %v2658 = vunpack.c.l.b16 %v2432
  %v2659 = vunpack.c.h.b16 %v2432
  %v2660 = vunpack.c.l.b16 %v2433
  %v2661 = vunpack.c.l.b16 %v2434
  %v2662 = vunpack.c.h.b16 %v2434
  %v2663 = vunpack.c.l.b16 %v2435
  %v2664 = vunpack.c.l.b16 %v2436
  %v2665 = vunpack.c.h.b16 %v2436
  %v2666 = vunpack.c.l.b16 %v2437
  %v2667 = vunpack.c.l.b16 %v2438
  %v2668 = vunpack.c.h.b16 %v2438
  %v2669 = vunpack.c.l.b16 %v2439
  %v2670 = vunpack.c.l.b16 %v2440
  %v2671 = vunpack.c.h.b16 %v2440
  %v2672 = vunpack.c.l.b16 %v2441
  %v2673 = vunpack.c.l.b16 %v2442
  %v2674 = vunpack.c.h.b16 %v2442
  %v2675 = vunpack.c.l.b16 %v2443
  %v2676 = vunpack.c.l.b16 %v2444
  %v2677 = vunpack.c.h.b16 %v2444
  %v2678 = vunpack.c.l.b16 %v2445
  %v2679 = vunpack.c.l.b16 %v2446
  %v2680 = vunpack.c.h.b16 %v2446
  %v2681 = vunpack.c.l.b16 %v2447
  %v2682 = vunpack.c.l.b16 %v2448
  %v2683 = vunpack.c.h.b16 %v2448
  %v2684 = vunpack.c.l.b16 %v2449
  %v2685 = vunpack.c.l.b16 %v2450
  %v2686 = vunpack.c.h.b16 %v2450
  %v2687 = vunpack.c.l.b16 %v2451
  %v2688 = vunpack.c.l.b16 %v2452
  %v2689 = vunpack.c.h.b16 %v2452
  %v2690 = vunpack.c.l.b16 %v2453
  %v2691 = vunpack.c.l.b16 %v2454
  %v2692 = vunpack.c.h.b16 %v2454
  %v2693 = vunpack.c.l.b16 %v2455
  %v2694 = vunpack.c.l.b16 %v2456
  %v2695 = vunpack.c.h.b16 %v2456
  %v2696 = vunpack.c.l.b16 %v2457
  %v2697 = vunpack.c.l.b16 %v2458
  %v2698 = vunpack.c.h.b16 %v2458
  %v2699 = vunpack.c.l.b16 %v2459
  %v2700 = vpack.c.b16 %v2559, %v2556
  %v2701 = vpack.c.b16 %v2560, %v2557
  %v2702 = vpack.c.b16 %v2561, %v2558
  %v2703 = vpack.c.b16 %v2565, %v2562
  %v2704 = vpack.c.b16 %v2566, %v2563
  %v2705 = vpack.c.b16 %v2567, %v2564
  %v2706 = vpack.c.b16 %v2571, %v2568
  %v2707 = vpack.c.b16 %v2572, %v2569
  %v2708 = vpack.c.b16 %v2573, %v2570
  %v2709 = vpack.c.b16 %v2577, %v2574
  %v2710 = vpack.c.b16 %v2578, %v2575
  %v2711 = vpack.c.b16 %v2579, %v2576
  %v2712 = vpack.c.b16 %v2583, %v2580
  %v2713 = vpack.c.b16 %v2584, %v2581
  %v2714 = vpack.c.b16 %v2585, %v2582
  %v2715 = vpack.c.b16 %v2589, %v2586
  %v2716 = vpack.c.b16 %v2590, %v2587
  %v2717 = vpack.c.b16 %v2591, %v2588
  %v2718 = vpack.c.b16 %v2595, %v2592
  %v2719 = vpack.c.b16 %v2596, %v2593
  %v2720 = vpack.c.b16 %v2597, %v2594
  %v2721 = vpack.c.b16 %v2601, %v2598
  %v2722 = vpack.c.b16 %v2602, %v2599
  %v2723 = vpack.c.b16 %v2603, %v2600
  %v2724 = vpack.c.b16 %v2607, %v2604
  %v2725 = vpack.c.b16 %v2608, %v2605
  %v2726 = vpack.c.b16 %v2609, %v2606
  %v2727 = vpack.c.b16 %v2613, %v2610
  %v2728 = vpack.c.b16 %v2614, %v2611
  %v2729 = vpack.c.b16 %v2615, %v2612
  %v2730 = vpack.c.b16 %v2619, %v2616
  %v2731 = vpack.c.b16 %v2620, %v2617
  %v2732 = vpack.c.b16 %v2621, %v2618
  %v2733 = vpack.c.b16 %v2625, %v2622
  %v2734 = vpack.c.b16 %v2626, %v2623
  %v2735 = vpack.c.b16 %v2627, %v2624
  %v2736 = vpack.c.b16 %v2631, %v2628
  %v2737 = vpack.c.b16 %v2632, %v2629
  %v2738 = vpack.c.b16 %v2633, %v2630
  %v2739 = vpack.c.b16 %v2637, %v2634
  %v2740 = vpack.c.b16 %v2638, %v2635
  %v2741 = vpack.c.b16 %v2639, %v2636
  %v2742 = vpack.c.b16 %v2643, %v2640
  %v2743 = vpack.c.b16 %v2644, %v2641
  %v2744 = vpack.c.b16 %v2645, %v2642
  %v2745 = vpack.c.b16 %v2649, %v2646
  %v2746 = vpack.c.b16 %v2650, %v2647
  %v2747 = vpack.c.b16 %v2651, %v2648
  %v2748 = vpack.c.b16 %v2655, %v2652
  %v2749 = vpack.c.b16 %v2656, %v2653
  %v2750 = vpack.c.b16 %v2657, %v2654
  %v2751 = vpack.c.b16 %v2661, %v2658
  %v2752 = vpack.c.b16 %v2662, %v2659
  %v2753 = vpack.c.b16 %v2663, %v2660
  %v2754 = vpack.c.b16 %v2667, %v2664
  %v2755 = vpack.c.b16 %v2668, %v2665
  %v2756 = vpack.c.b16 %v2669, %v2666
  %v2757 = vpack.c.b16 %v2673, %v2670
  %v2758 = vpack.c.b16 %v2674, %v2671
  %v2759 = vpack.c.b16 %v2675, %v2672
  %v2760 = vpack.c.b16 %v2679, %v2676
  %v2761 = vpack.c.b16 %v2680, %v2677
  %v2762 = vpack.c.b16 %v2681, %v2678
  %v2763 = vpack.c.b16 %v2685, %v2682
  %v2764 = vpack.c.b16 %v2686, %v2683
  %v2765 = vpack.c.b16 %v2687, %v2684
  %v2766 = vpack.c.b16 %v2691, %v2688
  %v2767 = vpack.c.b16 %v2692, %v2689
  %v2768 = vpack.c.b16 %v2693, %v2690
  %v2769 = vpack.c.b16 %v2697, %v2694
  %v2770 = vpack.c.b16 %v2698, %v2695
  %v2771 = vpack.c.b16 %v2699, %v2696
  %2844 = vmatprep.subr.bf16.mxu0 %v2701
  %2845 = vmatpush1.bf16.msra.mxu0 %v2700
  %2846 = vmatprep.subr.bf16.mxu0 %v2704
  %2847 = vmatpush1.bf16.msra.mxu0 %v2703
  %2848 = vmatprep.subr.bf16.mxu0 %v2707
  %2849 = vmatpush1.bf16.msra.mxu0 %v2706
  %2850 = vmatprep.subr.bf16.mxu0 %v2710
  %2851 = vmatpush1.bf16.msra.mxu0 %v2709
  %2852 = vmatprep.subr.bf16.mxu0 %v2713
  %2853 = vmatpush1.bf16.msra.mxu0 %v2712
  %2854 = vmatprep.subr.bf16.mxu0 %v2716
  %2855 = vmatpush1.bf16.msra.mxu0 %v2715
  %2856 = vmatprep.subr.bf16.mxu0 %v2719
  %2857 = vmatpush1.bf16.msra.mxu0 %v2718
  %2858 = vmatprep.subr.bf16.mxu0 %v2722
  %2859 = vmatpush1.bf16.msra.mxu0 %v2721
  %2860 = vmatprep.subr.bf16.mxu0 %v2725
  %2861 = vmatpush1.bf16.msra.mxu0 %v2724
  %2862 = vmatprep.subr.bf16.mxu0 %v2728
  %2863 = vmatpush1.bf16.msra.mxu0 %v2727
  %2864 = vmatprep.subr.bf16.mxu0 %v2731
  %2865 = vmatpush1.bf16.msra.mxu0 %v2730
  %2866 = vmatprep.subr.bf16.mxu0 %v2734
  %2867 = vmatpush1.bf16.msra.mxu0 %v2733
  %2868 = vmatprep.subr.bf16.mxu0 %v2737
  %2869 = vmatpush1.bf16.msra.mxu0 %v2736
  %2870 = vmatprep.subr.bf16.mxu0 %v2740
  %2871 = vmatpush1.bf16.msra.mxu0 %v2739
  %2872 = vmatprep.subr.bf16.mxu0 %v2743
  %2873 = vmatpush1.bf16.msra.mxu0 %v2742
  %2874 = vmatprep.subr.bf16.mxu0 %v2746
  %2875 = vmatpush1.bf16.msra.mxu0 %v2745
  %2876 = vmatprep.mubr.bf16.mxu0 %v1091
  %2877 = vmatmul.mubr.bf16.gmra.mrb[0].mxu0 %v1090
  %v2878 = vpop.f32.mrb[0].mxu0
  %v2879 = vadd.f32 0.0, %v2878
  %v2880 = vpop.f32.mrb[0].mxu0
  %v2881 = vadd.f32 0.0, %v2880
  %v2882 = vpop.f32.mrb[0].mxu0
  %v2883 = vadd.f32 0.0, %v2882
  %v2884 = vpop.f32.mrb[0].mxu0
  %v2885 = vadd.f32 0.0, %v2884
  %2886 = vmatprep.mubr.bf16.mxu0 %v1094
  %2887 = vmatmul.mubr.bf16.gmra.mrb[0].mxu0 %v1093
  %v2888 = vpop.f32.mrb[0].mxu0
  %v2889 = vadd.f32 0.0, %v2888
  %v2890 = vpop.f32.mrb[0].mxu0
  %v2891 = vadd.f32 0.0, %v2890
  %v2892 = vpop.f32.mrb[0].mxu0
  %v2893 = vpop.f32.mrb[0].mxu0
  %2894 = vdwg.mxu0
  %2895 = vmatprep.subr.bf16.mxu0 %v2749
  %2896 = vmatpush1.bf16.msra.mxu0 %v2748
  %2897 = vmatprep.subr.bf16.mxu0 %v2752
  %2898 = vmatpush1.bf16.msra.mxu0 %v2751
  %2899 = vmatprep.subr.bf16.mxu0 %v2755
  %2900 = vmatpush1.bf16.msra.mxu0 %v2754
  %2901 = vmatprep.subr.bf16.mxu0 %v2758
  %2902 = vmatpush1.bf16.msra.mxu0 %v2757
  %2903 = vmatprep.subr.bf16.mxu0 %v2761
  %2904 = vmatpush1.bf16.msra.mxu0 %v2760
  %2905 = vmatprep.subr.bf16.mxu0 %v2764
  %2906 = vmatpush1.bf16.msra.mxu0 %v2763
  %2907 = vmatprep.subr.bf16.mxu0 %v2767
  %2908 = vmatpush1.bf16.msra.mxu0 %v2766
  %2909 = vmatprep.subr.bf16.mxu0 %v2770
  %2910 = vmatpush1.bf16.msra.mxu0 %v2769
  %2911 = vmatprep.subr.bf16.mxu0 0
  %2912 = vmatpush1.bf16.msra.mxu0 0
  %2913 = vmatprep.subr.bf16.mxu0 0
  %2914 = vmatpush1.bf16.msra.mxu0 0
  %2915 = vmatprep.subr.bf16.mxu0 0
  %2916 = vmatpush1.bf16.msra.mxu0 0
  %2917 = vmatprep.subr.bf16.mxu0 0
  %2918 = vmatpush1.bf16.msra.mxu0 0
  %2919 = vmatprep.subr.bf16.mxu0 0
  %2920 = vmatpush1.bf16.msra.mxu0 0
  %2921 = vmatprep.subr.bf16.mxu0 0
  %2922 = vmatpush1.bf16.msra.mxu0 0
  %2923 = vmatprep.subr.bf16.mxu0 0
  %2924 = vmatpush1.bf16.msra.mxu0 0
  %2925 = vmatprep.subr.bf16.mxu0 0
  %2926 = vmatpush1.bf16.msra.mxu0 0
  %2927 = vmatprep.mubr.bf16.mxu0 0
  %2928 = vmatmul.mubr.bf16.gmra.mrb[0].mxu0 %v1092
  %v2929 = vpop.f32.mrb[0].mxu0
  %v2930 = vadd.f32 %v2879, %v2929
  %v2931 = vpop.f32.mrb[0].mxu0
  %v2932 = vadd.f32 %v2881, %v2931
  %v2933 = vpop.f32.mrb[0].mxu0
  %v2934 = vadd.f32 %v2883, %v2933
  %v2935 = vpop.f32.mrb[0].mxu0
  %v2936 = vadd.f32 %v2885, %v2935
  %2937 = vmatprep.mubr.bf16.mxu0 0
  %2938 = vmatmul.mubr.bf16.gmra.mrb[0].mxu0 %v1095
  %v2939 = vpop.f32.mrb[0].mxu0
  %v2940 = vadd.f32 %v2889, %v2939
  %v2941 = vpop.f32.mrb[0].mxu0
  %v2942 = vadd.f32 %v2891, %v2941
  %v2943 = vpop.f32.mrb[0].mxu0
  %v2944 = vpop.f32.mrb[0].mxu0
  %2945 = vdwg.mxu0
  %2946 = vmatprep.subr.bf16.mxu0 0
  %2947 = vmatpush1.bf16.msra.mxu0 %v2702
  %2948 = vmatprep.subr.bf16.mxu0 0
  %2949 = vmatpush1.bf16.msra.mxu0 %v2705
  %2950 = vmatprep.subr.bf16.mxu0 0
  %2951 = vmatpush1.bf16.msra.mxu0 %v2708
  %2952 = vmatprep.subr.bf16.mxu0 0
  %2953 = vmatpush1.bf16.msra.mxu0 %v2711
  %2954 = vmatprep.subr.bf16.mxu0 0
  %2955 = vmatpush1.bf16.msra.mxu0 %v2714
  %2956 = vmatprep.subr.bf16.mxu0 0
  %2957 = vmatpush1.bf16.msra.mxu0 %v2717
  %2958 = vmatprep.subr.bf16.mxu0 0
  %2959 = vmatpush1.bf16.msra.mxu0 %v2720
  %2960 = vmatprep.subr.bf16.mxu0 0
  %2961 = vmatpush1.bf16.msra.mxu0 %v2723
  %2962 = vmatprep.subr.bf16.mxu0 0
  %2963 = vmatpush1.bf16.msra.mxu0 %v2726
  %2964 = vmatprep.subr.bf16.mxu0 0
  %2965 = vmatpush1.bf16.msra.mxu0 %v2729
  %2966 = vmatprep.subr.bf16.mxu0 0
  %2967 = vmatpush1.bf16.msra.mxu0 %v2732
  %2968 = vmatprep.subr.bf16.mxu0 0
  %2969 = vmatpush1.bf16.msra.mxu0 %v2735
  %2970 = vmatprep.subr.bf16.mxu0 0
  %2971 = vmatpush1.bf16.msra.mxu0 %v2738
  %2972 = vmatprep.subr.bf16.mxu0 0
  %2973 = vmatpush1.bf16.msra.mxu0 %v2741
  %2974 = vmatprep.subr.bf16.mxu0 0
  %2975 = vmatpush1.bf16.msra.mxu0 %v2744
  %2976 = vmatprep.subr.bf16.mxu0 0
  %2977 = vmatpush1.bf16.msra.mxu0 %v2747
  %2978 = vmatprep.mubr.bf16.mxu0 %v1091
  %2979 = vmatmul.mubr.bf16.gmra.mrb[0].mxu0 %v1090
  %v2980 = vpop.f32.mrb[0].mxu0
  %v2981 = vadd.f32 0.0, %v2980
  %v2982 = vpop.f32.mrb[0].mxu0
  %v2983 = vpop.f32.mrb[0].mxu0
  %v2984 = vadd.f32 0.0, %v2983
  %v2985 = vpop.f32.mrb[0].mxu0
  %2986 = vmatprep.mubr.bf16.mxu0 %v1094
  %2987 = vmatmul.mubr.bf16.gmra.mrb[0].mxu0 %v1093
  %v2988 = vpop.f32.mrb[0].mxu0
  %v2989 = vadd.f32 0.0, %v2988
  %v2990 = vpop.f32.mrb[0].mxu0
  %v2991 = vpop.f32.mrb[0].mxu0
  %v2992 = vpop.f32.mrb[0].mxu0
  %2993 = vdwg.mxu0
  %2994 = vmatprep.subr.bf16.mxu0 0
  %2995 = vmatpush1.bf16.msra.mxu0 %v2750
  %2996 = vmatprep.subr.bf16.mxu0 0
  %2997 = vmatpush1.bf16.msra.mxu0 %v2753
  %2998 = vmatprep.subr.bf16.mxu0 0
  %2999 = vmatpush1.bf16.msra.mxu0 %v2756
  %3000 = vmatprep.subr.bf16.mxu0 0
  %3001 = vmatpush1.bf16.msra.mxu0 %v2759
  %3002 = vmatprep.subr.bf16.mxu0 0
  %3003 = vmatpush1.bf16.msra.mxu0 %v2762
  %3004 = vmatprep.subr.bf16.mxu0 0
  %3005 = vmatpush1.bf16.msra.mxu0 %v2765
  %3006 = vmatprep.subr.bf16.mxu0 0
  %3007 = vmatpush1.bf16.msra.mxu0 %v2768
  %3008 = vmatprep.subr.bf16.mxu0 0
  %3009 = vmatpush1.bf16.msra.mxu0 %v2771
  %3010 = vmatprep.subr.bf16.mxu0 0
  %3011 = vmatpush1.bf16.msra.mxu0 0
  %3012 = vmatprep.subr.bf16.mxu0 0
  %3013 = vmatpush1.bf16.msra.mxu0 0
  %3014 = vmatprep.subr.bf16.mxu0 0
  %3015 = vmatpush1.bf16.msra.mxu0 0
  %3016 = vmatprep.subr.bf16.mxu0 0
  %3017 = vmatpush1.bf16.msra.mxu0 0
  %3018 = vmatprep.subr.bf16.mxu0 0
  %3019 = vmatpush1.bf16.msra.mxu0 0
  %3020 = vmatprep.subr.bf16.mxu0 0
  %3021 = vmatpush1.bf16.msra.mxu0 0
  %3022 = vmatprep.subr.bf16.mxu0 0
  %3023 = vmatpush1.bf16.msra.mxu0 0
  %3024 = vmatprep.subr.bf16.mxu0 0
  %3025 = vmatpush1.bf16.msra.mxu0 0
  %3026 = vmatprep.mubr.bf16.mxu0 0
  %3027 = vmatmul.mubr.bf16.gmra.mrb[0].mxu0 %v1092
  %v3028 = vpop.f32.mrb[0].mxu0
  %v3029 = vadd.f32 %v2981, %v3028
  %v3030 = vpop.f32.mrb[0].mxu0
  %v3031 = vpop.f32.mrb[0].mxu0
  %v3032 = vadd.f32 %v2984, %v3031
  %v3033 = vpop.f32.mrb[0].mxu0
  %3034 = vmatprep.mubr.bf16.mxu0 0
  %3035 = vmatmul.mubr.bf16.gmra.mrb[0].mxu0 %v1095
  %v3036 = vpop.f32.mrb[0].mxu0
  %v3037 = vadd.f32 %v2989, %v3036
  %v3038 = vpop.f32.mrb[0].mxu0
  %v3039 = vpop.f32.mrb[0].mxu0
  %v3040 = vpop.f32.mrb[0].mxu0
  %3041 = vdwg.mxu0
  %v3048 = vrot.slane %v2251, 1
  %v3049 = vrot.slane %v2255, 1
  %v3050 = vsel %vm760, %v3048, %v3049
  %v3051 = vrot.slane %v2253, 1
  %v3052 = vrot.slane %v2257, 1
  %v3053 = vsel %vm760, %v3051, %v3052
  %v3054 = vrot.slane %v2350, 1
  %v3055 = vrot.slane %v2353, 1
  %v3056 = vsel %vm760, %v3054, %v3055
  %v3063 = vadd.f32 %v1572, %v3050
  %v3064 = vadd.f32 %v1574, %v3053
  %v3065 = vadd.f32 %v1671, %v3056
  %v3066 = vadd.f32 %v1576, %v3049
  %v3067 = vadd.f32 %v1578, %v3052
  %v3068 = vadd.f32 %v1674, %v3055
  %vm3075 = vcmask 1045504
  %v3076 = vrot.slane %v2930, 2
  %v3077 = vrot.slane %v2934, 2
  %v3078 = vsel %vm3075, %v3076, %v3077
  %v3079 = vrot.slane %v2932, 2
  %v3080 = vrot.slane %v2936, 2
  %v3081 = vsel %vm3075, %v3079, %v3080
  %v3082 = vrot.slane %v3029, 2
  %v3083 = vrot.slane %v3032, 2
  %v3084 = vsel %vm3075, %v3082, %v3083
  %v3091 = vadd.f32 %v3063, %v3078
  %v3092 = vadd.f32 %v3064, %v3081
  %v3093 = vadd.f32 %v3065, %v3084
  %v3094 = vadd.f32 %v3066, %v3077
  %v3095 = vadd.f32 %v3067, %v3080
  %v3096 = vadd.f32 %v3068, %v3083
  %v3097 = vld [vmem:[%s5] sm:$0x7]
  %v3099 = vlaneseq
  %v3100 = vshrl.u32 %v3099, 7
  %v3101 = vsub.s32 0, %v3100
  %v3102 = vrot.slane %v3097, %v3101
  %v3103 = vlaneseq
  %v3104 = vshrl.u32 %v3103, 7
  %v3105 = vsub.s32 1, %v3104
  %v3106 = vrot.slane %v3097, %v3105
  %v3107 = vlaneseq
  %v3108 = vshrl.u32 %v3107, 7
  %v3109 = vsub.s32 2, %v3108
  %v3110 = vrot.slane %v3097, %v3109
  %v3114 = vadd.f32 %v3091, %v3102
  %v3115 = vadd.f32 %v3092, %v3106
  %v3116 = vadd.f32 %v3093, %v3110
  %v3117 = vadd.f32 %v3094, %v3102
  %v3118 = vadd.f32 %v3095, %v3106
  %v3119 = vadd.f32 %v3096, %v3110
  %v3120 = vmax.f32 %v3114, 0.0
  %v3121 = vmax.f32 %v3115, 0.0
  %v3122 = vmax.f32 %v3116, 0.0
  %v3123 = vmax.f32 %v3117, 0.0
  %v3124 = vmax.f32 %v3118, 0.0
  %v3125 = vmax.f32 %v3119, 0.0
  %v3126 = vpack.c.bf16 %v3123, %v3120
  %v3127 = vpack.c.bf16 %v3124, %v3121
  %v3128 = vpack.c.bf16 %v3125, %v3122
  %v3132 = vunpack.c.l.b16 %v3126
  %v3133 = vunpack.c.l.b16 %v3127
  %v3134 = vunpack.c.l.b16 %v3128
  %v3135 = vunpack.c.h.b16 %v3126
  %v3136 = vunpack.c.h.b16 %v3127
  %v3137 = vunpack.c.h.b16 %v3128
  %v3138 = vpack.c.b16 %v3133, %v3132
  %v3139 = vpack.c.b16 %v3134, %v3134
  %v3140 = vpack.c.b16 %v3136, %v3135
  %v3141 = vpack.c.b16 %v3137, %v3137
  %3146 = vst [vmem:[#allocation5] sm:$0xff] %v3138
  %3147 = vst [vmem:[#allocation5 + $0x8] sm:$0xf] %v3139
  %vm3148 = vcmask 1040384
  %vm3149 = vsmask.f32 256
  %vm3150 = vmand %vm3148, %vm3149
  %vm3151 = vcmask 1044484
  %vm3152 = vsmask.f32 4352
  %vm3153 = vmand %vm3151, %vm3152
  %vm3154 = vmor %vm3153, %vm3150
  %v3155 = vld [vmem:[#allocation5 + $0xc] sm:$0x11]
  %v3156 = vsel %vm3154, %v3140, %v3155
  %3157 = vst [vmem:[#allocation5 + $0xc] sm:$0x11] %v3156
  %v3158 = vld [vmem:[#allocation5 + $0x14] sm:$0x1]
  %v3159 = vsel %vm3150, %v3141, %v3158
  %3160 = vst [vmem:[#allocation5 + $0x14] sm:$0x1] %v3159
  %v3164 = vrot.slane %v2261, 1
  %v3165 = vsel %vm760, %v3049, %v3164
  %v3166 = vrot.slane %v2263, 1
  %v3167 = vsel %vm760, %v3052, %v3166
  %v3168 = vrot.slane %v2358, 1
  %v3169 = vsel %vm760, %v3055, %v3168
  %v3176 = vadd.f32 %v1576, %v3165
  %v3177 = vadd.f32 %v1578, %v3167
  %v3178 = vadd.f32 %v1674, %v3169
  %v3179 = vadd.f32 %v1582, %v3164
  %v3180 = vadd.f32 %v1584, %v3166
  %v3181 = vadd.f32 %v1679, %v3168
  %v3185 = vrot.slane %v2940, 2
  %v3186 = vsel %vm3075, %v3077, %v3185
  %v3187 = vrot.slane %v2942, 2
  %v3188 = vsel %vm3075, %v3080, %v3187
  %v3189 = vrot.slane %v3037, 2
  %v3190 = vsel %vm3075, %v3083, %v3189
  %v3197 = vadd.f32 %v3176, %v3186
  %v3198 = vadd.f32 %v3177, %v3188
  %v3199 = vadd.f32 %v3178, %v3190
  %v3200 = vadd.f32 %v3179, %v3185
  %v3201 = vadd.f32 %v3180, %v3187
  %v3202 = vadd.f32 %v3181, %v3189
  %v3203 = vld [vmem:[%s5] sm:$0x7]
  %v3205 = vlaneseq
  %v3206 = vshrl.u32 %v3205, 7
  %v3207 = vsub.s32 0, %v3206
  %v3208 = vrot.slane %v3203, %v3207
  %v3209 = vlaneseq
  %v3210 = vshrl.u32 %v3209, 7
  %v3211 = vsub.s32 1, %v3210
  %v3212 = vrot.slane %v3203, %v3211
  %v3213 = vlaneseq
  %v3214 = vshrl.u32 %v3213, 7
  %v3215 = vsub.s32 2, %v3214
  %v3216 = vrot.slane %v3203, %v3215
  %v3220 = vadd.f32 %v3197, %v3208
  %v3221 = vadd.f32 %v3198, %v3212
  %v3222 = vadd.f32 %v3199, %v3216
  %v3223 = vadd.f32 %v3200, %v3208
  %v3224 = vadd.f32 %v3201, %v3212
  %v3225 = vadd.f32 %v3202, %v3216
  %v3226 = vmax.f32 %v3220, 0.0
  %v3227 = vmax.f32 %v3221, 0.0
  %v3228 = vmax.f32 %v3222, 0.0
  %v3229 = vmax.f32 %v3223, 0.0
  %v3230 = vmax.f32 %v3224, 0.0
  %v3231 = vmax.f32 %v3225, 0.0
  %v3232 = vpack.c.bf16 %v3229, %v3226
  %v3233 = vpack.c.bf16 %v3230, %v3227
  %v3234 = vpack.c.bf16 %v3231, %v3228
  %v3238 = vunpack.c.l.b16 %v3232
  %v3239 = vunpack.c.l.b16 %v3233
  %v3240 = vunpack.c.l.b16 %v3234
  %v3241 = vunpack.c.h.b16 %v3232
  %v3242 = vunpack.c.h.b16 %v3233
  %v3243 = vunpack.c.h.b16 %v3234
  %v3244 = vpack.c.b16 %v3239, %v3238
  %v3245 = vpack.c.b16 %v3240, %v3240
  %v3246 = vpack.c.b16 %v3242, %v3241
  %v3247 = vpack.c.b16 %v3243, %v3243
  %vm3248 = vcmask 1042432
  %vm3249 = vcmask 1046532
  %vm3250 = vmor %vm3248, %vm3249
  %v3251 = vrot.slane %v3244, 5
  %v3252 = vrot.slane %v3251, 4
  %v3253 = vrot.slane %v3246, 5
  %v3254 = vsel %vm3250, %v3252, %v3253
  %v3255 = vrot.slane %v3245, 5
  %v3256 = vrot.slane %v3255, 4
  %v3257 = vrot.slane %v3247, 5
  %v3258 = vsel %vm3250, %v3256, %v3257
  %v3259 = vrot.slane %v3253, 4
  %v3260 = vrot.slane %v3257, 4
  %vm3265 = vcmask 1043456
  %vm3266 = vsmask.f32 7938
  %vm3267 = vmand %vm3265, %vm3266
  %vm3268 = vcmask 1047556
  %vm3269 = vsmask.f32 7954
  %vm3270 = vmand %vm3268, %vm3269
  %vm3271 = vmor %vm3270, %vm3267
  %v3272 = vld [vmem:[#allocation5 + $0xc] sm:$0xff]
  %v3273 = vsel %vm3271, %v3254, %v3272
  %3274 = vst [vmem:[#allocation5 + $0xc] sm:$0xff] %v3273
  %v3275 = vld [vmem:[#allocation5 + $0x14] sm:$0xf]
  %v3276 = vsel %vm3267, %v3258, %v3275
  %3277 = vst [vmem:[#allocation5 + $0x14] sm:$0xf] %v3276
  %3278 = vst [vmem:[#allocation5 + $0x18] sm:$0x11] %v3259
  %3279 = vst [vmem:[#allocation5 + $0x20] sm:$0x1] %v3260
  %v3280 = vld [vmem:[#allocation5] sm:$0xff]
  %v3281 = vld [vmem:[#allocation5 + $0x8] sm:$0xf]
  %v3282 = vld [vmem:[#allocation5 + $0xc] sm:$0xff]
  %v3283 = vld [vmem:[#allocation5 + $0x14] sm:$0xf]
  %v3284 = vld [vmem:[#allocation5 + $0x18] sm:$0x11]
  %v3285 = vld [vmem:[#allocation5 + $0x20] sm:$0x1]
  %v3286 = vld [vmem:[%s6] sm:$0xff]
  %v3287 = vld [vmem:[%s6 + $0x8] sm:$0xff]
  %v3288 = vld [vmem:[%s6 + $0x10] sm:$0xff]
  %v3289 = vld [vmem:[%s6 + $0x18] sm:$0xff]
  %v3290 = vld [vmem:[%s6 + $0x20] sm:$0xff]
  %v3291 = vld [vmem:[%s6 + $0x28] sm:$0xff]
  %v3292 = vld [vmem:[%s6 + $0x30] sm:$0xff]
  %v3293 = vld [vmem:[%s6 + $0x38] sm:$0xff]
  %v3294 = vld [vmem:[%s6 + $0x40] sm:$0xff]
  %v3295 = vld [vmem:[%s6 + $0x48] sm:$0xff]
  %v3296 = vld [vmem:[%s6 + $0x50] sm:$0xff]
  %v3297 = vld [vmem:[%s6 + $0x58] sm:$0xff]
  %v3298 = vld [vmem:[%s6 + $0x60] sm:$0xff]
  %v3299 = vld [vmem:[%s6 + $0x68] sm:$0xff]
  %v3300 = vld [vmem:[%s6 + $0x70] sm:$0xff]
  %v3301 = vld [vmem:[%s6 + $0x78] sm:$0xff]
  %v3302 = vld [vmem:[%s6 + $0x80] sm:$0xff]
  %v3303 = vld [vmem:[%s6 + $0x88] sm:$0xff]
  %v3304 = vld [vmem:[%s6 + $0x90] sm:$0xff]
  %v3305 = vld [vmem:[%s6 + $0x98] sm:$0xff]
  %v3306 = vld [vmem:[%s6 + $0xa0] sm:$0xff]
  %v3307 = vld [vmem:[%s6 + $0xa8] sm:$0xff]
  %v3308 = vld [vmem:[%s6 + $0xb0] sm:$0xff]
  %v3309 = vld [vmem:[%s6 + $0xb8] sm:$0xff]
  %v3310 = vld [vmem:[%s6 + $0xc0] sm:$0xff]
  %v3311 = vld [vmem:[%s6 + $0xc8] sm:$0xff]
  %v3312 = vld [vmem:[%s6 + $0xd0] sm:$0xff]
  %v3313 = vld [vmem:[%s6 + $0xd8] sm:$0xff]
  %v3314 = vld [vmem:[%s6 + $0xe0] sm:$0xff]
  %v3315 = vld [vmem:[%s6 + $0xe8] sm:$0xff]
  %v3316 = vld [vmem:[%s6 + $0xf0] sm:$0xff]
  %v3317 = vld [vmem:[%s6 + $0xf8] sm:$0xff]
  %v3318 = vld [vmem:[%s6 + $0x100] sm:$0xff]
  %v3319 = vld [vmem:[%s6 + $0x108] sm:$0xff]
  %v3320 = vld [vmem:[%s6 + $0x110] sm:$0xff]
  %v3321 = vld [vmem:[%s6 + $0x118] sm:$0xff]
  %v3322 = vld [vmem:[%s6 + $0x120] sm:$0xff]
  %v3323 = vld [vmem:[%s6 + $0x128] sm:$0xff]
  %v3324 = vld [vmem:[%s6 + $0x130] sm:$0xff]
  %v3325 = vld [vmem:[%s6 + $0x138] sm:$0xff]
  %v3326 = vld [vmem:[%s6 + $0x140] sm:$0xff]
  %v3327 = vld [vmem:[%s6 + $0x148] sm:$0xff]
  %v3328 = vld [vmem:[%s6 + $0x150] sm:$0xff]
  %v3329 = vld [vmem:[%s6 + $0x158] sm:$0xff]
  %v3330 = vld [vmem:[%s6 + $0x160] sm:$0xff]
  %v3331 = vld [vmem:[%s6 + $0x168] sm:$0xff]
  %v3332 = vld [vmem:[%s6 + $0x170] sm:$0xff]
  %v3333 = vld [vmem:[%s6 + $0x178] sm:$0xff]
  %v3340 = vunpack.c.l.b16 %v3280
  %v3341 = vunpack.c.h.b16 %v3280
  %v3342 = vunpack.c.l.b16 %v3281
  %v3343 = vunpack.c.l.b16 %v3282
  %v3344 = vunpack.c.h.b16 %v3282
  %v3345 = vunpack.c.l.b16 %v3283
  %v3346 = vunpack.c.l.b16 %v3284
  %v3347 = vunpack.c.h.b16 %v3284
  %v3348 = vunpack.c.l.b16 %v3285
  %v3349 = vpack.c.b16 %v3343, %v3340
  %v3350 = vpack.c.b16 %v3344, %v3341
  %v3351 = vpack.c.b16 %v3345, %v3342
  %v3352 = vpack.c.b16 %v3346, %v3346
  %v3353 = vpack.c.b16 %v3347, %v3347
  %v3354 = vpack.c.b16 %v3348, %v3348
  %v3409 = vunpack.c.l.b16 %v3286
  %v3410 = vunpack.c.h.b16 %v3286
  %v3411 = vunpack.c.l.b16 %v3287
  %v3412 = vunpack.c.h.b16 %v3287
  %v3413 = vunpack.c.l.b16 %v3288
  %v3414 = vunpack.c.h.b16 %v3288
  %v3415 = vunpack.c.l.b16 %v3289
  %v3416 = vunpack.c.h.b16 %v3289
  %v3417 = vunpack.c.l.b16 %v3290
  %v3418 = vunpack.c.h.b16 %v3290
  %v3419 = vunpack.c.l.b16 %v3291
  %v3420 = vunpack.c.h.b16 %v3291
  %v3421 = vunpack.c.l.b16 %v3292
  %v3422 = vunpack.c.h.b16 %v3292
  %v3423 = vunpack.c.l.b16 %v3293
  %v3424 = vunpack.c.h.b16 %v3293
  %v3425 = vunpack.c.l.b16 %v3294
  %v3426 = vunpack.c.h.b16 %v3294
  %v3427 = vunpack.c.l.b16 %v3295
  %v3428 = vunpack.c.h.b16 %v3295
  %v3429 = vunpack.c.l.b16 %v3296
  %v3430 = vunpack.c.h.b16 %v3296
  %v3431 = vunpack.c.l.b16 %v3297
  %v3432 = vunpack.c.h.b16 %v3297
  %v3433 = vunpack.c.l.b16 %v3298
  %v3434 = vunpack.c.h.b16 %v3298
  %v3435 = vunpack.c.l.b16 %v3299
  %v3436 = vunpack.c.h.b16 %v3299
  %v3437 = vunpack.c.l.b16 %v3300
  %v3438 = vunpack.c.h.b16 %v3300
  %v3439 = vunpack.c.l.b16 %v3301
  %v3440 = vunpack.c.h.b16 %v3301
  %v3441 = vunpack.c.l.b16 %v3302
  %v3442 = vunpack.c.h.b16 %v3302
  %v3443 = vunpack.c.l.b16 %v3303
  %v3444 = vunpack.c.h.b16 %v3303
  %v3445 = vunpack.c.l.b16 %v3304
  %v3446 = vunpack.c.h.b16 %v3304
  %v3447 = vunpack.c.l.b16 %v3305
  %v3448 = vunpack.c.h.b16 %v3305
  %v3449 = vunpack.c.l.b16 %v3306
  %v3450 = vunpack.c.h.b16 %v3306
  %v3451 = vunpack.c.l.b16 %v3307
  %v3452 = vunpack.c.h.b16 %v3307
  %v3453 = vunpack.c.l.b16 %v3308
  %v3454 = vunpack.c.h.b16 %v3308
  %v3455 = vunpack.c.l.b16 %v3309
  %v3456 = vunpack.c.h.b16 %v3309
  %v3457 = vunpack.c.l.b16 %v3310
  %v3458 = vunpack.c.h.b16 %v3310
  %v3459 = vunpack.c.l.b16 %v3311
  %v3460 = vunpack.c.h.b16 %v3311
  %v3461 = vunpack.c.l.b16 %v3312
  %v3462 = vunpack.c.h.b16 %v3312
  %v3463 = vunpack.c.l.b16 %v3313
  %v3464 = vunpack.c.h.b16 %v3313
  %v3465 = vunpack.c.l.b16 %v3314
  %v3466 = vunpack.c.h.b16 %v3314
  %v3467 = vunpack.c.l.b16 %v3315
  %v3468 = vunpack.c.h.b16 %v3315
  %v3469 = vunpack.c.l.b16 %v3316
  %v3470 = vunpack.c.h.b16 %v3316
  %v3471 = vunpack.c.l.b16 %v3317
  %v3472 = vunpack.c.h.b16 %v3317
  %v3473 = vunpack.c.l.b16 %v3318
  %v3474 = vunpack.c.h.b16 %v3318
  %v3475 = vunpack.c.l.b16 %v3319
  %v3476 = vunpack.c.h.b16 %v3319
  %v3477 = vunpack.c.l.b16 %v3320
  %v3478 = vunpack.c.h.b16 %v3320
  %v3479 = vunpack.c.l.b16 %v3321
  %v3480 = vunpack.c.h.b16 %v3321
  %v3481 = vunpack.c.l.b16 %v3322
  %v3482 = vunpack.c.h.b16 %v3322
  %v3483 = vunpack.c.l.b16 %v3323
  %v3484 = vunpack.c.h.b16 %v3323
  %v3485 = vunpack.c.l.b16 %v3324
  %v3486 = vunpack.c.h.b16 %v3324
  %v3487 = vunpack.c.l.b16 %v3325
  %v3488 = vunpack.c.h.b16 %v3325
  %v3489 = vunpack.c.l.b16 %v3326
  %v3490 = vunpack.c.h.b16 %v3326
  %v3491 = vunpack.c.l.b16 %v3327
  %v3492 = vunpack.c.h.b16 %v3327
  %v3493 = vunpack.c.l.b16 %v3328
  %v3494 = vunpack.c.h.b16 %v3328
  %v3495 = vunpack.c.l.b16 %v3329
  %v3496 = vunpack.c.h.b16 %v3329
  %v3497 = vunpack.c.l.b16 %v3330
  %v3498 = vunpack.c.h.b16 %v3330
  %v3499 = vunpack.c.l.b16 %v3331
  %v3500 = vunpack.c.h.b16 %v3331
  %v3501 = vunpack.c.l.b16 %v3332
  %v3502 = vunpack.c.h.b16 %v3332
  %v3503 = vunpack.c.l.b16 %v3333
  %v3504 = vunpack.c.h.b16 %v3333
  %v3505 = vpack.c.b16 %v3411, %v3409
  %v3506 = vpack.c.b16 %v3412, %v3410
  %v3507 = vpack.c.b16 %v3415, %v3413
  %v3508 = vpack.c.b16 %v3416, %v3414
  %v3509 = vpack.c.b16 %v3419, %v3417
  %v3510 = vpack.c.b16 %v3420, %v3418
  %v3511 = vpack.c.b16 %v3423, %v3421
  %v3512 = vpack.c.b16 %v3424, %v3422
  %v3513 = vpack.c.b16 %v3427, %v3425
  %v3514 = vpack.c.b16 %v3428, %v3426
  %v3515 = vpack.c.b16 %v3431, %v3429
  %v3516 = vpack.c.b16 %v3432, %v3430
  %v3517 = vpack.c.b16 %v3435, %v3433
  %v3518 = vpack.c.b16 %v3436, %v3434
  %v3519 = vpack.c.b16 %v3439, %v3437
  %v3520 = vpack.c.b16 %v3440, %v3438
  %v3521 = vpack.c.b16 %v3443, %v3441
  %v3522 = vpack.c.b16 %v3444, %v3442
  %v3523 = vpack.c.b16 %v3447, %v3445
  %v3524 = vpack.c.b16 %v3448, %v3446
  %v3525 = vpack.c.b16 %v3451, %v3449
  %v3526 = vpack.c.b16 %v3452, %v3450
  %v3527 = vpack.c.b16 %v3455, %v3453
  %v3528 = vpack.c.b16 %v3456, %v3454
  %v3529 = vpack.c.b16 %v3459, %v3457
  %v3530 = vpack.c.b16 %v3460, %v3458
  %v3531 = vpack.c.b16 %v3463, %v3461
  %v3532 = vpack.c.b16 %v3464, %v3462
  %v3533 = vpack.c.b16 %v3467, %v3465
  %v3534 = vpack.c.b16 %v3468, %v3466
  %v3535 = vpack.c.b16 %v3471, %v3469
  %v3536 = vpack.c.b16 %v3472, %v3470
  %v3537 = vpack.c.b16 %v3475, %v3473
  %v3538 = vpack.c.b16 %v3476, %v3474
  %v3539 = vpack.c.b16 %v3479, %v3477
  %v3540 = vpack.c.b16 %v3480, %v3478
  %v3541 = vpack.c.b16 %v3483, %v3481
  %v3542 = vpack.c.b16 %v3484, %v3482
  %v3543 = vpack.c.b16 %v3487, %v3485
  %v3544 = vpack.c.b16 %v3488, %v3486
  %v3545 = vpack.c.b16 %v3491, %v3489
  %v3546 = vpack.c.b16 %v3492, %v3490
  %v3547 = vpack.c.b16 %v3495, %v3493
  %v3548 = vpack.c.b16 %v3496, %v3494
  %v3549 = vpack.c.b16 %v3499, %v3497
  %v3550 = vpack.c.b16 %v3500, %v3498
  %v3551 = vpack.c.b16 %v3503, %v3501
  %v3552 = vpack.c.b16 %v3504, %v3502
  %3601 = vmatprep.subr.bf16.mxu0 %v3506
  %3602 = vmatpush1.bf16.msra.mxu0 %v3505
  %3603 = vmatprep.subr.bf16.mxu0 %v3508
  %3604 = vmatpush1.bf16.msra.mxu0 %v3507
  %3605 = vmatprep.subr.bf16.mxu0 %v3510
  %3606 = vmatpush1.bf16.msra.mxu0 %v3509
  %3607 = vmatprep.subr.bf16.mxu0 %v3512
  %3608 = vmatpush1.bf16.msra.mxu0 %v3511
  %3609 = vmatprep.subr.bf16.mxu0 %v3514
  %3610 = vmatpush1.bf16.msra.mxu0 %v3513
  %3611 = vmatprep.subr.bf16.mxu0 %v3516
  %3612 = vmatpush1.bf16.msra.mxu0 %v3515
  %3613 = vmatprep.subr.bf16.mxu0 %v3518
  %3614 = vmatpush1.bf16.msra.mxu0 %v3517
  %3615 = vmatprep.subr.bf16.mxu0 %v3520
  %3616 = vmatpush1.bf16.msra.mxu0 %v3519
  %3617 = vmatprep.subr.bf16.mxu0 %v3522
  %3618 = vmatpush1.bf16.msra.mxu0 %v3521
  %3619 = vmatprep.subr.bf16.mxu0 %v3524
  %3620 = vmatpush1.bf16.msra.mxu0 %v3523
  %3621 = vmatprep.subr.bf16.mxu0 %v3526
  %3622 = vmatpush1.bf16.msra.mxu0 %v3525
  %3623 = vmatprep.subr.bf16.mxu0 %v3528
  %3624 = vmatpush1.bf16.msra.mxu0 %v3527
  %3625 = vmatprep.subr.bf16.mxu0 %v3530
  %3626 = vmatpush1.bf16.msra.mxu0 %v3529
  %3627 = vmatprep.subr.bf16.mxu0 %v3532
  %3628 = vmatpush1.bf16.msra.mxu0 %v3531
  %3629 = vmatprep.subr.bf16.mxu0 %v3534
  %3630 = vmatpush1.bf16.msra.mxu0 %v3533
  %3631 = vmatprep.subr.bf16.mxu0 %v3536
  %3632 = vmatpush1.bf16.msra.mxu0 %v3535
  %3633 = vmatprep.mubr.bf16.mxu0 %v3350
  %3634 = vmatmul.mubr.bf16.gmra.mrb[0].mxu0 %v3349
  %v3635 = vpop.f32.mrb[0].mxu0
  %v3636 = vadd.f32 0.0, %v3635
  %v3637 = vpop.f32.mrb[0].mxu0
  %v3638 = vadd.f32 0.0, %v3637
  %v3639 = vpop.f32.mrb[0].mxu0
  %v3640 = vadd.f32 0.0, %v3639
  %v3641 = vpop.f32.mrb[0].mxu0
  %v3642 = vadd.f32 0.0, %v3641
  %3643 = vmatprep.mubr.bf16.mxu0 %v3353
  %3644 = vmatmul.mubr.bf16.gmra.mrb[0].mxu0 %v3352
  %v3645 = vpop.f32.mrb[0].mxu0
  %v3646 = vpop.f32.mrb[0].mxu0
  %v3647 = vpop.f32.mrb[0].mxu0
  %v3648 = vpop.f32.mrb[0].mxu0
  %3649 = vdwg.mxu0
  %3650 = vmatprep.subr.bf16.mxu0 %v3538
  %3651 = vmatpush1.bf16.msra.mxu0 %v3537
  %3652 = vmatprep.subr.bf16.mxu0 %v3540
  %3653 = vmatpush1.bf16.msra.mxu0 %v3539
  %3654 = vmatprep.subr.bf16.mxu0 %v3542
  %3655 = vmatpush1.bf16.msra.mxu0 %v3541
  %3656 = vmatprep.subr.bf16.mxu0 %v3544
  %3657 = vmatpush1.bf16.msra.mxu0 %v3543
  %3658 = vmatprep.subr.bf16.mxu0 %v3546
  %3659 = vmatpush1.bf16.msra.mxu0 %v3545
  %3660 = vmatprep.subr.bf16.mxu0 %v3548
  %3661 = vmatpush1.bf16.msra.mxu0 %v3547
  %3662 = vmatprep.subr.bf16.mxu0 %v3550
  %3663 = vmatpush1.bf16.msra.mxu0 %v3549
  %3664 = vmatprep.subr.bf16.mxu0 %v3552
  %3665 = vmatpush1.bf16.msra.mxu0 %v3551
  %3666 = vmatprep.subr.bf16.mxu0 0
  %3667 = vmatpush1.bf16.msra.mxu0 0
  %3668 = vmatprep.subr.bf16.mxu0 0
  %3669 = vmatpush1.bf16.msra.mxu0 0
  %3670 = vmatprep.subr.bf16.mxu0 0
  %3671 = vmatpush1.bf16.msra.mxu0 0
  %3672 = vmatprep.subr.bf16.mxu0 0
  %3673 = vmatpush1.bf16.msra.mxu0 0
  %3674 = vmatprep.subr.bf16.mxu0 0
  %3675 = vmatpush1.bf16.msra.mxu0 0
  %3676 = vmatprep.subr.bf16.mxu0 0
  %3677 = vmatpush1.bf16.msra.mxu0 0
  %3678 = vmatprep.subr.bf16.mxu0 0
  %3679 = vmatpush1.bf16.msra.mxu0 0
  %3680 = vmatprep.subr.bf16.mxu0 0
  %3681 = vmatpush1.bf16.msra.mxu0 0
  %3682 = vmatprep.mubr.bf16.mxu0 0
  %3683 = vmatmul.mubr.bf16.gmra.mrb[0].mxu0 %v3351
  %v3684 = vpop.f32.mrb[0].mxu0
  %v3685 = vadd.f32 %v3636, %v3684
  %v3686 = vpop.f32.mrb[0].mxu0
  %v3687 = vadd.f32 %v3638, %v3686
  %v3688 = vpop.f32.mrb[0].mxu0
  %v3689 = vadd.f32 %v3640, %v3688
  %v3690 = vpop.f32.mrb[0].mxu0
  %v3691 = vadd.f32 %v3642, %v3690
  %3692 = vmatprep.mubr.bf16.mxu0 0
  %3693 = vmatmul.mubr.bf16.gmra.mrb[0].mxu0 %v3354
  %v3694 = vpop.f32.mrb[0].mxu0
  %v3695 = vpop.f32.mrb[0].mxu0
  %v3696 = vpop.f32.mrb[0].mxu0
  %v3697 = vpop.f32.mrb[0].mxu0
  %3698 = vdwg.mxu0
  %s3699 = scalar_lea.vmem %s6, 384
  %v3700 = vld [vmem:[%s3699] sm:$0xff]
  %v3701 = vld [vmem:[%s3699 + $0x8] sm:$0xff]
  %v3702 = vld [vmem:[%s3699 + $0x10] sm:$0xff]
  %v3703 = vld [vmem:[%s3699 + $0x18] sm:$0xff]
  %v3704 = vld [vmem:[%s3699 + $0x20] sm:$0xff]
  %v3705 = vld [vmem:[%s3699 + $0x28] sm:$0xff]
  %v3706 = vld [vmem:[%s3699 + $0x30] sm:$0xff]
  %v3707 = vld [vmem:[%s3699 + $0x38] sm:$0xff]
  %v3708 = vld [vmem:[%s3699 + $0x40] sm:$0xff]
  %v3709 = vld [vmem:[%s3699 + $0x48] sm:$0xff]
  %v3710 = vld [vmem:[%s3699 + $0x50] sm:$0xff]
  %v3711 = vld [vmem:[%s3699 + $0x58] sm:$0xff]
  %v3712 = vld [vmem:[%s3699 + $0x60] sm:$0xff]
  %v3713 = vld [vmem:[%s3699 + $0x68] sm:$0xff]
  %v3714 = vld [vmem:[%s3699 + $0x70] sm:$0xff]
  %v3715 = vld [vmem:[%s3699 + $0x78] sm:$0xff]
  %v3716 = vld [vmem:[%s3699 + $0x80] sm:$0xff]
  %v3717 = vld [vmem:[%s3699 + $0x88] sm:$0xff]
  %v3718 = vld [vmem:[%s3699 + $0x90] sm:$0xff]
  %v3719 = vld [vmem:[%s3699 + $0x98] sm:$0xff]
  %v3720 = vld [vmem:[%s3699 + $0xa0] sm:$0xff]
  %v3721 = vld [vmem:[%s3699 + $0xa8] sm:$0xff]
  %v3722 = vld [vmem:[%s3699 + $0xb0] sm:$0xff]
  %v3723 = vld [vmem:[%s3699 + $0xb8] sm:$0xff]
  %v3724 = vld [vmem:[%s3699 + $0xc0] sm:$0xff]
  %v3725 = vld [vmem:[%s3699 + $0xc8] sm:$0xff]
  %v3726 = vld [vmem:[%s3699 + $0xd0] sm:$0xff]
  %v3727 = vld [vmem:[%s3699 + $0xd8] sm:$0xff]
  %v3728 = vld [vmem:[%s3699 + $0xe0] sm:$0xff]
  %v3729 = vld [vmem:[%s3699 + $0xe8] sm:$0xff]
  %v3730 = vld [vmem:[%s3699 + $0xf0] sm:$0xff]
  %v3731 = vld [vmem:[%s3699 + $0xf8] sm:$0xff]
  %v3732 = vld [vmem:[%s3699 + $0x100] sm:$0xff]
  %v3733 = vld [vmem:[%s3699 + $0x108] sm:$0xff]
  %v3734 = vld [vmem:[%s3699 + $0x110] sm:$0xff]
  %v3735 = vld [vmem:[%s3699 + $0x118] sm:$0xff]
  %v3736 = vld [vmem:[%s3699 + $0x120] sm:$0xff]
  %v3737 = vld [vmem:[%s3699 + $0x128] sm:$0xff]
  %v3738 = vld [vmem:[%s3699 + $0x130] sm:$0xff]
  %v3739 = vld [vmem:[%s3699 + $0x138] sm:$0xff]
  %v3740 = vld [vmem:[%s3699 + $0x140] sm:$0xff]
  %v3741 = vld [vmem:[%s3699 + $0x148] sm:$0xff]
  %v3742 = vld [vmem:[%s3699 + $0x150] sm:$0xff]
  %v3743 = vld [vmem:[%s3699 + $0x158] sm:$0xff]
  %v3744 = vld [vmem:[%s3699 + $0x160] sm:$0xff]
  %v3745 = vld [vmem:[%s3699 + $0x168] sm:$0xff]
  %v3746 = vld [vmem:[%s3699 + $0x170] sm:$0xff]
  %v3747 = vld [vmem:[%s3699 + $0x178] sm:$0xff]
  %v3796 = vunpack.c.l.b16 %v3700
  %v3797 = vunpack.c.h.b16 %v3700
  %v3798 = vunpack.c.l.b16 %v3701
  %v3799 = vunpack.c.h.b16 %v3701
  %v3800 = vunpack.c.l.b16 %v3702
  %v3801 = vunpack.c.h.b16 %v3702
  %v3802 = vunpack.c.l.b16 %v3703
  %v3803 = vunpack.c.h.b16 %v3703
  %v3804 = vunpack.c.l.b16 %v3704
  %v3805 = vunpack.c.h.b16 %v3704
  %v3806 = vunpack.c.l.b16 %v3705
  %v3807 = vunpack.c.h.b16 %v3705
  %v3808 = vunpack.c.l.b16 %v3706
  %v3809 = vunpack.c.h.b16 %v3706
  %v3810 = vunpack.c.l.b16 %v3707
  %v3811 = vunpack.c.h.b16 %v3707
  %v3812 = vunpack.c.l.b16 %v3708
  %v3813 = vunpack.c.h.b16 %v3708
  %v3814 = vunpack.c.l.b16 %v3709
  %v3815 = vunpack.c.h.b16 %v3709
  %v3816 = vunpack.c.l.b16 %v3710
  %v3817 = vunpack.c.h.b16 %v3710
  %v3818 = vunpack.c.l.b16 %v3711
  %v3819 = vunpack.c.h.b16 %v3711
  %v3820 = vunpack.c.l.b16 %v3712
  %v3821 = vunpack.c.h.b16 %v3712
  %v3822 = vunpack.c.l.b16 %v3713
  %v3823 = vunpack.c.h.b16 %v3713
  %v3824 = vunpack.c.l.b16 %v3714
  %v3825 = vunpack.c.h.b16 %v3714
  %v3826 = vunpack.c.l.b16 %v3715
  %v3827 = vunpack.c.h.b16 %v3715
  %v3828 = vunpack.c.l.b16 %v3716
  %v3829 = vunpack.c.h.b16 %v3716
  %v3830 = vunpack.c.l.b16 %v3717
  %v3831 = vunpack.c.h.b16 %v3717
  %v3832 = vunpack.c.l.b16 %v3718
  %v3833 = vunpack.c.h.b16 %v3718
  %v3834 = vunpack.c.l.b16 %v3719
  %v3835 = vunpack.c.h.b16 %v3719
  %v3836 = vunpack.c.l.b16 %v3720
  %v3837 = vunpack.c.h.b16 %v3720
  %v3838 = vunpack.c.l.b16 %v3721
  %v3839 = vunpack.c.h.b16 %v3721
  %v3840 = vunpack.c.l.b16 %v3722
  %v3841 = vunpack.c.h.b16 %v3722
  %v3842 = vunpack.c.l.b16 %v3723
  %v3843 = vunpack.c.h.b16 %v3723
  %v3844 = vunpack.c.l.b16 %v3724
  %v3845 = vunpack.c.h.b16 %v3724
  %v3846 = vunpack.c.l.b16 %v3725
  %v3847 = vunpack.c.h.b16 %v3725
  %v3848 = vunpack.c.l.b16 %v3726
  %v3849 = vunpack.c.h.b16 %v3726
  %v3850 = vunpack.c.l.b16 %v3727
  %v3851 = vunpack.c.h.b16 %v3727
  %v3852 = vunpack.c.l.b16 %v3728
  %v3853 = vunpack.c.h.b16 %v3728
  %v3854 = vunpack.c.l.b16 %v3729
  %v3855 = vunpack.c.h.b16 %v3729
  %v3856 = vunpack.c.l.b16 %v3730
  %v3857 = vunpack.c.h.b16 %v3730
  %v3858 = vunpack.c.l.b16 %v3731
  %v3859 = vunpack.c.h.b16 %v3731
  %v3860 = vunpack.c.l.b16 %v3732
  %v3861 = vunpack.c.h.b16 %v3732
  %v3862 = vunpack.c.l.b16 %v3733
  %v3863 = vunpack.c.h.b16 %v3733
  %v3864 = vunpack.c.l.b16 %v3734
  %v3865 = vunpack.c.h.b16 %v3734
  %v3866 = vunpack.c.l.b16 %v3735
  %v3867 = vunpack.c.h.b16 %v3735
  %v3868 = vunpack.c.l.b16 %v3736
  %v3869 = vunpack.c.h.b16 %v3736
  %v3870 = vunpack.c.l.b16 %v3737
  %v3871 = vunpack.c.h.b16 %v3737
  %v3872 = vunpack.c.l.b16 %v3738
  %v3873 = vunpack.c.h.b16 %v3738
  %v3874 = vunpack.c.l.b16 %v3739
  %v3875 = vunpack.c.h.b16 %v3739
  %v3876 = vunpack.c.l.b16 %v3740
  %v3877 = vunpack.c.h.b16 %v3740
  %v3878 = vunpack.c.l.b16 %v3741
  %v3879 = vunpack.c.h.b16 %v3741
  %v3880 = vunpack.c.l.b16 %v3742
  %v3881 = vunpack.c.h.b16 %v3742
  %v3882 = vunpack.c.l.b16 %v3743
  %v3883 = vunpack.c.h.b16 %v3743
  %v3884 = vunpack.c.l.b16 %v3744
  %v3885 = vunpack.c.h.b16 %v3744
  %v3886 = vunpack.c.l.b16 %v3745
  %v3887 = vunpack.c.h.b16 %v3745
  %v3888 = vunpack.c.l.b16 %v3746
  %v3889 = vunpack.c.h.b16 %v3746
  %v3890 = vunpack.c.l.b16 %v3747
  %v3891 = vunpack.c.h.b16 %v3747
  %v3892 = vpack.c.b16 %v3798, %v3796
  %v3893 = vpack.c.b16 %v3799, %v3797
  %v3894 = vpack.c.b16 %v3802, %v3800
  %v3895 = vpack.c.b16 %v3803, %v3801
  %v3896 = vpack.c.b16 %v3806, %v3804
  %v3897 = vpack.c.b16 %v3807, %v3805
  %v3898 = vpack.c.b16 %v3810, %v3808
  %v3899 = vpack.c.b16 %v3811, %v3809
  %v3900 = vpack.c.b16 %v3814, %v3812
  %v3901 = vpack.c.b16 %v3815, %v3813
  %v3902 = vpack.c.b16 %v3818, %v3816
  %v3903 = vpack.c.b16 %v3819, %v3817
  %v3904 = vpack.c.b16 %v3822, %v3820
  %v3905 = vpack.c.b16 %v3823, %v3821
  %v3906 = vpack.c.b16 %v3826, %v3824
  %v3907 = vpack.c.b16 %v3827, %v3825
  %v3908 = vpack.c.b16 %v3830, %v3828
  %v3909 = vpack.c.b16 %v3831, %v3829
  %v3910 = vpack.c.b16 %v3834, %v3832
  %v3911 = vpack.c.b16 %v3835, %v3833
  %v3912 = vpack.c.b16 %v3838, %v3836
  %v3913 = vpack.c.b16 %v3839, %v3837
  %v3914 = vpack.c.b16 %v3842, %v3840
  %v3915 = vpack.c.b16 %v3843, %v3841
  %v3916 = vpack.c.b16 %v3846, %v3844
  %v3917 = vpack.c.b16 %v3847, %v3845
  %v3918 = vpack.c.b16 %v3850, %v3848
  %v3919 = vpack.c.b16 %v3851, %v3849
  %v3920 = vpack.c.b16 %v3854, %v3852
  %v3921 = vpack.c.b16 %v3855, %v3853
  %v3922 = vpack.c.b16 %v3858, %v3856
  %v3923 = vpack.c.b16 %v3859, %v3857
  %v3924 = vpack.c.b16 %v3862, %v3860
  %v3925 = vpack.c.b16 %v3863, %v3861
  %v3926 = vpack.c.b16 %v3866, %v3864
  %v3927 = vpack.c.b16 %v3867, %v3865
  %v3928 = vpack.c.b16 %v3870, %v3868
  %v3929 = vpack.c.b16 %v3871, %v3869
  %v3930 = vpack.c.b16 %v3874, %v3872
  %v3931 = vpack.c.b16 %v3875, %v3873
  %v3932 = vpack.c.b16 %v3878, %v3876
  %v3933 = vpack.c.b16 %v3879, %v3877
  %v3934 = vpack.c.b16 %v3882, %v3880
  %v3935 = vpack.c.b16 %v3883, %v3881
  %v3936 = vpack.c.b16 %v3886, %v3884
  %v3937 = vpack.c.b16 %v3887, %v3885
  %v3938 = vpack.c.b16 %v3890, %v3888
  %v3939 = vpack.c.b16 %v3891, %v3889
  %3988 = vmatprep.subr.bf16.mxu0 %v3893
  %3989 = vmatpush1.bf16.msra.mxu0 %v3892
  %3990 = vmatprep.subr.bf16.mxu0 %v3895
  %3991 = vmatpush1.bf16.msra.mxu0 %v3894
  %3992 = vmatprep.subr.bf16.mxu0 %v3897
  %3993 = vmatpush1.bf16.msra.mxu0 %v3896
  %3994 = vmatprep.subr.bf16.mxu0 %v3899
  %3995 = vmatpush1.bf16.msra.mxu0 %v3898
  %3996 = vmatprep.subr.bf16.mxu0 %v3901
  %3997 = vmatpush1.bf16.msra.mxu0 %v3900
  %3998 = vmatprep.subr.bf16.mxu0 %v3903
  %3999 = vmatpush1.bf16.msra.mxu0 %v3902
  %4000 = vmatprep.subr.bf16.mxu0 %v3905
  %4001 = vmatpush1.bf16.msra.mxu0 %v3904
  %4002 = vmatprep.subr.bf16.mxu0 %v3907
  %4003 = vmatpush1.bf16.msra.mxu0 %v3906
  %4004 = vmatprep.subr.bf16.mxu0 %v3909
  %4005 = vmatpush1.bf16.msra.mxu0 %v3908
  %4006 = vmatprep.subr.bf16.mxu0 %v3911
  %4007 = vmatpush1.bf16.msra.mxu0 %v3910
  %4008 = vmatprep.subr.bf16.mxu0 %v3913
  %4009 = vmatpush1.bf16.msra.mxu0 %v3912
  %4010 = vmatprep.subr.bf16.mxu0 %v3915
  %4011 = vmatpush1.bf16.msra.mxu0 %v3914
  %4012 = vmatprep.subr.bf16.mxu0 %v3917
  %4013 = vmatpush1.bf16.msra.mxu0 %v3916
  %4014 = vmatprep.subr.bf16.mxu0 %v3919
  %4015 = vmatpush1.bf16.msra.mxu0 %v3918
  %4016 = vmatprep.subr.bf16.mxu0 %v3921
  %4017 = vmatpush1.bf16.msra.mxu0 %v3920
  %4018 = vmatprep.subr.bf16.mxu0 %v3923
  %4019 = vmatpush1.bf16.msra.mxu0 %v3922
  %4020 = vmatprep.mubr.bf16.mxu0 %v3350
  %4021 = vmatmul.mubr.bf16.gmra.mrb[0].mxu0 %v3349
  %v4022 = vpop.f32.mrb[0].mxu0
  %v4023 = vadd.f32 0.0, %v4022
  %v4024 = vpop.f32.mrb[0].mxu0
  %v4025 = vadd.f32 0.0, %v4024
  %v4026 = vpop.f32.mrb[0].mxu0
  %v4027 = vadd.f32 0.0, %v4026
  %v4028 = vpop.f32.mrb[0].mxu0
  %v4029 = vadd.f32 0.0, %v4028
  %4030 = vmatprep.mubr.bf16.mxu0 %v3353
  %4031 = vmatmul.mubr.bf16.gmra.mrb[0].mxu0 %v3352
  %v4032 = vpop.f32.mrb[0].mxu0
  %v4033 = vadd.f32 0.0, %v4032
  %v4034 = vpop.f32.mrb[0].mxu0
  %v4035 = vadd.f32 0.0, %v4034
  %v4036 = vpop.f32.mrb[0].mxu0
  %v4037 = vpop.f32.mrb[0].mxu0
  %4038 = vdwg.mxu0
  %4039 = vmatprep.subr.bf16.mxu0 %v3925
  %4040 = vmatpush1.bf16.msra.mxu0 %v3924
  %4041 = vmatprep.subr.bf16.mxu0 %v3927
  %4042 = vmatpush1.bf16.msra.mxu0 %v3926
  %4043 = vmatprep.subr.bf16.mxu0 %v3929
  %4044 = vmatpush1.bf16.msra.mxu0 %v3928
  %4045 = vmatprep.subr.bf16.mxu0 %v3931
  %4046 = vmatpush1.bf16.msra.mxu0 %v3930
  %4047 = vmatprep.subr.bf16.mxu0 %v3933
  %4048 = vmatpush1.bf16.msra.mxu0 %v3932
  %4049 = vmatprep.subr.bf16.mxu0 %v3935
  %4050 = vmatpush1.bf16.msra.mxu0 %v3934
  %4051 = vmatprep.subr.bf16.mxu0 %v3937
  %4052 = vmatpush1.bf16.msra.mxu0 %v3936
  %4053 = vmatprep.subr.bf16.mxu0 %v3939
  %4054 = vmatpush1.bf16.msra.mxu0 %v3938
  %4055 = vmatprep.subr.bf16.mxu0 0
  %4056 = vmatpush1.bf16.msra.mxu0 0
  %4057 = vmatprep.subr.bf16.mxu0 0
  %4058 = vmatpush1.bf16.msra.mxu0 0
  %4059 = vmatprep.subr.bf16.mxu0 0
  %4060 = vmatpush1.bf16.msra.mxu0 0
  %4061 = vmatprep.subr.bf16.mxu0 0
  %4062 = vmatpush1.bf16.msra.mxu0 0
  %4063 = vmatprep.subr.bf16.mxu0 0
  %4064 = vmatpush1.bf16.msra.mxu0 0
  %4065 = vmatprep.subr.bf16.mxu0 0
  %4066 = vmatpush1.bf16.msra.mxu0 0
  %4067 = vmatprep.subr.bf16.mxu0 0
  %4068 = vmatpush1.bf16.msra.mxu0 0
  %4069 = vmatprep.subr.bf16.mxu0 0
  %4070 = vmatpush1.bf16.msra.mxu0 0
  %4071 = vmatprep.mubr.bf16.mxu0 0
  %4072 = vmatmul.mubr.bf16.gmra.mrb[0].mxu0 %v3351
  %v4073 = vpop.f32.mrb[0].mxu0
  %v4074 = vadd.f32 %v4023, %v4073
  %v4075 = vpop.f32.mrb[0].mxu0
  %v4076 = vadd.f32 %v4025, %v4075
  %v4077 = vpop.f32.mrb[0].mxu0
  %v4078 = vadd.f32 %v4027, %v4077
  %v4079 = vpop.f32.mrb[0].mxu0
  %v4080 = vadd.f32 %v4029, %v4079
  %4081 = vmatprep.mubr.bf16.mxu0 0
  %4082 = vmatmul.mubr.bf16.gmra.mrb[0].mxu0 %v3354
  %v4083 = vpop.f32.mrb[0].mxu0
  %v4084 = vadd.f32 %v4033, %v4083
  %v4085 = vpop.f32.mrb[0].mxu0
  %v4086 = vadd.f32 %v4035, %v4085
  %v4087 = vpop.f32.mrb[0].mxu0
  %v4088 = vpop.f32.mrb[0].mxu0
  %4089 = vdwg.mxu0
  %s4090 = scalar_lea.vmem %s6, 768
  %v4091 = vld [vmem:[%s4090] sm:$0xff]
  %v4092 = vld [vmem:[%s4090 + $0x8] sm:$0xff]
  %v4093 = vld [vmem:[%s4090 + $0x10] sm:$0xff]
  %v4094 = vld [vmem:[%s4090 + $0x18] sm:$0xff]
  %v4095 = vld [vmem:[%s4090 + $0x20] sm:$0xff]
  %v4096 = vld [vmem:[%s4090 + $0x28] sm:$0xff]
  %v4097 = vld [vmem:[%s4090 + $0x30] sm:$0xff]
  %v4098 = vld [vmem:[%s4090 + $0x38] sm:$0xff]
  %v4099 = vld [vmem:[%s4090 + $0x40] sm:$0xff]
  %v4100 = vld [vmem:[%s4090 + $0x48] sm:$0xff]
  %v4101 = vld [vmem:[%s4090 + $0x50] sm:$0xff]
  %v4102 = vld [vmem:[%s4090 + $0x58] sm:$0xff]
  %v4103 = vld [vmem:[%s4090 + $0x60] sm:$0xff]
  %v4104 = vld [vmem:[%s4090 + $0x68] sm:$0xff]
  %v4105 = vld [vmem:[%s4090 + $0x70] sm:$0xff]
  %v4106 = vld [vmem:[%s4090 + $0x78] sm:$0xff]
  %v4107 = vld [vmem:[%s4090 + $0x80] sm:$0xff]
  %v4108 = vld [vmem:[%s4090 + $0x88] sm:$0xff]
  %v4109 = vld [vmem:[%s4090 + $0x90] sm:$0xff]
  %v4110 = vld [vmem:[%s4090 + $0x98] sm:$0xff]
  %v4111 = vld [vmem:[%s4090 + $0xa0] sm:$0xff]
  %v4112 = vld [vmem:[%s4090 + $0xa8] sm:$0xff]
  %v4113 = vld [vmem:[%s4090 + $0xb0] sm:$0xff]
  %v4114 = vld [vmem:[%s4090 + $0xb8] sm:$0xff]
  %v4115 = vld [vmem:[%s4090 + $0xc0] sm:$0xff]
  %v4116 = vld [vmem:[%s4090 + $0xc8] sm:$0xff]
  %v4117 = vld [vmem:[%s4090 + $0xd0] sm:$0xff]
  %v4118 = vld [vmem:[%s4090 + $0xd8] sm:$0xff]
  %v4119 = vld [vmem:[%s4090 + $0xe0] sm:$0xff]
  %v4120 = vld [vmem:[%s4090 + $0xe8] sm:$0xff]
  %v4121 = vld [vmem:[%s4090 + $0xf0] sm:$0xff]
  %v4122 = vld [vmem:[%s4090 + $0xf8] sm:$0xff]
  %v4123 = vld [vmem:[%s4090 + $0x100] sm:$0xff]
  %v4124 = vld [vmem:[%s4090 + $0x108] sm:$0xff]
  %v4125 = vld [vmem:[%s4090 + $0x110] sm:$0xff]
  %v4126 = vld [vmem:[%s4090 + $0x118] sm:$0xff]
  %v4127 = vld [vmem:[%s4090 + $0x120] sm:$0xff]
  %v4128 = vld [vmem:[%s4090 + $0x128] sm:$0xff]
  %v4129 = vld [vmem:[%s4090 + $0x130] sm:$0xff]
  %v4130 = vld [vmem:[%s4090 + $0x138] sm:$0xff]
  %v4131 = vld [vmem:[%s4090 + $0x140] sm:$0xff]
  %v4132 = vld [vmem:[%s4090 + $0x148] sm:$0xff]
  %v4133 = vld [vmem:[%s4090 + $0x150] sm:$0xff]
  %v4134 = vld [vmem:[%s4090 + $0x158] sm:$0xff]
  %v4135 = vld [vmem:[%s4090 + $0x160] sm:$0xff]
  %v4136 = vld [vmem:[%s4090 + $0x168] sm:$0xff]
  %v4137 = vld [vmem:[%s4090 + $0x170] sm:$0xff]
  %v4138 = vld [vmem:[%s4090 + $0x178] sm:$0xff]
  %v4187 = vunpack.c.l.b16 %v4091
  %v4188 = vunpack.c.h.b16 %v4091
  %v4189 = vunpack.c.l.b16 %v4092
  %v4190 = vunpack.c.h.b16 %v4092
  %v4191 = vunpack.c.l.b16 %v4093
  %v4192 = vunpack.c.h.b16 %v4093
  %v4193 = vunpack.c.l.b16 %v4094
  %v4194 = vunpack.c.h.b16 %v4094
  %v4195 = vunpack.c.l.b16 %v4095
  %v4196 = vunpack.c.h.b16 %v4095
  %v4197 = vunpack.c.l.b16 %v4096
  %v4198 = vunpack.c.h.b16 %v4096
  %v4199 = vunpack.c.l.b16 %v4097
  %v4200 = vunpack.c.h.b16 %v4097
  %v4201 = vunpack.c.l.b16 %v4098
  %v4202 = vunpack.c.h.b16 %v4098
  %v4203 = vunpack.c.l.b16 %v4099
  %v4204 = vunpack.c.h.b16 %v4099
  %v4205 = vunpack.c.l.b16 %v4100
  %v4206 = vunpack.c.h.b16 %v4100
  %v4207 = vunpack.c.l.b16 %v4101
  %v4208 = vunpack.c.h.b16 %v4101
  %v4209 = vunpack.c.l.b16 %v4102
  %v4210 = vunpack.c.h.b16 %v4102
  %v4211 = vunpack.c.l.b16 %v4103
  %v4212 = vunpack.c.h.b16 %v4103
  %v4213 = vunpack.c.l.b16 %v4104
  %v4214 = vunpack.c.h.b16 %v4104
  %v4215 = vunpack.c.l.b16 %v4105
  %v4216 = vunpack.c.h.b16 %v4105
  %v4217 = vunpack.c.l.b16 %v4106
  %v4218 = vunpack.c.h.b16 %v4106
  %v4219 = vunpack.c.l.b16 %v4107
  %v4220 = vunpack.c.h.b16 %v4107
  %v4221 = vunpack.c.l.b16 %v4108
  %v4222 = vunpack.c.h.b16 %v4108
  %v4223 = vunpack.c.l.b16 %v4109
  %v4224 = vunpack.c.h.b16 %v4109
  %v4225 = vunpack.c.l.b16 %v4110
  %v4226 = vunpack.c.h.b16 %v4110
  %v4227 = vunpack.c.l.b16 %v4111
  %v4228 = vunpack.c.h.b16 %v4111
  %v4229 = vunpack.c.l.b16 %v4112
  %v4230 = vunpack.c.h.b16 %v4112
  %v4231 = vunpack.c.l.b16 %v4113
  %v4232 = vunpack.c.h.b16 %v4113
  %v4233 = vunpack.c.l.b16 %v4114
  %v4234 = vunpack.c.h.b16 %v4114
  %v4235 = vunpack.c.l.b16 %v4115
  %v4236 = vunpack.c.h.b16 %v4115
  %v4237 = vunpack.c.l.b16 %v4116
  %v4238 = vunpack.c.h.b16 %v4116
  %v4239 = vunpack.c.l.b16 %v4117
  %v4240 = vunpack.c.h.b16 %v4117
  %v4241 = vunpack.c.l.b16 %v4118
  %v4242 = vunpack.c.h.b16 %v4118
  %v4243 = vunpack.c.l.b16 %v4119
  %v4244 = vunpack.c.h.b16 %v4119
  %v4245 = vunpack.c.l.b16 %v4120
  %v4246 = vunpack.c.h.b16 %v4120
  %v4247 = vunpack.c.l.b16 %v4121
  %v4248 = vunpack.c.h.b16 %v4121
  %v4249 = vunpack.c.l.b16 %v4122
  %v4250 = vunpack.c.h.b16 %v4122
  %v4251 = vunpack.c.l.b16 %v4123
  %v4252 = vunpack.c.h.b16 %v4123
  %v4253 = vunpack.c.l.b16 %v4124
  %v4254 = vunpack.c.h.b16 %v4124
  %v4255 = vunpack.c.l.b16 %v4125
  %v4256 = vunpack.c.h.b16 %v4125
  %v4257 = vunpack.c.l.b16 %v4126
  %v4258 = vunpack.c.h.b16 %v4126
  %v4259 = vunpack.c.l.b16 %v4127
  %v4260 = vunpack.c.h.b16 %v4127
  %v4261 = vunpack.c.l.b16 %v4128
  %v4262 = vunpack.c.h.b16 %v4128
  %v4263 = vunpack.c.l.b16 %v4129
  %v4264 = vunpack.c.h.b16 %v4129
  %v4265 = vunpack.c.l.b16 %v4130
  %v4266 = vunpack.c.h.b16 %v4130
  %v4267 = vunpack.c.l.b16 %v4131
  %v4268 = vunpack.c.h.b16 %v4131
  %v4269 = vunpack.c.l.b16 %v4132
  %v4270 = vunpack.c.h.b16 %v4132
  %v4271 = vunpack.c.l.b16 %v4133
  %v4272 = vunpack.c.h.b16 %v4133
  %v4273 = vunpack.c.l.b16 %v4134
  %v4274 = vunpack.c.h.b16 %v4134
  %v4275 = vunpack.c.l.b16 %v4135
  %v4276 = vunpack.c.h.b16 %v4135
  %v4277 = vunpack.c.l.b16 %v4136
  %v4278 = vunpack.c.h.b16 %v4136
  %v4279 = vunpack.c.l.b16 %v4137
  %v4280 = vunpack.c.h.b16 %v4137
  %v4281 = vunpack.c.l.b16 %v4138
  %v4282 = vunpack.c.h.b16 %v4138
  %v4283 = vpack.c.b16 %v4189, %v4187
  %v4284 = vpack.c.b16 %v4190, %v4188
  %v4285 = vpack.c.b16 %v4193, %v4191
  %v4286 = vpack.c.b16 %v4194, %v4192
  %v4287 = vpack.c.b16 %v4197, %v4195
  %v4288 = vpack.c.b16 %v4198, %v4196
  %v4289 = vpack.c.b16 %v4201, %v4199
  %v4290 = vpack.c.b16 %v4202, %v4200
  %v4291 = vpack.c.b16 %v4205, %v4203
  %v4292 = vpack.c.b16 %v4206, %v4204
  %v4293 = vpack.c.b16 %v4209, %v4207
  %v4294 = vpack.c.b16 %v4210, %v4208
  %v4295 = vpack.c.b16 %v4213, %v4211
  %v4296 = vpack.c.b16 %v4214, %v4212
  %v4297 = vpack.c.b16 %v4217, %v4215
  %v4298 = vpack.c.b16 %v4218, %v4216
  %v4299 = vpack.c.b16 %v4221, %v4219
  %v4300 = vpack.c.b16 %v4222, %v4220
  %v4301 = vpack.c.b16 %v4225, %v4223
  %v4302 = vpack.c.b16 %v4226, %v4224
  %v4303 = vpack.c.b16 %v4229, %v4227
  %v4304 = vpack.c.b16 %v4230, %v4228
  %v4305 = vpack.c.b16 %v4233, %v4231
  %v4306 = vpack.c.b16 %v4234, %v4232
  %v4307 = vpack.c.b16 %v4237, %v4235
  %v4308 = vpack.c.b16 %v4238, %v4236
  %v4309 = vpack.c.b16 %v4241, %v4239
  %v4310 = vpack.c.b16 %v4242, %v4240
  %v4311 = vpack.c.b16 %v4245, %v4243
  %v4312 = vpack.c.b16 %v4246, %v4244
  %v4313 = vpack.c.b16 %v4249, %v4247
  %v4314 = vpack.c.b16 %v4250, %v4248
  %v4315 = vpack.c.b16 %v4253, %v4251
  %v4316 = vpack.c.b16 %v4254, %v4252
  %v4317 = vpack.c.b16 %v4257, %v4255
  %v4318 = vpack.c.b16 %v4258, %v4256
  %v4319 = vpack.c.b16 %v4261, %v4259
  %v4320 = vpack.c.b16 %v4262, %v4260
  %v4321 = vpack.c.b16 %v4265, %v4263
  %v4322 = vpack.c.b16 %v4266, %v4264
  %v4323 = vpack.c.b16 %v4269, %v4267
  %v4324 = vpack.c.b16 %v4270, %v4268
  %v4325 = vpack.c.b16 %v4273, %v4271
  %v4326 = vpack.c.b16 %v4274, %v4272
  %v4327 = vpack.c.b16 %v4277, %v4275
  %v4328 = vpack.c.b16 %v4278, %v4276
  %v4329 = vpack.c.b16 %v4281, %v4279
  %v4330 = vpack.c.b16 %v4282, %v4280
  %4379 = vmatprep.subr.bf16.mxu0 %v4284
  %4380 = vmatpush1.bf16.msra.mxu0 %v4283
  %4381 = vmatprep.subr.bf16.mxu0 %v4286
  %4382 = vmatpush1.bf16.msra.mxu0 %v4285
  %4383 = vmatprep.subr.bf16.mxu0 %v4288
  %4384 = vmatpush1.bf16.msra.mxu0 %v4287
  %4385 = vmatprep.subr.bf16.mxu0 %v4290
  %4386 = vmatpush1.bf16.msra.mxu0 %v4289
  %4387 = vmatprep.subr.bf16.mxu0 %v4292
  %4388 = vmatpush1.bf16.msra.mxu0 %v4291
  %4389 = vmatprep.subr.bf16.mxu0 %v4294
  %4390 = vmatpush1.bf16.msra.mxu0 %v4293
  %4391 = vmatprep.subr.bf16.mxu0 %v4296
  %4392 = vmatpush1.bf16.msra.mxu0 %v4295
  %4393 = vmatprep.subr.bf16.mxu0 %v4298
  %4394 = vmatpush1.bf16.msra.mxu0 %v4297
  %4395 = vmatprep.subr.bf16.mxu0 %v4300
  %4396 = vmatpush1.bf16.msra.mxu0 %v4299
  %4397 = vmatprep.subr.bf16.mxu0 %v4302
  %4398 = vmatpush1.bf16.msra.mxu0 %v4301
  %4399 = vmatprep.subr.bf16.mxu0 %v4304
  %4400 = vmatpush1.bf16.msra.mxu0 %v4303
  %4401 = vmatprep.subr.bf16.mxu0 %v4306
  %4402 = vmatpush1.bf16.msra.mxu0 %v4305
  %4403 = vmatprep.subr.bf16.mxu0 %v4308
  %4404 = vmatpush1.bf16.msra.mxu0 %v4307
  %4405 = vmatprep.subr.bf16.mxu0 %v4310
  %4406 = vmatpush1.bf16.msra.mxu0 %v4309
  %4407 = vmatprep.subr.bf16.mxu0 %v4312
  %4408 = vmatpush1.bf16.msra.mxu0 %v4311
  %4409 = vmatprep.subr.bf16.mxu0 %v4314
  %4410 = vmatpush1.bf16.msra.mxu0 %v4313
  %4411 = vmatprep.mubr.bf16.mxu0 %v3350
  %4412 = vmatmul.mubr.bf16.gmra.mrb[0].mxu0 %v3349
  %v4413 = vpop.f32.mrb[0].mxu0
  %v4414 = vadd.f32 0.0, %v4413
  %v4415 = vpop.f32.mrb[0].mxu0
  %v4416 = vadd.f32 0.0, %v4415
  %v4417 = vpop.f32.mrb[0].mxu0
  %v4418 = vadd.f32 0.0, %v4417
  %v4419 = vpop.f32.mrb[0].mxu0
  %v4420 = vadd.f32 0.0, %v4419
  %4421 = vmatprep.mubr.bf16.mxu0 %v3353
  %4422 = vmatmul.mubr.bf16.gmra.mrb[0].mxu0 %v3352
  %v4423 = vpop.f32.mrb[0].mxu0
  %v4424 = vadd.f32 0.0, %v4423
  %v4425 = vpop.f32.mrb[0].mxu0
  %v4426 = vadd.f32 0.0, %v4425
  %v4427 = vpop.f32.mrb[0].mxu0
  %v4428 = vpop.f32.mrb[0].mxu0
  %4429 = vdwg.mxu0
  %4430 = vmatprep.subr.bf16.mxu0 %v4316
  %4431 = vmatpush1.bf16.msra.mxu0 %v4315
  %4432 = vmatprep.subr.bf16.mxu0 %v4318
  %4433 = vmatpush1.bf16.msra.mxu0 %v4317
  %4434 = vmatprep.subr.bf16.mxu0 %v4320
  %4435 = vmatpush1.bf16.msra.mxu0 %v4319
  %4436 = vmatprep.subr.bf16.mxu0 %v4322
  %4437 = vmatpush1.bf16.msra.mxu0 %v4321
  %4438 = vmatprep.subr.bf16.mxu0 %v4324
  %4439 = vmatpush1.bf16.msra.mxu0 %v4323
  %4440 = vmatprep.subr.bf16.mxu0 %v4326
  %4441 = vmatpush1.bf16.msra.mxu0 %v4325
  %4442 = vmatprep.subr.bf16.mxu0 %v4328
  %4443 = vmatpush1.bf16.msra.mxu0 %v4327
  %4444 = vmatprep.subr.bf16.mxu0 %v4330
  %4445 = vmatpush1.bf16.msra.mxu0 %v4329
  %4446 = vmatprep.subr.bf16.mxu0 0
  %4447 = vmatpush1.bf16.msra.mxu0 0
  %4448 = vmatprep.subr.bf16.mxu0 0
  %4449 = vmatpush1.bf16.msra.mxu0 0
  %4450 = vmatprep.subr.bf16.mxu0 0
  %4451 = vmatpush1.bf16.msra.mxu0 0
  %4452 = vmatprep.subr.bf16.mxu0 0
  %4453 = vmatpush1.bf16.msra.mxu0 0
  %4454 = vmatprep.subr.bf16.mxu0 0
  %4455 = vmatpush1.bf16.msra.mxu0 0
  %4456 = vmatprep.subr.bf16.mxu0 0
  %4457 = vmatpush1.bf16.msra.mxu0 0
  %4458 = vmatprep.subr.bf16.mxu0 0
  %4459 = vmatpush1.bf16.msra.mxu0 0
  %4460 = vmatprep.subr.bf16.mxu0 0
  %4461 = vmatpush1.bf16.msra.mxu0 0
  %4462 = vmatprep.mubr.bf16.mxu0 0
  %4463 = vmatmul.mubr.bf16.gmra.mrb[0].mxu0 %v3351
  %v4464 = vpop.f32.mrb[0].mxu0
  %v4465 = vadd.f32 %v4414, %v4464
  %v4466 = vpop.f32.mrb[0].mxu0
  %v4467 = vadd.f32 %v4416, %v4466
  %v4468 = vpop.f32.mrb[0].mxu0
  %v4469 = vadd.f32 %v4418, %v4468
  %v4470 = vpop.f32.mrb[0].mxu0
  %v4471 = vadd.f32 %v4420, %v4470
  %4472 = vmatprep.mubr.bf16.mxu0 0
  %4473 = vmatmul.mubr.bf16.gmra.mrb[0].mxu0 %v3354
  %v4474 = vpop.f32.mrb[0].mxu0
  %v4475 = vadd.f32 %v4424, %v4474
  %v4476 = vpop.f32.mrb[0].mxu0
  %v4477 = vadd.f32 %v4426, %v4476
  %v4478 = vpop.f32.mrb[0].mxu0
  %v4479 = vpop.f32.mrb[0].mxu0
  %4480 = vdwg.mxu0
  %v4483 = vrot.slane %v4074, 1
  %v4484 = vrot.slane %v4076, 1
  %v4487 = vadd.f32 %v3685, %v4483
  %v4488 = vadd.f32 %v3687, %v4484
  %v4493 = vrot.slane %v4465, 2
  %v4494 = vrot.slane %v4469, 2
  %v4495 = vsel %vm3075, %v4493, %v4494
  %v4496 = vrot.slane %v4467, 2
  %v4497 = vrot.slane %v4471, 2
  %v4498 = vsel %vm3075, %v4496, %v4497
  %v4501 = vadd.f32 %v4487, %v4495
  %v4502 = vadd.f32 %v4488, %v4498
  %v4503 = vld [vmem:[%s7] sm:$0x3]
  %v4505 = vlaneseq
  %v4506 = vshrl.u32 %v4505, 7
  %v4507 = vsub.s32 0, %v4506
  %v4508 = vrot.slane %v4503, %v4507
  %v4509 = vlaneseq
  %v4510 = vshrl.u32 %v4509, 7
  %v4511 = vsub.s32 1, %v4510
  %v4512 = vrot.slane %v4503, %v4511
  %v4515 = vadd.f32 %v4501, %v4508
  %v4516 = vadd.f32 %v4502, %v4512
  %v4517 = vmax.f32 %v4515, 0.0
  %v4518 = vmax.f32 %v4516, 0.0
  %v4519 = vpack.c.bf16 %v4517, %v4517
  %v4520 = vpack.c.bf16 %v4518, %v4518
  %v4523 = vunpack.c.l.b16 %v4519
  %v4524 = vunpack.c.l.b16 %v4520
  %v4525 = vpack.c.b16 %v4524, %v4523
  %vm4527 = vmand %vm3265, %vm913
  %vm4528 = vsmask.f32 7424
  %vm4529 = vmand %vm3268, %vm4528
  %vm4530 = vmor %vm4529, %vm4527
  %v4531 = vld [vmem:[#allocation6] sm:$0xff]
  %v4532 = vsel %vm4530, %v4525, %v4531
  %4533 = vst [vmem:[#allocation6] sm:$0xff] %v4532
  %v4538 = vrot.slane %v4078, 1
  %v4539 = vrot.slane %v4084, 1
  %v4540 = vsel %vm760, %v4538, %v4539
  %v4541 = vrot.slane %v4080, 1
  %v4542 = vrot.slane %v4086, 1
  %v4543 = vsel %vm760, %v4541, %v4542
  %v4546 = vadd.f32 %v3689, %v4540
  %v4547 = vadd.f32 %v3691, %v4543
  %v4550 = vrot.slane %v4475, 2
  %v4551 = vsel %vm3075, %v4494, %v4550
  %v4552 = vrot.slane %v4477, 2
  %v4553 = vsel %vm3075, %v4497, %v4552
  %v4556 = vadd.f32 %v4546, %v4551
  %v4557 = vadd.f32 %v4547, %v4553
  %v4558 = vld [vmem:[%s7] sm:$0x3]
  %v4560 = vlaneseq
  %v4561 = vshrl.u32 %v4560, 7
  %v4562 = vsub.s32 0, %v4561
  %v4563 = vrot.slane %v4558, %v4562
  %v4564 = vlaneseq
  %v4565 = vshrl.u32 %v4564, 7
  %v4566 = vsub.s32 1, %v4565
  %v4567 = vrot.slane %v4558, %v4566
  %v4570 = vadd.f32 %v4556, %v4563
  %v4571 = vadd.f32 %v4557, %v4567
  %v4572 = vmax.f32 %v4570, 0.0
  %v4573 = vmax.f32 %v4571, 0.0
  %v4574 = vpack.c.bf16 %v4572, %v4572
  %v4575 = vpack.c.bf16 %v4573, %v4573
  %v4578 = vunpack.c.l.b16 %v4574
  %v4579 = vunpack.c.l.b16 %v4575
  %v4580 = vpack.c.b16 %v4579, %v4578
  %v4581 = vrot.slane %v4580, 5
  %v4582 = vrot.slane %v4581, 4
  %vm4585 = vcmask 1043459
  %vm4586 = vsmask.f32 7950
  %vm4587 = vmand %vm4585, %vm4586
  %vm4588 = vcmask 1047559
  %vm4589 = vsmask.f32 7966
  %vm4590 = vmand %vm4588, %vm4589
  %vm4591 = vmor %vm4590, %vm4587
  %v4592 = vld [vmem:[#allocation6] sm:$0x88]
  %v4593 = vsel %vm4591, %v4581, %v4592
  %4594 = vst [vmem:[#allocation6] sm:$0x88] %v4593
  %4595 = vst [vmem:[#allocation6 + $0x8] sm:$0x77] %v4582
  %v4596 = vld [vmem:[#allocation6] sm:$0xff]
  %v4597 = vld [vmem:[#allocation6 + $0x8] sm:$0x77]
  %v4598 = vld [vmem:[%s8] sm:$0xff]
  %v4599 = vld [vmem:[%s8 + $0x8] sm:$0xff]
  %v4600 = vld [vmem:[%s8 + $0x10] sm:$0xff]
  %v4601 = vld [vmem:[%s8 + $0x18] sm:$0xff]
  %v4602 = vld [vmem:[%s8 + $0x20] sm:$0xff]
  %v4603 = vld [vmem:[%s8 + $0x28] sm:$0xff]
  %v4604 = vld [vmem:[%s8 + $0x30] sm:$0xff]
  %v4605 = vld [vmem:[%s8 + $0x38] sm:$0xff]
  %v4606 = vld [vmem:[%s8 + $0x40] sm:$0xff]
  %v4607 = vld [vmem:[%s8 + $0x48] sm:$0xff]
  %v4608 = vld [vmem:[%s8 + $0x50] sm:$0xff]
  %v4609 = vld [vmem:[%s8 + $0x58] sm:$0xff]
  %v4610 = vld [vmem:[%s8 + $0x60] sm:$0xff]
  %v4611 = vld [vmem:[%s8 + $0x68] sm:$0xff]
  %v4612 = vld [vmem:[%s8 + $0x70] sm:$0xff]
  %v4613 = vld [vmem:[%s8 + $0x78] sm:$0xff]
  %v4614 = vld [vmem:[%s8 + $0x80] sm:$0xff]
  %v4615 = vld [vmem:[%s8 + $0x88] sm:$0xff]
  %v4616 = vld [vmem:[%s8 + $0x90] sm:$0xff]
  %v4617 = vld [vmem:[%s8 + $0x98] sm:$0xff]
  %v4618 = vld [vmem:[%s8 + $0xa0] sm:$0xff]
  %v4619 = vld [vmem:[%s8 + $0xa8] sm:$0xff]
  %v4620 = vld [vmem:[%s8 + $0xb0] sm:$0xff]
  %v4621 = vld [vmem:[%s8 + $0xb8] sm:$0xff]
  %v4622 = vld [vmem:[%s8 + $0xc0] sm:$0xff]
  %v4623 = vld [vmem:[%s8 + $0xc8] sm:$0xff]
  %v4624 = vld [vmem:[%s8 + $0xd0] sm:$0xff]
  %v4625 = vld [vmem:[%s8 + $0xd8] sm:$0xff]
  %v4626 = vld [vmem:[%s8 + $0xe0] sm:$0xff]
  %v4627 = vld [vmem:[%s8 + $0xe8] sm:$0xff]
  %v4628 = vld [vmem:[%s8 + $0xf0] sm:$0xff]
  %v4629 = vld [vmem:[%s8 + $0xf8] sm:$0xff]
  %v4632 = vunpack.c.l.b16 %v4596
  %v4633 = vunpack.c.h.b16 %v4596
  %v4634 = vunpack.c.l.b16 %v4597
  %v4635 = vunpack.c.h.b16 %v4597
  %v4636 = vpack.c.b16 %v4634, %v4632
  %v4637 = vpack.c.b16 %v4635, %v4633
  %v4672 = vunpack.c.l.b16 %v4598
  %v4673 = vunpack.c.h.b16 %v4598
  %v4674 = vunpack.c.l.b16 %v4599
  %v4675 = vunpack.c.h.b16 %v4599
  %v4676 = vunpack.c.l.b16 %v4600
  %v4677 = vunpack.c.h.b16 %v4600
  %v4678 = vunpack.c.l.b16 %v4601
  %v4679 = vunpack.c.h.b16 %v4601
  %v4680 = vunpack.c.l.b16 %v4602
  %v4681 = vunpack.c.h.b16 %v4602
  %v4682 = vunpack.c.l.b16 %v4603
  %v4683 = vunpack.c.h.b16 %v4603
  %v4684 = vunpack.c.l.b16 %v4604
  %v4685 = vunpack.c.h.b16 %v4604
  %v4686 = vunpack.c.l.b16 %v4605
  %v4687 = vunpack.c.h.b16 %v4605
  %v4688 = vunpack.c.l.b16 %v4606
  %v4689 = vunpack.c.h.b16 %v4606
  %v4690 = vunpack.c.l.b16 %v4607
  %v4691 = vunpack.c.h.b16 %v4607
  %v4692 = vunpack.c.l.b16 %v4608
  %v4693 = vunpack.c.h.b16 %v4608
  %v4694 = vunpack.c.l.b16 %v4609
  %v4695 = vunpack.c.h.b16 %v4609
  %v4696 = vunpack.c.l.b16 %v4610
  %v4697 = vunpack.c.h.b16 %v4610
  %v4698 = vunpack.c.l.b16 %v4611
  %v4699 = vunpack.c.h.b16 %v4611
  %v4700 = vunpack.c.l.b16 %v4612
  %v4701 = vunpack.c.h.b16 %v4612
  %v4702 = vunpack.c.l.b16 %v4613
  %v4703 = vunpack.c.h.b16 %v4613
  %v4704 = vunpack.c.l.b16 %v4614
  %v4705 = vunpack.c.h.b16 %v4614
  %v4706 = vunpack.c.l.b16 %v4615
  %v4707 = vunpack.c.h.b16 %v4615
  %v4708 = vunpack.c.l.b16 %v4616
  %v4709 = vunpack.c.h.b16 %v4616
  %v4710 = vunpack.c.l.b16 %v4617
  %v4711 = vunpack.c.h.b16 %v4617
  %v4712 = vunpack.c.l.b16 %v4618
  %v4713 = vunpack.c.h.b16 %v4618
  %v4714 = vunpack.c.l.b16 %v4619
  %v4715 = vunpack.c.h.b16 %v4619
  %v4716 = vunpack.c.l.b16 %v4620
  %v4717 = vunpack.c.h.b16 %v4620
  %v4718 = vunpack.c.l.b16 %v4621
  %v4719 = vunpack.c.h.b16 %v4621
  %v4720 = vunpack.c.l.b16 %v4622
  %v4721 = vunpack.c.h.b16 %v4622
  %v4722 = vunpack.c.l.b16 %v4623
  %v4723 = vunpack.c.h.b16 %v4623
  %v4724 = vunpack.c.l.b16 %v4624
  %v4725 = vunpack.c.h.b16 %v4624
  %v4726 = vunpack.c.l.b16 %v4625
  %v4727 = vunpack.c.h.b16 %v4625
  %v4728 = vunpack.c.l.b16 %v4626
  %v4729 = vunpack.c.h.b16 %v4626
  %v4730 = vunpack.c.l.b16 %v4627
  %v4731 = vunpack.c.h.b16 %v4627
  %v4732 = vunpack.c.l.b16 %v4628
  %v4733 = vunpack.c.h.b16 %v4628
  %v4734 = vunpack.c.l.b16 %v4629
  %v4735 = vunpack.c.h.b16 %v4629
  %v4736 = vpack.c.b16 %v4674, %v4672
  %v4737 = vpack.c.b16 %v4675, %v4673
  %v4738 = vpack.c.b16 %v4678, %v4676
  %v4739 = vpack.c.b16 %v4679, %v4677
  %v4740 = vpack.c.b16 %v4682, %v4680
  %v4741 = vpack.c.b16 %v4683, %v4681
  %v4742 = vpack.c.b16 %v4686, %v4684
  %v4743 = vpack.c.b16 %v4687, %v4685
  %v4744 = vpack.c.b16 %v4690, %v4688
  %v4745 = vpack.c.b16 %v4691, %v4689
  %v4746 = vpack.c.b16 %v4694, %v4692
  %v4747 = vpack.c.b16 %v4695, %v4693
  %v4748 = vpack.c.b16 %v4698, %v4696
  %v4749 = vpack.c.b16 %v4699, %v4697
  %v4750 = vpack.c.b16 %v4702, %v4700
  %v4751 = vpack.c.b16 %v4703, %v4701
  %v4752 = vpack.c.b16 %v4706, %v4704
  %v4753 = vpack.c.b16 %v4707, %v4705
  %v4754 = vpack.c.b16 %v4710, %v4708
  %v4755 = vpack.c.b16 %v4711, %v4709
  %v4756 = vpack.c.b16 %v4714, %v4712
  %v4757 = vpack.c.b16 %v4715, %v4713
  %v4758 = vpack.c.b16 %v4718, %v4716
  %v4759 = vpack.c.b16 %v4719, %v4717
  %v4760 = vpack.c.b16 %v4722, %v4720
  %v4761 = vpack.c.b16 %v4723, %v4721
  %v4762 = vpack.c.b16 %v4726, %v4724
  %v4763 = vpack.c.b16 %v4727, %v4725
  %v4764 = vpack.c.b16 %v4730, %v4728
  %v4765 = vpack.c.b16 %v4731, %v4729
  %v4766 = vpack.c.b16 %v4734, %v4732
  %v4767 = vpack.c.b16 %v4735, %v4733
  %4800 = vmatprep.subr.bf16.mxu0 %v4737
  %4801 = vmatpush1.bf16.msra.mxu0 %v4736
  %4802 = vmatprep.subr.bf16.mxu0 %v4739
  %4803 = vmatpush1.bf16.msra.mxu0 %v4738
  %4804 = vmatprep.subr.bf16.mxu0 %v4741
  %4805 = vmatpush1.bf16.msra.mxu0 %v4740
  %4806 = vmatprep.subr.bf16.mxu0 %v4743
  %4807 = vmatpush1.bf16.msra.mxu0 %v4742
  %4808 = vmatprep.subr.bf16.mxu0 %v4745
  %4809 = vmatpush1.bf16.msra.mxu0 %v4744
  %4810 = vmatprep.subr.bf16.mxu0 %v4747
  %4811 = vmatpush1.bf16.msra.mxu0 %v4746
  %4812 = vmatprep.subr.bf16.mxu0 %v4749
  %4813 = vmatpush1.bf16.msra.mxu0 %v4748
  %4814 = vmatprep.subr.bf16.mxu0 %v4751
  %4815 = vmatpush1.bf16.msra.mxu0 %v4750
  %4816 = vmatprep.subr.bf16.mxu0 %v4753
  %4817 = vmatpush1.bf16.msra.mxu0 %v4752
  %4818 = vmatprep.subr.bf16.mxu0 %v4755
  %4819 = vmatpush1.bf16.msra.mxu0 %v4754
  %4820 = vmatprep.subr.bf16.mxu0 %v4757
  %4821 = vmatpush1.bf16.msra.mxu0 %v4756
  %4822 = vmatprep.subr.bf16.mxu0 %v4759
  %4823 = vmatpush1.bf16.msra.mxu0 %v4758
  %4824 = vmatprep.subr.bf16.mxu0 %v4761
  %4825 = vmatpush1.bf16.msra.mxu0 %v4760
  %4826 = vmatprep.subr.bf16.mxu0 %v4763
  %4827 = vmatpush1.bf16.msra.mxu0 %v4762
  %4828 = vmatprep.subr.bf16.mxu0 %v4765
  %4829 = vmatpush1.bf16.msra.mxu0 %v4764
  %4830 = vmatprep.subr.bf16.mxu0 %v4767
  %4831 = vmatpush1.bf16.msra.mxu0 %v4766
  %4832 = vmatprep.mubr.bf16.mxu0 %v4637
  %4833 = vmatmul.mubr.bf16.gmra.mrb[0].mxu0 %v4636
  %v4834 = vpop.f32.mrb[0].mxu0
  %v4835 = vadd.f32 0.0, %v4834
  %v4836 = vpop.f32.mrb[0].mxu0
  %v4837 = vadd.f32 0.0, %v4836
  %v4838 = vpop.f32.mrb[0].mxu0
  %v4839 = vadd.f32 0.0, %v4838
  %v4840 = vpop.f32.mrb[0].mxu0
  %v4841 = vadd.f32 0.0, %v4840
  %4842 = vdwg.mxu0
  %s4843 = scalar_lea.vmem %s8, 256
  %v4844 = vld [vmem:[%s4843] sm:$0xff]
  %v4845 = vld [vmem:[%s4843 + $0x8] sm:$0xff]
  %v4846 = vld [vmem:[%s4843 + $0x10] sm:$0xff]
  %v4847 = vld [vmem:[%s4843 + $0x18] sm:$0xff]
  %v4848 = vld [vmem:[%s4843 + $0x20] sm:$0xff]
  %v4849 = vld [vmem:[%s4843 + $0x28] sm:$0xff]
  %v4850 = vld [vmem:[%s4843 + $0x30] sm:$0xff]
  %v4851 = vld [vmem:[%s4843 + $0x38] sm:$0xff]
  %v4852 = vld [vmem:[%s4843 + $0x40] sm:$0xff]
  %v4853 = vld [vmem:[%s4843 + $0x48] sm:$0xff]
  %v4854 = vld [vmem:[%s4843 + $0x50] sm:$0xff]
  %v4855 = vld [vmem:[%s4843 + $0x58] sm:$0xff]
  %v4856 = vld [vmem:[%s4843 + $0x60] sm:$0xff]
  %v4857 = vld [vmem:[%s4843 + $0x68] sm:$0xff]
  %v4858 = vld [vmem:[%s4843 + $0x70] sm:$0xff]
  %v4859 = vld [vmem:[%s4843 + $0x78] sm:$0xff]
  %v4860 = vld [vmem:[%s4843 + $0x80] sm:$0xff]
  %v4861 = vld [vmem:[%s4843 + $0x88] sm:$0xff]
  %v4862 = vld [vmem:[%s4843 + $0x90] sm:$0xff]
  %v4863 = vld [vmem:[%s4843 + $0x98] sm:$0xff]
  %v4864 = vld [vmem:[%s4843 + $0xa0] sm:$0xff]
  %v4865 = vld [vmem:[%s4843 + $0xa8] sm:$0xff]
  %v4866 = vld [vmem:[%s4843 + $0xb0] sm:$0xff]
  %v4867 = vld [vmem:[%s4843 + $0xb8] sm:$0xff]
  %v4868 = vld [vmem:[%s4843 + $0xc0] sm:$0xff]
  %v4869 = vld [vmem:[%s4843 + $0xc8] sm:$0xff]
  %v4870 = vld [vmem:[%s4843 + $0xd0] sm:$0xff]
  %v4871 = vld [vmem:[%s4843 + $0xd8] sm:$0xff]
  %v4872 = vld [vmem:[%s4843 + $0xe0] sm:$0xff]
  %v4873 = vld [vmem:[%s4843 + $0xe8] sm:$0xff]
  %v4874 = vld [vmem:[%s4843 + $0xf0] sm:$0xff]
  %v4875 = vld [vmem:[%s4843 + $0xf8] sm:$0xff]
  %v4908 = vunpack.c.l.b16 %v4844
  %v4909 = vunpack.c.h.b16 %v4844
  %v4910 = vunpack.c.l.b16 %v4845
  %v4911 = vunpack.c.h.b16 %v4845
  %v4912 = vunpack.c.l.b16 %v4846
  %v4913 = vunpack.c.h.b16 %v4846
  %v4914 = vunpack.c.l.b16 %v4847
  %v4915 = vunpack.c.h.b16 %v4847
  %v4916 = vunpack.c.l.b16 %v4848
  %v4917 = vunpack.c.h.b16 %v4848
  %v4918 = vunpack.c.l.b16 %v4849
  %v4919 = vunpack.c.h.b16 %v4849
  %v4920 = vunpack.c.l.b16 %v4850
  %v4921 = vunpack.c.h.b16 %v4850
  %v4922 = vunpack.c.l.b16 %v4851
  %v4923 = vunpack.c.h.b16 %v4851
  %v4924 = vunpack.c.l.b16 %v4852
  %v4925 = vunpack.c.h.b16 %v4852
  %v4926 = vunpack.c.l.b16 %v4853
  %v4927 = vunpack.c.h.b16 %v4853
  %v4928 = vunpack.c.l.b16 %v4854
  %v4929 = vunpack.c.h.b16 %v4854
  %v4930 = vunpack.c.l.b16 %v4855
  %v4931 = vunpack.c.h.b16 %v4855
  %v4932 = vunpack.c.l.b16 %v4856
  %v4933 = vunpack.c.h.b16 %v4856
  %v4934 = vunpack.c.l.b16 %v4857
  %v4935 = vunpack.c.h.b16 %v4857
  %v4936 = vunpack.c.l.b16 %v4858
  %v4937 = vunpack.c.h.b16 %v4858
  %v4938 = vunpack.c.l.b16 %v4859
  %v4939 = vunpack.c.h.b16 %v4859
  %v4940 = vunpack.c.l.b16 %v4860
  %v4941 = vunpack.c.h.b16 %v4860
  %v4942 = vunpack.c.l.b16 %v4861
  %v4943 = vunpack.c.h.b16 %v4861
  %v4944 = vunpack.c.l.b16 %v4862
  %v4945 = vunpack.c.h.b16 %v4862
  %v4946 = vunpack.c.l.b16 %v4863
  %v4947 = vunpack.c.h.b16 %v4863
  %v4948 = vunpack.c.l.b16 %v4864
  %v4949 = vunpack.c.h.b16 %v4864
  %v4950 = vunpack.c.l.b16 %v4865
  %v4951 = vunpack.c.h.b16 %v4865
  %v4952 = vunpack.c.l.b16 %v4866
  %v4953 = vunpack.c.h.b16 %v4866
  %v4954 = vunpack.c.l.b16 %v4867
  %v4955 = vunpack.c.h.b16 %v4867
  %v4956 = vunpack.c.l.b16 %v4868
  %v4957 = vunpack.c.h.b16 %v4868
  %v4958 = vunpack.c.l.b16 %v4869
  %v4959 = vunpack.c.h.b16 %v4869
  %v4960 = vunpack.c.l.b16 %v4870
  %v4961 = vunpack.c.h.b16 %v4870
  %v4962 = vunpack.c.l.b16 %v4871
  %v4963 = vunpack.c.h.b16 %v4871
  %v4964 = vunpack.c.l.b16 %v4872
  %v4965 = vunpack.c.h.b16 %v4872
  %v4966 = vunpack.c.l.b16 %v4873
  %v4967 = vunpack.c.h.b16 %v4873
  %v4968 = vunpack.c.l.b16 %v4874
  %v4969 = vunpack.c.h.b16 %v4874
  %v4970 = vunpack.c.l.b16 %v4875
  %v4971 = vunpack.c.h.b16 %v4875
  %v4972 = vpack.c.b16 %v4910, %v4908
  %v4973 = vpack.c.b16 %v4911, %v4909
  %v4974 = vpack.c.b16 %v4914, %v4912
  %v4975 = vpack.c.b16 %v4915, %v4913
  %v4976 = vpack.c.b16 %v4918, %v4916
  %v4977 = vpack.c.b16 %v4919, %v4917
  %v4978 = vpack.c.b16 %v4922, %v4920
  %v4979 = vpack.c.b16 %v4923, %v4921
  %v4980 = vpack.c.b16 %v4926, %v4924
  %v4981 = vpack.c.b16 %v4927, %v4925
  %v4982 = vpack.c.b16 %v4930, %v4928
  %v4983 = vpack.c.b16 %v4931, %v4929
  %v4984 = vpack.c.b16 %v4934, %v4932
  %v4985 = vpack.c.b16 %v4935, %v4933
  %v4986 = vpack.c.b16 %v4938, %v4936
  %v4987 = vpack.c.b16 %v4939, %v4937
  %v4988 = vpack.c.b16 %v4942, %v4940
  %v4989 = vpack.c.b16 %v4943, %v4941
  %v4990 = vpack.c.b16 %v4946, %v4944
  %v4991 = vpack.c.b16 %v4947, %v4945
  %v4992 = vpack.c.b16 %v4950, %v4948
  %v4993 = vpack.c.b16 %v4951, %v4949
  %v4994 = vpack.c.b16 %v4954, %v4952
  %v4995 = vpack.c.b16 %v4955, %v4953
  %v4996 = vpack.c.b16 %v4958, %v4956
  %v4997 = vpack.c.b16 %v4959, %v4957
  %v4998 = vpack.c.b16 %v4962, %v4960
  %v4999 = vpack.c.b16 %v4963, %v4961
  %v5000 = vpack.c.b16 %v4966, %v4964
  %v5001 = vpack.c.b16 %v4967, %v4965
  %v5002 = vpack.c.b16 %v4970, %v4968
  %v5003 = vpack.c.b16 %v4971, %v4969
  %5036 = vmatprep.subr.bf16.mxu0 %v4973
  %5037 = vmatpush1.bf16.msra.mxu0 %v4972
  %5038 = vmatprep.subr.bf16.mxu0 %v4975
  %5039 = vmatpush1.bf16.msra.mxu0 %v4974
  %5040 = vmatprep.subr.bf16.mxu0 %v4977
  %5041 = vmatpush1.bf16.msra.mxu0 %v4976
  %5042 = vmatprep.subr.bf16.mxu0 %v4979
  %5043 = vmatpush1.bf16.msra.mxu0 %v4978
  %5044 = vmatprep.subr.bf16.mxu0 %v4981
  %5045 = vmatpush1.bf16.msra.mxu0 %v4980
  %5046 = vmatprep.subr.bf16.mxu0 %v4983
  %5047 = vmatpush1.bf16.msra.mxu0 %v4982
  %5048 = vmatprep.subr.bf16.mxu0 %v4985
  %5049 = vmatpush1.bf16.msra.mxu0 %v4984
  %5050 = vmatprep.subr.bf16.mxu0 %v4987
  %5051 = vmatpush1.bf16.msra.mxu0 %v4986
  %5052 = vmatprep.subr.bf16.mxu0 %v4989
  %5053 = vmatpush1.bf16.msra.mxu0 %v4988
  %5054 = vmatprep.subr.bf16.mxu0 %v4991
  %5055 = vmatpush1.bf16.msra.mxu0 %v4990
  %5056 = vmatprep.subr.bf16.mxu0 %v4993
  %5057 = vmatpush1.bf16.msra.mxu0 %v4992
  %5058 = vmatprep.subr.bf16.mxu0 %v4995
  %5059 = vmatpush1.bf16.msra.mxu0 %v4994
  %5060 = vmatprep.subr.bf16.mxu0 %v4997
  %5061 = vmatpush1.bf16.msra.mxu0 %v4996
  %5062 = vmatprep.subr.bf16.mxu0 %v4999
  %5063 = vmatpush1.bf16.msra.mxu0 %v4998
  %5064 = vmatprep.subr.bf16.mxu0 %v5001
  %5065 = vmatpush1.bf16.msra.mxu0 %v5000
  %5066 = vmatprep.subr.bf16.mxu0 %v5003
  %5067 = vmatpush1.bf16.msra.mxu0 %v5002
  %5068 = vmatprep.mubr.bf16.mxu0 %v4637
  %5069 = vmatmul.mubr.bf16.gmra.mrb[0].mxu0 %v4636
  %v5070 = vpop.f32.mrb[0].mxu0
  %v5071 = vadd.f32 0.0, %v5070
  %v5072 = vpop.f32.mrb[0].mxu0
  %v5073 = vadd.f32 0.0, %v5072
  %v5074 = vpop.f32.mrb[0].mxu0
  %v5075 = vadd.f32 0.0, %v5074
  %v5076 = vpop.f32.mrb[0].mxu0
  %v5077 = vadd.f32 0.0, %v5076
  %5078 = vdwg.mxu0
  %s5079 = scalar_lea.vmem %s8, 512
  %v5080 = vld [vmem:[%s5079] sm:$0xff]
  %v5081 = vld [vmem:[%s5079 + $0x8] sm:$0xff]
  %v5082 = vld [vmem:[%s5079 + $0x10] sm:$0xff]
  %v5083 = vld [vmem:[%s5079 + $0x18] sm:$0xff]
  %v5084 = vld [vmem:[%s5079 + $0x20] sm:$0xff]
  %v5085 = vld [vmem:[%s5079 + $0x28] sm:$0xff]
  %v5086 = vld [vmem:[%s5079 + $0x30] sm:$0xff]
  %v5087 = vld [vmem:[%s5079 + $0x38] sm:$0xff]
  %v5088 = vld [vmem:[%s5079 + $0x40] sm:$0xff]
  %v5089 = vld [vmem:[%s5079 + $0x48] sm:$0xff]
  %v5090 = vld [vmem:[%s5079 + $0x50] sm:$0xff]
  %v5091 = vld [vmem:[%s5079 + $0x58] sm:$0xff]
  %v5092 = vld [vmem:[%s5079 + $0x60] sm:$0xff]
  %v5093 = vld [vmem:[%s5079 + $0x68] sm:$0xff]
  %v5094 = vld [vmem:[%s5079 + $0x70] sm:$0xff]
  %v5095 = vld [vmem:[%s5079 + $0x78] sm:$0xff]
  %v5096 = vld [vmem:[%s5079 + $0x80] sm:$0xff]
  %v5097 = vld [vmem:[%s5079 + $0x88] sm:$0xff]
  %v5098 = vld [vmem:[%s5079 + $0x90] sm:$0xff]
  %v5099 = vld [vmem:[%s5079 + $0x98] sm:$0xff]
  %v5100 = vld [vmem:[%s5079 + $0xa0] sm:$0xff]
  %v5101 = vld [vmem:[%s5079 + $0xa8] sm:$0xff]
  %v5102 = vld [vmem:[%s5079 + $0xb0] sm:$0xff]
  %v5103 = vld [vmem:[%s5079 + $0xb8] sm:$0xff]
  %v5104 = vld [vmem:[%s5079 + $0xc0] sm:$0xff]
  %v5105 = vld [vmem:[%s5079 + $0xc8] sm:$0xff]
  %v5106 = vld [vmem:[%s5079 + $0xd0] sm:$0xff]
  %v5107 = vld [vmem:[%s5079 + $0xd8] sm:$0xff]
  %v5108 = vld [vmem:[%s5079 + $0xe0] sm:$0xff]
  %v5109 = vld [vmem:[%s5079 + $0xe8] sm:$0xff]
  %v5110 = vld [vmem:[%s5079 + $0xf0] sm:$0xff]
  %v5111 = vld [vmem:[%s5079 + $0xf8] sm:$0xff]
  %v5144 = vunpack.c.l.b16 %v5080
  %v5145 = vunpack.c.h.b16 %v5080
  %v5146 = vunpack.c.l.b16 %v5081
  %v5147 = vunpack.c.h.b16 %v5081
  %v5148 = vunpack.c.l.b16 %v5082
  %v5149 = vunpack.c.h.b16 %v5082
  %v5150 = vunpack.c.l.b16 %v5083
  %v5151 = vunpack.c.h.b16 %v5083
  %v5152 = vunpack.c.l.b16 %v5084
  %v5153 = vunpack.c.h.b16 %v5084
  %v5154 = vunpack.c.l.b16 %v5085
  %v5155 = vunpack.c.h.b16 %v5085
  %v5156 = vunpack.c.l.b16 %v5086
  %v5157 = vunpack.c.h.b16 %v5086
  %v5158 = vunpack.c.l.b16 %v5087
  %v5159 = vunpack.c.h.b16 %v5087
  %v5160 = vunpack.c.l.b16 %v5088
  %v5161 = vunpack.c.h.b16 %v5088
  %v5162 = vunpack.c.l.b16 %v5089
  %v5163 = vunpack.c.h.b16 %v5089
  %v5164 = vunpack.c.l.b16 %v5090
  %v5165 = vunpack.c.h.b16 %v5090
  %v5166 = vunpack.c.l.b16 %v5091
  %v5167 = vunpack.c.h.b16 %v5091
  %v5168 = vunpack.c.l.b16 %v5092
  %v5169 = vunpack.c.h.b16 %v5092
  %v5170 = vunpack.c.l.b16 %v5093
  %v5171 = vunpack.c.h.b16 %v5093
  %v5172 = vunpack.c.l.b16 %v5094
  %v5173 = vunpack.c.h.b16 %v5094
  %v5174 = vunpack.c.l.b16 %v5095
  %v5175 = vunpack.c.h.b16 %v5095
  %v5176 = vunpack.c.l.b16 %v5096
  %v5177 = vunpack.c.h.b16 %v5096
  %v5178 = vunpack.c.l.b16 %v5097
  %v5179 = vunpack.c.h.b16 %v5097
  %v5180 = vunpack.c.l.b16 %v5098
  %v5181 = vunpack.c.h.b16 %v5098
  %v5182 = vunpack.c.l.b16 %v5099
  %v5183 = vunpack.c.h.b16 %v5099
  %v5184 = vunpack.c.l.b16 %v5100
  %v5185 = vunpack.c.h.b16 %v5100
  %v5186 = vunpack.c.l.b16 %v5101
  %v5187 = vunpack.c.h.b16 %v5101
  %v5188 = vunpack.c.l.b16 %v5102
  %v5189 = vunpack.c.h.b16 %v5102
  %v5190 = vunpack.c.l.b16 %v5103
  %v5191 = vunpack.c.h.b16 %v5103
  %v5192 = vunpack.c.l.b16 %v5104
  %v5193 = vunpack.c.h.b16 %v5104
  %v5194 = vunpack.c.l.b16 %v5105
  %v5195 = vunpack.c.h.b16 %v5105
  %v5196 = vunpack.c.l.b16 %v5106
  %v5197 = vunpack.c.h.b16 %v5106
  %v5198 = vunpack.c.l.b16 %v5107
  %v5199 = vunpack.c.h.b16 %v5107
  %v5200 = vunpack.c.l.b16 %v5108
  %v5201 = vunpack.c.h.b16 %v5108
  %v5202 = vunpack.c.l.b16 %v5109
  %v5203 = vunpack.c.h.b16 %v5109
  %v5204 = vunpack.c.l.b16 %v5110
  %v5205 = vunpack.c.h.b16 %v5110
  %v5206 = vunpack.c.l.b16 %v5111
  %v5207 = vunpack.c.h.b16 %v5111
  %v5208 = vpack.c.b16 %v5146, %v5144
  %v5209 = vpack.c.b16 %v5147, %v5145
  %v5210 = vpack.c.b16 %v5150, %v5148
  %v5211 = vpack.c.b16 %v5151, %v5149
  %v5212 = vpack.c.b16 %v5154, %v5152
  %v5213 = vpack.c.b16 %v5155, %v5153
  %v5214 = vpack.c.b16 %v5158, %v5156
  %v5215 = vpack.c.b16 %v5159, %v5157
  %v5216 = vpack.c.b16 %v5162, %v5160
  %v5217 = vpack.c.b16 %v5163, %v5161
  %v5218 = vpack.c.b16 %v5166, %v5164
  %v5219 = vpack.c.b16 %v5167, %v5165
  %v5220 = vpack.c.b16 %v5170, %v5168
  %v5221 = vpack.c.b16 %v5171, %v5169
  %v5222 = vpack.c.b16 %v5174, %v5172
  %v5223 = vpack.c.b16 %v5175, %v5173
  %v5224 = vpack.c.b16 %v5178, %v5176
  %v5225 = vpack.c.b16 %v5179, %v5177
  %v5226 = vpack.c.b16 %v5182, %v5180
  %v5227 = vpack.c.b16 %v5183, %v5181
  %v5228 = vpack.c.b16 %v5186, %v5184
  %v5229 = vpack.c.b16 %v5187, %v5185
  %v5230 = vpack.c.b16 %v5190, %v5188
  %v5231 = vpack.c.b16 %v5191, %v5189
  %v5232 = vpack.c.b16 %v5194, %v5192
  %v5233 = vpack.c.b16 %v5195, %v5193
  %v5234 = vpack.c.b16 %v5198, %v5196
  %v5235 = vpack.c.b16 %v5199, %v5197
  %v5236 = vpack.c.b16 %v5202, %v5200
  %v5237 = vpack.c.b16 %v5203, %v5201
  %v5238 = vpack.c.b16 %v5206, %v5204
  %v5239 = vpack.c.b16 %v5207, %v5205
  %5272 = vmatprep.subr.bf16.mxu0 %v5209
  %5273 = vmatpush1.bf16.msra.mxu0 %v5208
  %5274 = vmatprep.subr.bf16.mxu0 %v5211
  %5275 = vmatpush1.bf16.msra.mxu0 %v5210
  %5276 = vmatprep.subr.bf16.mxu0 %v5213
  %5277 = vmatpush1.bf16.msra.mxu0 %v5212
  %5278 = vmatprep.subr.bf16.mxu0 %v5215
  %5279 = vmatpush1.bf16.msra.mxu0 %v5214
  %5280 = vmatprep.subr.bf16.mxu0 %v5217
  %5281 = vmatpush1.bf16.msra.mxu0 %v5216
  %5282 = vmatprep.subr.bf16.mxu0 %v5219
  %5283 = vmatpush1.bf16.msra.mxu0 %v5218
  %5284 = vmatprep.subr.bf16.mxu0 %v5221
  %5285 = vmatpush1.bf16.msra.mxu0 %v5220
  %5286 = vmatprep.subr.bf16.mxu0 %v5223
  %5287 = vmatpush1.bf16.msra.mxu0 %v5222
  %5288 = vmatprep.subr.bf16.mxu0 %v5225
  %5289 = vmatpush1.bf16.msra.mxu0 %v5224
  %5290 = vmatprep.subr.bf16.mxu0 %v5227
  %5291 = vmatpush1.bf16.msra.mxu0 %v5226
  %5292 = vmatprep.subr.bf16.mxu0 %v5229
  %5293 = vmatpush1.bf16.msra.mxu0 %v5228
  %5294 = vmatprep.subr.bf16.mxu0 %v5231
  %5295 = vmatpush1.bf16.msra.mxu0 %v5230
  %5296 = vmatprep.subr.bf16.mxu0 %v5233
  %5297 = vmatpush1.bf16.msra.mxu0 %v5232
  %5298 = vmatprep.subr.bf16.mxu0 %v5235
  %5299 = vmatpush1.bf16.msra.mxu0 %v5234
  %5300 = vmatprep.subr.bf16.mxu0 %v5237
  %5301 = vmatpush1.bf16.msra.mxu0 %v5236
  %5302 = vmatprep.subr.bf16.mxu0 %v5239
  %5303 = vmatpush1.bf16.msra.mxu0 %v5238
  %5304 = vmatprep.mubr.bf16.mxu0 %v4637
  %5305 = vmatmul.mubr.bf16.gmra.mrb[0].mxu0 %v4636
  %v5306 = vpop.f32.mrb[0].mxu0
  %v5307 = vadd.f32 0.0, %v5306
  %v5308 = vpop.f32.mrb[0].mxu0
  %v5309 = vadd.f32 0.0, %v5308
  %v5310 = vpop.f32.mrb[0].mxu0
  %v5311 = vadd.f32 0.0, %v5310
  %v5312 = vpop.f32.mrb[0].mxu0
  %v5313 = vadd.f32 0.0, %v5312
  %5314 = vdwg.mxu0
  %v5317 = vrot.slane %v5071, 1
  %v5318 = vrot.slane %v5073, 1
  %v5321 = vadd.f32 %v4835, %v5317
  %v5322 = vadd.f32 %v4837, %v5318
  %v5325 = vrot.slane %v5307, 2
  %v5326 = vrot.slane %v5309, 2
  %v5329 = vadd.f32 %v5321, %v5325
  %v5330 = vadd.f32 %v5322, %v5326
  %v5331 = vld [vmem:[%s9] sm:$0x3]
  %v5333 = vlaneseq
  %v5334 = vshrl.u32 %v5333, 7
  %v5335 = vsub.s32 0, %v5334
  %v5336 = vrot.slane %v5331, %v5335
  %v5337 = vlaneseq
  %v5338 = vshrl.u32 %v5337, 7
  %v5339 = vsub.s32 1, %v5338
  %v5340 = vrot.slane %v5331, %v5339
  %v5343 = vadd.f32 %v5329, %v5336
  %v5344 = vadd.f32 %v5330, %v5340
  %v5345 = vmax.f32 %v5343, 0.0
  %v5346 = vmax.f32 %v5344, 0.0
  %5347 = vst [vmem:[%s10] sm:$0x1f] %v5345
  %5348 = vst [vmem:[%s10 + $0x8] sm:$0x1f] %v5346
  %v5351 = vrot.slane %v5075, 1
  %v5352 = vrot.slane %v5077, 1
  %v5355 = vadd.f32 %v4835, %v5351
  %v5356 = vadd.f32 %v4837, %v5352
  %v5357 = vadd.f32 %v4839, %v5351
  %v5358 = vadd.f32 %v4841, %v5352
  %v5361 = vrot.slane %v5311, 2
  %v5362 = vrot.slane %v5313, 2
  %v5365 = vadd.f32 %v5355, %v5361
  %v5366 = vadd.f32 %v5356, %v5362
  %v5367 = vadd.f32 %v5357, %v5361
  %v5368 = vadd.f32 %v5358, %v5362
  %v5369 = vld [vmem:[%s9] sm:$0x3]
  %v5371 = vlaneseq
  %v5372 = vshrl.u32 %v5371, 7
  %v5373 = vsub.s32 0, %v5372
  %v5374 = vrot.slane %v5369, %v5373
  %v5375 = vlaneseq
  %v5376 = vshrl.u32 %v5375, 7
  %v5377 = vsub.s32 1, %v5376
  %v5378 = vrot.slane %v5369, %v5377
  %v5381 = vadd.f32 %v5365, %v5374
  %v5382 = vadd.f32 %v5366, %v5378
  %v5383 = vadd.f32 %v5367, %v5374
  %v5384 = vadd.f32 %v5368, %v5378
  %v5385 = vmax.f32 %v5381, 0.0
  %v5386 = vmax.f32 %v5382, 0.0
  %v5387 = vmax.f32 %v5383, 0.0
  %v5388 = vmax.f32 %v5384, 0.0
  %vm5393 = vcmask 1040384
  %v5394 = vrot.slane %v5385, 7
  %v5395 = vrot.slane %v5387, 7
  %v5396 = vsel %vm5393, %v5394, %v5395
  %v5397 = vrot.slane %v5386, 7
  %v5398 = vrot.slane %v5388, 7
  %v5399 = vsel %vm5393, %v5397, %v5398
  %s5402 = scalar_lea.vmem %s10, 16
  %5403 = vst [vmem:[%s5402] sm:$0x1f] %v5396
  %5404 = vst [vmem:[%s5402 + $0x8] sm:$0x1f] %v5399
  // Predicated region
  $region42: #{predict_encoder_forward.1} parent=0 // pred_check
    _
  $region43: #{predict_encoder_forward.1} parent=0 // pred_check_branch
    %5406 = sbr.rel (0) target = $region45
  $region44: #{predict_encoder_forward.1} parent=0 // pred_region
    _
  $region45: #{predict_encoder_forward.1} parent=0 // pred_fallthru
    _
  // Predicated region
  $region46: #{predict_encoder_forward.1} parent=0 // pred_check
    _
  $region47: #{predict_encoder_forward.1} parent=0 // pred_check_branch
    %5408 = sbr.rel (0) target = $region49
  $region48: #{predict_encoder_forward.1} parent=0 // pred_region
    _
  $region49: #{predict_encoder_forward.1} parent=0 // pred_fallthru
    _

</llo_original>
